<compile_context>
chip_gen: v5e
topology: v5e:2x2
jax: 0.10.0
libtpu: 0.0.40
codegen_flags: <defaults>
</compile_context>

<pallas_src>
import functools

import jax
import jax.numpy as jnp
from jax import lax
from jax.experimental import pallas as pl
from jax.experimental.pallas import tpu as pltpu

NUM_HEADS = 4
LN_EPS = 1e-5
BN_EPS = 1e-5


# ----------------------------------------------------------------------------
# Kernel: grid = (batch, q_tile).  Activation layout is (channels, tokens).
# ----------------------------------------------------------------------------
def _pt_layer_kernel(
        p_q_ref, x_q_ref, p_kv_ref, x_kv_ref,
        w_pe1_ref, b_pe1_ref, w_pe2_ref, b_pe2_ref,
        w_q_ref, b_q_ref, w_kv_ref, b_kv_ref,
        w_ao_ref, b_ao_ref, g1_ref, be1_ref,
        w_ff1_ref, b_ff1_ref, w_ff2_ref, b_ff2_ref,
        g2_ref, be2_ref, w_fc_ref, b_fc_ref,
        o_ref,
        kv_scr,
        *, num_heads, kv_chunk):
    f32 = jnp.float32
    bf16 = jnp.bfloat16
    qi = pl.program_id(1)

    C = x_q_ref.shape[1]
    TQ = x_q_ref.shape[2]
    N = x_kv_ref.shape[2]
    H = num_heads
    hd = C // H
    TK = kv_chunk
    nkc = N // TK
    scale = 1.0 / (hd ** 0.5)

    def mm(a, b):                      # (M, K) @ (K, T) -> (M, T), f32 accum
        return lax.dot_general(a, b, (((1,), (0,)), ((), ())),
                               preferred_element_type=f32)

    def pos_encode(p_cn, x_cn):
        # conv1x1(3->3, BN folded) -> relu -> conv1x1(3->C); (channels, T), f32
        t = jnp.maximum(mm(w_pe1_ref[...], p_cn) + b_pe1_ref[...], 0.0)
        return x_cn + mm(w_pe2_ref[...], t) + b_pe2_ref[...]

    # ---- K/V for the whole sequence: computed once per batch element -------
    @pl.when(qi == 0)
    def _():
        src_kv = pos_encode(p_kv_ref[0], x_kv_ref[0])                   # (C, N)
        kv_scr[...] = mm(w_kv_ref[...], src_kv.astype(bf16)) + b_kv_ref[...]

    # ---- residual stream + Q projection for this query tile ----------------
    src_q = pos_encode(p_q_ref[0], x_q_ref[0])                          # (C, TQ)
    q_all = (mm(w_q_ref[...], src_q.astype(bf16)) + b_q_ref[...]) * scale

    # ---- per-head online-softmax attention over KV chunks ------------------
    o_heads = []
    for h in range(H):
        q_h = q_all[h * hd:(h + 1) * hd, :].astype(bf16)                # (hd, TQ)

        def chunk_step(ci, carry, q_h=q_h, h=h):
            m_p, l_p, acc_p = carry
            off = ci * TK
            if not isinstance(ci, int):
                off = pl.multiple_of(off, TK)
            k_c = kv_scr[pl.ds(h * hd, hd), pl.ds(off, TK)].astype(bf16)
            v_c = kv_scr[pl.ds(C + h * hd, hd), pl.ds(off, TK)].astype(bf16)
            s = lax.dot_general(k_c, q_h, (((0,), (0,)), ((), ())),
                                preferred_element_type=f32)             # (TK, TQ)
            m_n = jnp.maximum(m_p, jnp.max(s, axis=0, keepdims=True))   # (1, TQ)
            alpha = jnp.exp(m_p - m_n)
            p_ = jnp.exp(s - m_n)
            l_n = alpha * l_p + jnp.sum(p_, axis=0, keepdims=True)
            acc_n = alpha * acc_p + lax.dot_general(
                v_c, p_.astype(bf16), (((1,), (0,)), ((), ())),
                preferred_element_type=f32)                             # (hd, TQ)
            return m_n, l_n, acc_n

        carry = (jnp.full((1, TQ), -jnp.inf, f32),
                 jnp.zeros((1, TQ), f32),
                 jnp.zeros((hd, TQ), f32))
        if nkc <= 4:                       # short loops: unroll for the scheduler
            for ci in range(nkc):
                carry = chunk_step(ci, carry)
        else:
            carry = lax.fori_loop(0, nkc, chunk_step, carry)
        _, l_f, acc_f = carry
        o_heads.append(acc_f * pl.reciprocal(l_f, approx=False))

    o_all = jnp.concatenate(o_heads, axis=0)                            # (C, TQ)

    # ---- out-proj, post-LN, FFN, post-LN, fc (all (channels, tokens)) ------
    sa = mm(w_ao_ref[...], o_all.astype(bf16)) + b_ao_ref[...]

    def layer_norm(t, g, b):                 # normalize over channel axis (0)
        mu = jnp.mean(t, axis=0, keepdims=True)
        d = t - mu
        var = jnp.mean(d * d, axis=0, keepdims=True)
        return d * lax.rsqrt(var + LN_EPS) * g + b

    x1 = layer_norm(src_q + sa, g1_ref[...], be1_ref[...])
    hid = jnp.maximum(mm(w_ff1_ref[...], x1.astype(bf16)) + b_ff1_ref[...], 0.0)
    ff = mm(w_ff2_ref[...], hid.astype(bf16)) + b_ff2_ref[...]
    x2 = layer_norm(x1 + ff, g2_ref[...], be2_ref[...])
    out = mm(w_fc_ref[...], x2.astype(bf16)) + b_fc_ref[...]
    o_ref[0] = out.astype(o_ref.dtype)                                  # lane-dense


# ----------------------------------------------------------------------------
# Parameter initialization (deterministic, synthetic; eval-mode BN folded).
# ----------------------------------------------------------------------------
def init_params(key, in_channels, out_channels=None):
    C = in_channels
    Cout = C if out_channels is None else out_channels
    ks = jax.random.split(key, 21)

    def nrm(k, shape, s=0.1):
        return jax.random.normal(k, shape, jnp.float32) * s

    # pe: Conv1d(3,3,1,bias=False) -> BN(3) -> ReLU -> Conv1d(3,C,1)
    w_pe1_raw = nrm(ks[0], (3, 3))
    bn_gamma = 1.0 + nrm(ks[1], (3,))
    bn_beta = nrm(ks[2], (3,))
    bn_mean = nrm(ks[3], (3,))
    bn_var = 1.0 + jnp.abs(nrm(ks[4], (3,)))
    bn_scale = bn_gamma / jnp.sqrt(bn_var + BN_EPS)
    bn_shift = bn_beta - bn_mean * bn_scale
    w_pe1 = w_pe1_raw * bn_scale[:, None]                  # (out=3, in=3)
    b_pe1 = bn_shift
    w_pe2 = nrm(ks[5], (C, 3))
    b_pe2 = nrm(ks[6], (C,))

    # TransformerEncoderLayer(d_model=C, nhead=4, ffn=2C, dropout=0)
    w_in = nrm(ks[7], (3 * C, C))
    b_in = nrm(ks[8], (3 * C,))
    w_ao = nrm(ks[9], (C, C))
    b_ao = nrm(ks[10], (C,))
    g1 = 1.0 + nrm(ks[11], (C,))
    be1 = nrm(ks[12], (C,))
    w_ff1 = nrm(ks[13], (2 * C, C))
    b_ff1 = nrm(ks[14], (2 * C,))
    w_ff2 = nrm(ks[15], (C, 2 * C))
    b_ff2 = nrm(ks[16], (C,))
    g2 = 1.0 + nrm(ks[17], (C,))
    be2 = nrm(ks[18], (C,))

    w_fc = nrm(ks[19], (Cout, C))
    b_fc = nrm(ks[20], (Cout,))

    return dict(w_pe1=w_pe1, b_pe1=b_pe1, w_pe2=w_pe2, b_pe2=b_pe2,
                w_in=w_in, b_in=b_in, w_ao=w_ao, b_ao=b_ao,
                g1=g1, be1=be1,
                w_ff1=w_ff1, b_ff1=b_ff1, w_ff2=w_ff2, b_ff2=b_ff2,
                g2=g2, be2=be2, w_fc=w_fc, b_fc=b_fc)


def _pick_tile(n, pref=512):
    """Largest multiple of 128 <= pref that divides n (or n itself if small)."""
    if n <= pref:
        return n
    t = (pref // 128) * 128
    while t >= 128:
        if n % t == 0:
            return t
        t -= 128
    # TODO(synk): pad + key-mask ragged N instead of a single full-length tile.
    return n


# ----------------------------------------------------------------------------
# Wrapper: PyTorch layouts in/out.  p:(B,N,3), x:(B,C,N) -> (B,Cout,N).
# ----------------------------------------------------------------------------
@functools.partial(jax.jit, static_argnames=("q_tile", "kv_chunk"))
def point_transformer_layer_g(p, x, params, *, q_tile=None, kv_chunk=None):
    B, N, _ = p.shape
    C = x.shape[1]
    H = NUM_HEADS
    assert C % H == 0
    Cout = params["w_fc"].shape[0]

    TQ = q_tile if q_tile is not None else _pick_tile(N)
    TK = kv_chunk if kv_chunk is not None else _pick_tile(N)
    assert N % TQ == 0 and N % TK == 0
    nq = N // TQ

    f32 = jnp.float32
    bf = jnp.bfloat16

    # Tokens-on-lanes layout for the coordinates (tiny one-off transpose).
    p_cn = jnp.transpose(p, (0, 2, 1)).astype(f32)          # (B, 3, N)
    x = x.astype(f32)

    def col(v):
        return v.reshape(-1, 1).astype(f32)

    w_in, b_in = params["w_in"], params["b_in"]
    weight_args = [
        params["w_pe1"].astype(f32), col(params["b_pe1"]),   # pe kept in f32
        params["w_pe2"].astype(f32), col(params["b_pe2"]),
        w_in[:C].astype(bf), col(b_in[:C]),                  # Q proj  (C, C)
        w_in[C:].astype(bf), col(b_in[C:]),                  # K;V     (2C, C)
        params["w_ao"].astype(bf), col(params["b_ao"]),
        col(params["g1"]), col(params["be1"]),
        params["w_ff1"].astype(bf), col(params["b_ff1"]),
        params["w_ff2"].astype(bf), col(params["b_ff2"]),
        col(params["g2"]), col(params["be2"]),
        params["w_fc"].astype(bf), col(params["b_fc"]),
    ]

    def full_spec(a):
        # TODO(synk): pipeline_mode=pl.Buffered(1) for resident weights once
        # weight residency matters (large C on v7x's 64 MiB VMEM).
        nd = a.ndim
        return pl.BlockSpec(a.shape, lambda b, qi, _nd=nd: (0,) * _nd)

    in_specs = [
        pl.BlockSpec((1, 3, TQ), lambda b, qi: (b, 0, qi)),   # coords, q tile
        pl.BlockSpec((1, C, TQ), lambda b, qi: (b, 0, qi)),   # feats,  q tile
        pl.BlockSpec((1, 3, N), lambda b, qi: (b, 0, 0)),     # coords, full seq
        pl.BlockSpec((1, C, N), lambda b, qi: (b, 0, 0)),     # feats,  full seq
    ] + [full_spec(a) for a in weight_args]

    # qi==0 fills the per-batch K/V cache, so the q-tile axis must execute in
    # order on one core when nq > 1 ("arbitrary"); with a single q tile both
    # axes are independent and may be split across v7x's two TensorCores.
    dim_sem = ("parallel", "parallel") if nq == 1 else ("parallel", "arbitrary")

    out = pl.pallas_call(
        functools.partial(_pt_layer_kernel, num_heads=H, kv_chunk=TK),
        out_shape=jax.ShapeDtypeStruct((B, Cout, N), f32),
        grid_spec=pltpu.PrefetchScalarGridSpec(
            num_scalar_prefetch=0,
            grid=(B, nq),
            in_specs=in_specs,
            out_specs=pl.BlockSpec((1, Cout, TQ), lambda b, qi: (b, 0, qi)),
            scratch_shapes=[pltpu.VMEM((2 * C, N), f32)]),   # per-batch K;V cache
        compiler_params=pltpu.CompilerParams(
            dimension_semantics=dim_sem,
            vmem_limit_bytes=48 * 1024 * 1024),
    )(p_cn, x, p_cn, x, *weight_args)

    if N == 1:                                     # torch .squeeze(-1)
        out = out[..., 0]
    return out


# ----------------------------------------------------------------------------
# Pure-JAX f32 reference (same math) for the correctness check.
# ----------------------------------------------------------------------------
def ref_forward(p, x, prm):
    x_nc = jnp.transpose(x, (0, 2, 1))
    C = x_nc.shape[-1]
    hd = C // NUM_HEADS

    h = jnp.maximum(p @ prm["w_pe1"].T + prm["b_pe1"], 0.0)
    pe = h @ prm["w_pe2"].T + prm["b_pe2"]
    src = x_nc + pe

    qkv = src @ prm["w_in"].T + prm["b_in"]
    q, k, v = qkv[..., :C], qkv[..., C:2 * C], qkv[..., 2 * C:]
    B, N, _ = src.shape
    qh = q.reshape(B, N, NUM_HEADS, hd) / (hd ** 0.5)
    kh = k.reshape(B, N, NUM_HEADS, hd)
    vh = v.reshape(B, N, NUM_HEADS, hd)
    s = jnp.einsum("bnhd,bmhd->bhnm", qh, kh)
    a = jax.nn.softmax(s, axis=-1)
    attn = jnp.einsum("bhnm,bmhd->bnhd", a, vh).reshape(B, N, C)
    sa = attn @ prm["w_ao"].T + prm["b_ao"]

    def ln(t, g, b):
        mu = jnp.mean(t, axis=-1, keepdims=True)
        var = jnp.mean((t - mu) ** 2, axis=-1, keepdims=True)
        return (t - mu) * lax.rsqrt(var + LN_EPS) * g + b

    x1 = ln(src + sa, prm["g1"], prm["be1"])
    ff = jnp.maximum(x1 @ prm["w_ff1"].T + prm["b_ff1"], 0.0) @ prm["w_ff2"].T + prm["b_ff2"]
    x2 = ln(x1 + ff, prm["g2"], prm["be2"])
    out = x2 @ prm["w_fc"].T + prm["b_fc"]
    return jnp.transpose(out, (0, 2, 1))


if __name__ == "__main__":
    # B=2 batches, N=256 points, C=32 channels (nhead=4 -> head_dim=8).
    B, N, C = 2, 256, 32
    key = jax.random.PRNGKey(0)
    kp, kx, kw = jax.random.split(key, 3)

    p = jax.random.normal(kp, (B, N, 3), jnp.float32)      # xyz coords
    x = jax.random.normal(kx, (B, C, N), jnp.float32)      # features (NCW)
    params = init_params(kw, C)

    ref = ref_forward(p, x, params)

    # Default tiling: one query tile / one KV chunk per batch element (grid=(2,1)).
    out = jax.block_until_ready(point_transformer_layer_g(p, x, params))
    assert out.shape == (B, C, N)
    err1 = float(jnp.max(jnp.abs(out - ref)))
    # bf16 MXU inputs (f32 accumulation) -> looser tolerance than pure f32.
    assert jnp.allclose(out, ref, rtol=5e-2, atol=5e-2), err1

    # Also exercise the multi-q-tile / multi-KV-chunk (flash + KV-cache) path.
    out2 = jax.block_until_ready(
        point_transformer_layer_g(p, x, params, q_tile=128, kv_chunk=128))
    err2 = float(jnp.max(jnp.abs(out2 - ref)))
    assert jnp.allclose(out2, ref, rtol=5e-2, atol=5e-2), err2

    print("KERNEL_OK")
</pallas_src>

<mosaic_0001>
module attributes {stable_mosaic.version = 11 : i64} {
  func.func @_pt_layer_kernel(%arg0: i32, %arg1: i32, %arg2: memref<1x3x256xf32, #tpu.memory_space<vmem>>, %arg3: memref<1x32x256xf32, #tpu.memory_space<vmem>>, %arg4: memref<1x3x256xf32, #tpu.memory_space<vmem>>, %arg5: memref<1x32x256xf32, #tpu.memory_space<vmem>>, %arg6: memref<3x3xf32, #tpu.memory_space<vmem>>, %arg7: memref<3x1xf32, #tpu.memory_space<vmem>>, %arg8: memref<32x3xf32, #tpu.memory_space<vmem>>, %arg9: memref<32x1xf32, #tpu.memory_space<vmem>>, %arg10: memref<32x32xbf16, #tpu.memory_space<vmem>>, %arg11: memref<32x1xf32, #tpu.memory_space<vmem>>, %arg12: memref<64x32xbf16, #tpu.memory_space<vmem>>, %arg13: memref<64x1xf32, #tpu.memory_space<vmem>>, %arg14: memref<32x32xbf16, #tpu.memory_space<vmem>>, %arg15: memref<32x1xf32, #tpu.memory_space<vmem>>, %arg16: memref<32x1xf32, #tpu.memory_space<vmem>>, %arg17: memref<32x1xf32, #tpu.memory_space<vmem>>, %arg18: memref<64x32xbf16, #tpu.memory_space<vmem>>, %arg19: memref<64x1xf32, #tpu.memory_space<vmem>>, %arg20: memref<32x64xbf16, #tpu.memory_space<vmem>>, %arg21: memref<32x1xf32, #tpu.memory_space<vmem>>, %arg22: memref<32x1xf32, #tpu.memory_space<vmem>>, %arg23: memref<32x1xf32, #tpu.memory_space<vmem>>, %arg24: memref<32x32xbf16, #tpu.memory_space<vmem>>, %arg25: memref<32x1xf32, #tpu.memory_space<vmem>>, %arg26: memref<1x32x256xf32, #tpu.memory_space<vmem>>, %arg27: memref<64x256xf32, #tpu.memory_space<vmem>>) attributes {dimension_semantics = [#tpu.dimension_semantics<parallel>, #tpu.dimension_semantics<parallel>], iteration_bounds = array<i64: 2, 1>, scalar_prefetch = 0 : i64, scratch_operands = 1 : i64, tpu.core_type = #tpu.core_type<tc>, window_params = [{transform_indices = @transform_0, window_bounds = array<i64: 1, 3, 256>}, {transform_indices = @transform_1, window_bounds = array<i64: 1, 32, 256>}, {transform_indices = @transform_2, window_bounds = array<i64: 1, 3, 256>}, {transform_indices = @transform_3, window_bounds = array<i64: 1, 32, 256>}, {pipeline_mode = #tpu.pipeline_mode<synchronous>, transform_indices = @transform_4, window_bounds = array<i64: 3, 3>}, {pipeline_mode = #tpu.pipeline_mode<synchronous>, transform_indices = @transform_5, window_bounds = array<i64: 3, 1>}, {pipeline_mode = #tpu.pipeline_mode<synchronous>, transform_indices = @transform_6, window_bounds = array<i64: 32, 3>}, {pipeline_mode = #tpu.pipeline_mode<synchronous>, transform_indices = @transform_7, window_bounds = array<i64: 32, 1>}, {pipeline_mode = #tpu.pipeline_mode<synchronous>, transform_indices = @transform_8, window_bounds = array<i64: 32, 32>}, {pipeline_mode = #tpu.pipeline_mode<synchronous>, transform_indices = @transform_9, window_bounds = array<i64: 32, 1>}, {pipeline_mode = #tpu.pipeline_mode<synchronous>, transform_indices = @transform_10, window_bounds = array<i64: 64, 32>}, {pipeline_mode = #tpu.pipeline_mode<synchronous>, transform_indices = @transform_11, window_bounds = array<i64: 64, 1>}, {pipeline_mode = #tpu.pipeline_mode<synchronous>, transform_indices = @transform_12, window_bounds = array<i64: 32, 32>}, {pipeline_mode = #tpu.pipeline_mode<synchronous>, transform_indices = @transform_13, window_bounds = array<i64: 32, 1>}, {pipeline_mode = #tpu.pipeline_mode<synchronous>, transform_indices = @transform_14, window_bounds = array<i64: 32, 1>}, {pipeline_mode = #tpu.pipeline_mode<synchronous>, transform_indices = @transform_15, window_bounds = array<i64: 32, 1>}, {pipeline_mode = #tpu.pipeline_mode<synchronous>, transform_indices = @transform_16, window_bounds = array<i64: 64, 32>}, {pipeline_mode = #tpu.pipeline_mode<synchronous>, transform_indices = @transform_17, window_bounds = array<i64: 64, 1>}, {pipeline_mode = #tpu.pipeline_mode<synchronous>, transform_indices = @transform_18, window_bounds = array<i64: 32, 64>}, {pipeline_mode = #tpu.pipeline_mode<synchronous>, transform_indices = @transform_19, window_bounds = array<i64: 32, 1>}, {pipeline_mode = #tpu.pipeline_mode<synchronous>, transform_indices = @transform_20, window_bounds = array<i64: 32, 1>}, {pipeline_mode = #tpu.pipeline_mode<synchronous>, transform_indices = @transform_21, window_bounds = array<i64: 32, 1>}, {pipeline_mode = #tpu.pipeline_mode<synchronous>, transform_indices = @transform_22, window_bounds = array<i64: 32, 32>}, {pipeline_mode = #tpu.pipeline_mode<synchronous>, transform_indices = @transform_23, window_bounds = array<i64: 32, 1>}, {transform_indices = @transform_24, window_bounds = array<i64: 1, 32, 256>}]} {
    %c0_i32 = arith.constant 0 : i32
    %0 = arith.cmpi eq, %arg1, %c0_i32 : i32
    %1 = arith.extui %0 : i1 to i32
    %c0_i32_0 = arith.constant 0 : i32
    %2 = arith.cmpi ne, %1, %c0_i32_0 : i32
    scf.if %2 {
      %c0_101 = arith.constant 0 : index
      %c0_102 = arith.constant 0 : index
      %c0_103 = arith.constant 0 : index
      %224 = vector.load %arg4[%c0_101, %c0_102, %c0_103] : memref<1x3x256xf32, #tpu.memory_space<vmem>>, vector<1x3x256xf32>
      %225 = vector.shape_cast %224 : vector<1x3x256xf32> to vector<3x256xf32>
      %c0_104 = arith.constant 0 : index
      %c0_105 = arith.constant 0 : index
      %c0_106 = arith.constant 0 : index
      %226 = vector.load %arg5[%c0_104, %c0_105, %c0_106] : memref<1x32x256xf32, #tpu.memory_space<vmem>>, vector<1x32x256xf32>
      %227 = vector.shape_cast %226 : vector<1x32x256xf32> to vector<32x256xf32>
      %c0_107 = arith.constant 0 : index
      %c0_108 = arith.constant 0 : index
      %228 = vector.load %arg6[%c0_107, %c0_108] : memref<3x3xf32, #tpu.memory_space<vmem>>, vector<3x3xf32>
      %cst_109 = arith.constant dense<0.000000e+00> : vector<3x256xf32>
      %229 = tpu.matmul %228, %225, %cst_109 {dimension_numbers = #tpu.dot_dimension_numbers<[1], [0], [0], [1], [0, 0, 1, 1], [], []>} : vector<3x3xf32>, vector<3x256xf32>, vector<3x256xf32> -> vector<3x256xf32>
      %c0_110 = arith.constant 0 : index
      %c0_111 = arith.constant 0 : index
      %230 = vector.load %arg7[%c0_110, %c0_111] : memref<3x1xf32, #tpu.memory_space<vmem>>, vector<3x1xf32>
      %231 = vector.broadcast %230 : vector<3x1xf32> to vector<3x256xf32>
      %232 = arith.addf %229, %231 : vector<3x256xf32>
      %cst_112 = arith.constant 0.000000e+00 : f32
      %233 = vector.broadcast %cst_112 : f32 to vector<3x256xf32>
      %234 = arith.maximumf %232, %233 : vector<3x256xf32>
      %c0_113 = arith.constant 0 : index
      %c0_114 = arith.constant 0 : index
      %235 = vector.load %arg8[%c0_113, %c0_114] : memref<32x3xf32, #tpu.memory_space<vmem>>, vector<32x3xf32>
      %cst_115 = arith.constant dense<0.000000e+00> : vector<32x256xf32>
      %236 = tpu.matmul %235, %234, %cst_115 {dimension_numbers = #tpu.dot_dimension_numbers<[1], [0], [0], [1], [0, 0, 1, 1], [], []>} : vector<32x3xf32>, vector<3x256xf32>, vector<32x256xf32> -> vector<32x256xf32>
      %237 = arith.addf %227, %236 : vector<32x256xf32>
      %c0_116 = arith.constant 0 : index
      %c0_117 = arith.constant 0 : index
      %238 = vector.load %arg9[%c0_116, %c0_117] : memref<32x1xf32, #tpu.memory_space<vmem>>, vector<32x1xf32>
      %239 = vector.broadcast %238 : vector<32x1xf32> to vector<32x256xf32>
      %240 = arith.addf %237, %239 : vector<32x256xf32>
      %c0_118 = arith.constant 0 : index
      %c0_119 = arith.constant 0 : index
      %241 = vector.load %arg12[%c0_118, %c0_119] : memref<64x32xbf16, #tpu.memory_space<vmem>>, vector<64x32xbf16>
      %242 = arith.truncf %240 : vector<32x256xf32> to vector<32x256xbf16>
      %cst_120 = arith.constant dense<0.000000e+00> : vector<64x256xf32>
      %243 = tpu.matmul %241, %242, %cst_120 {dimension_numbers = #tpu.dot_dimension_numbers<[1], [0], [0], [1], [0, 0, 1, 1], [], []>} : vector<64x32xbf16>, vector<32x256xbf16>, vector<64x256xf32> -> vector<64x256xf32>
      %c0_121 = arith.constant 0 : index
      %c0_122 = arith.constant 0 : index
      %244 = vector.load %arg13[%c0_121, %c0_122] : memref<64x1xf32, #tpu.memory_space<vmem>>, vector<64x1xf32>
      %245 = vector.broadcast %244 : vector<64x1xf32> to vector<64x256xf32>
      %246 = arith.addf %243, %245 : vector<64x256xf32>
      %c0_123 = arith.constant 0 : index
      %c0_124 = arith.constant 0 : index
      %247 = vector.load %arg27[%c0_123, %c0_124] : memref<64x256xf32, #tpu.memory_space<vmem>>, vector<64x256xf32>
      tpu.vector_store %arg27[%c0_123, %c0_124], %246 {strides = array<i32>} : memref<64x256xf32, #tpu.memory_space<vmem>>, vector<64x256xf32>,
    } else {
    }
    %c0 = arith.constant 0 : index
    %c0_1 = arith.constant 0 : index
    %c0_2 = arith.constant 0 : index
    %3 = vector.load %arg2[%c0, %c0_1, %c0_2] : memref<1x3x256xf32, #tpu.memory_space<vmem>>, vector<1x3x256xf32>
    %4 = vector.shape_cast %3 : vector<1x3x256xf32> to vector<3x256xf32>
    %c0_3 = arith.constant 0 : index
    %c0_4 = arith.constant 0 : index
    %c0_5 = arith.constant 0 : index
    %5 = vector.load %arg3[%c0_3, %c0_4, %c0_5] : memref<1x32x256xf32, #tpu.memory_space<vmem>>, vector<1x32x256xf32>
    %6 = vector.shape_cast %5 : vector<1x32x256xf32> to vector<32x256xf32>
    %c0_6 = arith.constant 0 : index
    %c0_7 = arith.constant 0 : index
    %7 = vector.load %arg6[%c0_6, %c0_7] : memref<3x3xf32, #tpu.memory_space<vmem>>, vector<3x3xf32>
    %cst = arith.constant dense<0.000000e+00> : vector<3x256xf32>
    %8 = tpu.matmul %7, %4, %cst {dimension_numbers = #tpu.dot_dimension_numbers<[1], [0], [0], [1], [0, 0, 1, 1], [], []>} : vector<3x3xf32>, vector<3x256xf32>, vector<3x256xf32> -> vector<3x256xf32>
    %c0_8 = arith.constant 0 : index
    %c0_9 = arith.constant 0 : index
    %9 = vector.load %arg7[%c0_8, %c0_9] : memref<3x1xf32, #tpu.memory_space<vmem>>, vector<3x1xf32>
    %10 = vector.broadcast %9 : vector<3x1xf32> to vector<3x256xf32>
    %11 = arith.addf %8, %10 : vector<3x256xf32>
    %cst_10 = arith.constant 0.000000e+00 : f32
    %12 = vector.broadcast %cst_10 : f32 to vector<3x256xf32>
    %13 = arith.maximumf %11, %12 : vector<3x256xf32>
    %c0_11 = arith.constant 0 : index
    %c0_12 = arith.constant 0 : index
    %14 = vector.load %arg8[%c0_11, %c0_12] : memref<32x3xf32, #tpu.memory_space<vmem>>, vector<32x3xf32>
    %cst_13 = arith.constant dense<0.000000e+00> : vector<32x256xf32>
    %15 = tpu.matmul %14, %13, %cst_13 {dimension_numbers = #tpu.dot_dimension_numbers<[1], [0], [0], [1], [0, 0, 1, 1], [], []>} : vector<32x3xf32>, vector<3x256xf32>, vector<32x256xf32> -> vector<32x256xf32>
    %16 = arith.addf %6, %15 : vector<32x256xf32>
    %c0_14 = arith.constant 0 : index
    %c0_15 = arith.constant 0 : index
    %17 = vector.load %arg9[%c0_14, %c0_15] : memref<32x1xf32, #tpu.memory_space<vmem>>, vector<32x1xf32>
    %18 = vector.broadcast %17 : vector<32x1xf32> to vector<32x256xf32>
    %19 = arith.addf %16, %18 : vector<32x256xf32>
    %c0_16 = arith.constant 0 : index
    %c0_17 = arith.constant 0 : index
    %20 = vector.load %arg10[%c0_16, %c0_17] : memref<32x32xbf16, #tpu.memory_space<vmem>>, vector<32x32xbf16>
    %21 = arith.truncf %19 : vector<32x256xf32> to vector<32x256xbf16>
    %cst_18 = arith.constant dense<0.000000e+00> : vector<32x256xf32>
    %22 = tpu.matmul %20, %21, %cst_18 {dimension_numbers = #tpu.dot_dimension_numbers<[1], [0], [0], [1], [0, 0, 1, 1], [], []>} : vector<32x32xbf16>, vector<32x256xbf16>, vector<32x256xf32> -> vector<32x256xf32>
    %c0_19 = arith.constant 0 : index
    %c0_20 = arith.constant 0 : index
    %23 = vector.load %arg11[%c0_19, %c0_20] : memref<32x1xf32, #tpu.memory_space<vmem>>, vector<32x1xf32>
    %24 = vector.broadcast %23 : vector<32x1xf32> to vector<32x256xf32>
    %25 = arith.addf %22, %24 : vector<32x256xf32>
    %cst_21 = arith.constant 0.353553385 : f32
    %26 = vector.broadcast %cst_21 : f32 to vector<32x256xf32>
    %27 = arith.mulf %25, %26 : vector<32x256xf32>
    %28 = vector.extract_strided_slice %27 {offsets = [0, 0], sizes = [8, 256], strides = [1, 1]} : vector<32x256xf32> to vector<8x256xf32>
    %29 = arith.truncf %28 : vector<8x256xf32> to vector<8x256xbf16>
    %cst_22 = arith.constant 0xFF800000 : f32
    %30 = vector.broadcast %cst_22 : f32 to vector<1x256xf32>
    %cst_23 = arith.constant 0.000000e+00 : f32
    %31 = vector.broadcast %cst_23 : f32 to vector<1x256xf32>
    %cst_24 = arith.constant 0.000000e+00 : f32
    %32 = vector.broadcast %cst_24 : f32 to vector<8x256xf32>
    %c0_25 = arith.constant 0 : index
    %c0_26 = arith.constant 0 : index
    %33 = vector.load %arg27[%c0_25, %c0_26] : memref<64x256xf32, #tpu.memory_space<vmem>>, vector<8x256xf32>
    %34 = arith.truncf %33 : vector<8x256xf32> to vector<8x256xbf16>
    %c32 = arith.constant 32 : index
    %c0_27 = arith.constant 0 : index
    %35 = vector.load %arg27[%c32, %c0_27] : memref<64x256xf32, #tpu.memory_space<vmem>>, vector<8x256xf32>
    %36 = arith.truncf %35 : vector<8x256xf32> to vector<8x256xbf16>
    %cst_28 = arith.constant dense<0.000000e+00> : vector<256x256xf32>
    %37 = tpu.matmul %34, %29, %cst_28 {dimension_numbers = #tpu.dot_dimension_numbers<[0], [0], [1], [1], [0, 1, 1, 1], [], []>} : vector<8x256xbf16>, vector<8x256xbf16>, vector<256x256xf32> -> vector<256x256xf32>
    %cst_29 = arith.constant dense<0xFF800000> : vector<256xf32>
    %38 = vector.multi_reduction <maximumf>, %37, %cst_29 [0] : vector<256x256xf32> to vector<256xf32>
    %39 = vector.shape_cast %38 : vector<256xf32> to vector<1x256xf32>
    %40 = arith.maximumf %30, %39 : vector<1x256xf32>
    %41 = arith.subf %30, %40 : vector<1x256xf32>
    %42 = math.exp %41 : vector<1x256xf32>
    %43 = vector.broadcast %40 : vector<1x256xf32> to vector<256x256xf32>
    %44 = arith.subf %37, %43 : vector<256x256xf32>
    %45 = math.exp %44 : vector<256x256xf32>
    %46 = arith.mulf %42, %31 : vector<1x256xf32>
    %cst_30 = arith.constant dense<0.000000e+00> : vector<256xf32>
    %47 = vector.multi_reduction <add>, %45, %cst_30 [0] : vector<256x256xf32> to vector<256xf32>
    %48 = vector.shape_cast %47 : vector<256xf32> to vector<1x256xf32>
    %49 = arith.addf %46, %48 : vector<1x256xf32>
    %50 = vector.broadcast %42 : vector<1x256xf32> to vector<8x256xf32>
    %51 = arith.mulf %50, %32 : vector<8x256xf32>
    %52 = arith.truncf %45 : vector<256x256xf32> to vector<256x256xbf16>
    %cst_31 = arith.constant dense<0.000000e+00> : vector<8x256xf32>
    %53 = tpu.matmul %36, %52, %cst_31 {dimension_numbers = #tpu.dot_dimension_numbers<[1], [0], [0], [1], [0, 0, 1, 1], [], []>} : vector<8x256xbf16>, vector<256x256xbf16>, vector<8x256xf32> -> vector<8x256xf32>
    %54 = arith.addf %51, %53 : vector<8x256xf32>
    %55 = tpu.reciprocal %49 : vector<1x256xf32> -> vector<1x256xf32>
    %56 = vector.broadcast %55 : vector<1x256xf32> to vector<8x256xf32>
    %57 = arith.mulf %54, %56 : vector<8x256xf32>
    %58 = vector.extract_strided_slice %27 {offsets = [8, 0], sizes = [8, 256], strides = [1, 1]} : vector<32x256xf32> to vector<8x256xf32>
    %59 = arith.truncf %58 : vector<8x256xf32> to vector<8x256xbf16>
    %cst_32 = arith.constant 0xFF800000 : f32
    %60 = vector.broadcast %cst_32 : f32 to vector<1x256xf32>
    %cst_33 = arith.constant 0.000000e+00 : f32
    %61 = vector.broadcast %cst_33 : f32 to vector<1x256xf32>
    %cst_34 = arith.constant 0.000000e+00 : f32
    %62 = vector.broadcast %cst_34 : f32 to vector<8x256xf32>
    %c8 = arith.constant 8 : index
    %c0_35 = arith.constant 0 : index
    %63 = vector.load %arg27[%c8, %c0_35] : memref<64x256xf32, #tpu.memory_space<vmem>>, vector<8x256xf32>
    %64 = arith.truncf %63 : vector<8x256xf32> to vector<8x256xbf16>
    %c40 = arith.constant 40 : index
    %c0_36 = arith.constant 0 : index
    %65 = vector.load %arg27[%c40, %c0_36] : memref<64x256xf32, #tpu.memory_space<vmem>>, vector<8x256xf32>
    %66 = arith.truncf %65 : vector<8x256xf32> to vector<8x256xbf16>
    %cst_37 = arith.constant dense<0.000000e+00> : vector<256x256xf32>
    %67 = tpu.matmul %64, %59, %cst_37 {dimension_numbers = #tpu.dot_dimension_numbers<[0], [0], [1], [1], [0, 1, 1, 1], [], []>} : vector<8x256xbf16>, vector<8x256xbf16>, vector<256x256xf32> -> vector<256x256xf32>
    %cst_38 = arith.constant dense<0xFF800000> : vector<256xf32>
    %68 = vector.multi_reduction <maximumf>, %67, %cst_38 [0] : vector<256x256xf32> to vector<256xf32>
    %69 = vector.shape_cast %68 : vector<256xf32> to vector<1x256xf32>
    %70 = arith.maximumf %60, %69 : vector<1x256xf32>
    %71 = arith.subf %60, %70 : vector<1x256xf32>
    %72 = math.exp %71 : vector<1x256xf32>
    %73 = vector.broadcast %70 : vector<1x256xf32> to vector<256x256xf32>
    %74 = arith.subf %67, %73 : vector<256x256xf32>
    %75 = math.exp %74 : vector<256x256xf32>
    %76 = arith.mulf %72, %61 : vector<1x256xf32>
    %cst_39 = arith.constant dense<0.000000e+00> : vector<256xf32>
    %77 = vector.multi_reduction <add>, %75, %cst_39 [0] : vector<256x256xf32> to vector<256xf32>
    %78 = vector.shape_cast %77 : vector<256xf32> to vector<1x256xf32>
    %79 = arith.addf %76, %78 : vector<1x256xf32>
    %80 = vector.broadcast %72 : vector<1x256xf32> to vector<8x256xf32>
    %81 = arith.mulf %80, %62 : vector<8x256xf32>
    %82 = arith.truncf %75 : vector<256x256xf32> to vector<256x256xbf16>
    %cst_40 = arith.constant dense<0.000000e+00> : vector<8x256xf32>
    %83 = tpu.matmul %66, %82, %cst_40 {dimension_numbers = #tpu.dot_dimension_numbers<[1], [0], [0], [1], [0, 0, 1, 1], [], []>} : vector<8x256xbf16>, vector<256x256xbf16>, vector<8x256xf32> -> vector<8x256xf32>
    %84 = arith.addf %81, %83 : vector<8x256xf32>
    %85 = tpu.reciprocal %79 : vector<1x256xf32> -> vector<1x256xf32>
    %86 = vector.broadcast %85 : vector<1x256xf32> to vector<8x256xf32>
    %87 = arith.mulf %84, %86 : vector<8x256xf32>
    %88 = vector.extract_strided_slice %27 {offsets = [16, 0], sizes = [8, 256], strides = [1, 1]} : vector<32x256xf32> to vector<8x256xf32>
    %89 = arith.truncf %88 : vector<8x256xf32> to vector<8x256xbf16>
    %cst_41 = arith.constant 0xFF800000 : f32
    %90 = vector.broadcast %cst_41 : f32 to vector<1x256xf32>
    %cst_42 = arith.constant 0.000000e+00 : f32
    %91 = vector.broadcast %cst_42 : f32 to vector<1x256xf32>
    %cst_43 = arith.constant 0.000000e+00 : f32
    %92 = vector.broadcast %cst_43 : f32 to vector<8x256xf32>
    %c16 = arith.constant 16 : index
    %c0_44 = arith.constant 0 : index
    %93 = vector.load %arg27[%c16, %c0_44] : memref<64x256xf32, #tpu.memory_space<vmem>>, vector<8x256xf32>
    %94 = arith.truncf %93 : vector<8x256xf32> to vector<8x256xbf16>
    %c48 = arith.constant 48 : index
    %c0_45 = arith.constant 0 : index
    %95 = vector.load %arg27[%c48, %c0_45] : memref<64x256xf32, #tpu.memory_space<vmem>>, vector<8x256xf32>
    %96 = arith.truncf %95 : vector<8x256xf32> to vector<8x256xbf16>
    %cst_46 = arith.constant dense<0.000000e+00> : vector<256x256xf32>
    %97 = tpu.matmul %94, %89, %cst_46 {dimension_numbers = #tpu.dot_dimension_numbers<[0], [0], [1], [1], [0, 1, 1, 1], [], []>} : vector<8x256xbf16>, vector<8x256xbf16>, vector<256x256xf32> -> vector<256x256xf32>
    %cst_47 = arith.constant dense<0xFF800000> : vector<256xf32>
    %98 = vector.multi_reduction <maximumf>, %97, %cst_47 [0] : vector<256x256xf32> to vector<256xf32>
    %99 = vector.shape_cast %98 : vector<256xf32> to vector<1x256xf32>
    %100 = arith.maximumf %90, %99 : vector<1x256xf32>
    %101 = arith.subf %90, %100 : vector<1x256xf32>
    %102 = math.exp %101 : vector<1x256xf32>
    %103 = vector.broadcast %100 : vector<1x256xf32> to vector<256x256xf32>
    %104 = arith.subf %97, %103 : vector<256x256xf32>
    %105 = math.exp %104 : vector<256x256xf32>
    %106 = arith.mulf %102, %91 : vector<1x256xf32>
    %cst_48 = arith.constant dense<0.000000e+00> : vector<256xf32>
    %107 = vector.multi_reduction <add>, %105, %cst_48 [0] : vector<256x256xf32> to vector<256xf32>
    %108 = vector.shape_cast %107 : vector<256xf32> to vector<1x256xf32>
    %109 = arith.addf %106, %108 : vector<1x256xf32>
    %110 = vector.broadcast %102 : vector<1x256xf32> to vector<8x256xf32>
    %111 = arith.mulf %110, %92 : vector<8x256xf32>
    %112 = arith.truncf %105 : vector<256x256xf32> to vector<256x256xbf16>
    %cst_49 = arith.constant dense<0.000000e+00> : vector<8x256xf32>
    %113 = tpu.matmul %96, %112, %cst_49 {dimension_numbers = #tpu.dot_dimension_numbers<[1], [0], [0], [1], [0, 0, 1, 1], [], []>} : vector<8x256xbf16>, vector<256x256xbf16>, vector<8x256xf32> -> vector<8x256xf32>
    %114 = arith.addf %111, %113 : vector<8x256xf32>
    %115 = tpu.reciprocal %109 : vector<1x256xf32> -> vector<1x256xf32>
    %116 = vector.broadcast %115 : vector<1x256xf32> to vector<8x256xf32>
    %117 = arith.mulf %114, %116 : vector<8x256xf32>
    %118 = vector.extract_strided_slice %27 {offsets = [24, 0], sizes = [8, 256], strides = [1, 1]} : vector<32x256xf32> to vector<8x256xf32>
    %119 = arith.truncf %118 : vector<8x256xf32> to vector<8x256xbf16>
    %cst_50 = arith.constant 0xFF800000 : f32
    %120 = vector.broadcast %cst_50 : f32 to vector<1x256xf32>
    %cst_51 = arith.constant 0.000000e+00 : f32
    %121 = vector.broadcast %cst_51 : f32 to vector<1x256xf32>
    %cst_52 = arith.constant 0.000000e+00 : f32
    %122 = vector.broadcast %cst_52 : f32 to vector<8x256xf32>
    %c24 = arith.constant 24 : index
    %c0_53 = arith.constant 0 : index
    %123 = vector.load %arg27[%c24, %c0_53] : memref<64x256xf32, #tpu.memory_space<vmem>>, vector<8x256xf32>
    %124 = arith.truncf %123 : vector<8x256xf32> to vector<8x256xbf16>
    %c56 = arith.constant 56 : index
    %c0_54 = arith.constant 0 : index
    %125 = vector.load %arg27[%c56, %c0_54] : memref<64x256xf32, #tpu.memory_space<vmem>>, vector<8x256xf32>
    %126 = arith.truncf %125 : vector<8x256xf32> to vector<8x256xbf16>
    %cst_55 = arith.constant dense<0.000000e+00> : vector<256x256xf32>
    %127 = tpu.matmul %124, %119, %cst_55 {dimension_numbers = #tpu.dot_dimension_numbers<[0], [0], [1], [1], [0, 1, 1, 1], [], []>} : vector<8x256xbf16>, vector<8x256xbf16>, vector<256x256xf32> -> vector<256x256xf32>
    %cst_56 = arith.constant dense<0xFF800000> : vector<256xf32>
    %128 = vector.multi_reduction <maximumf>, %127, %cst_56 [0] : vector<256x256xf32> to vector<256xf32>
    %129 = vector.shape_cast %128 : vector<256xf32> to vector<1x256xf32>
    %130 = arith.maximumf %120, %129 : vector<1x256xf32>
    %131 = arith.subf %120, %130 : vector<1x256xf32>
    %132 = math.exp %131 : vector<1x256xf32>
    %133 = vector.broadcast %130 : vector<1x256xf32> to vector<256x256xf32>
    %134 = arith.subf %127, %133 : vector<256x256xf32>
    %135 = math.exp %134 : vector<256x256xf32>
    %136 = arith.mulf %132, %121 : vector<1x256xf32>
    %cst_57 = arith.constant dense<0.000000e+00> : vector<256xf32>
    %137 = vector.multi_reduction <add>, %135, %cst_57 [0] : vector<256x256xf32> to vector<256xf32>
    %138 = vector.shape_cast %137 : vector<256xf32> to vector<1x256xf32>
    %139 = arith.addf %136, %138 : vector<1x256xf32>
    %140 = vector.broadcast %132 : vector<1x256xf32> to vector<8x256xf32>
    %141 = arith.mulf %140, %122 : vector<8x256xf32>
    %142 = arith.truncf %135 : vector<256x256xf32> to vector<256x256xbf16>
    %cst_58 = arith.constant dense<0.000000e+00> : vector<8x256xf32>
    %143 = tpu.matmul %126, %142, %cst_58 {dimension_numbers = #tpu.dot_dimension_numbers<[1], [0], [0], [1], [0, 0, 1, 1], [], []>} : vector<8x256xbf16>, vector<256x256xbf16>, vector<8x256xf32> -> vector<8x256xf32>
    %144 = arith.addf %141, %143 : vector<8x256xf32>
    %145 = tpu.reciprocal %139 : vector<1x256xf32> -> vector<1x256xf32>
    %146 = vector.broadcast %145 : vector<1x256xf32> to vector<8x256xf32>
    %147 = arith.mulf %144, %146 : vector<8x256xf32>
    %148 = tpu.concatenate %57, %87, %117, %147 in 0 : vector<8x256xf32>, vector<8x256xf32>, vector<8x256xf32>, vector<8x256xf32> -> vector<32x256xf32>
    %c0_59 = arith.constant 0 : index
    %c0_60 = arith.constant 0 : index
    %149 = vector.load %arg14[%c0_59, %c0_60] : memref<32x32xbf16, #tpu.memory_space<vmem>>, vector<32x32xbf16>
    %150 = arith.truncf %148 : vector<32x256xf32> to vector<32x256xbf16>
    %cst_61 = arith.constant dense<0.000000e+00> : vector<32x256xf32>
    %151 = tpu.matmul %149, %150, %cst_61 {dimension_numbers = #tpu.dot_dimension_numbers<[1], [0], [0], [1], [0, 0, 1, 1], [], []>} : vector<32x32xbf16>, vector<32x256xbf16>, vector<32x256xf32> -> vector<32x256xf32>
    %c0_62 = arith.constant 0 : index
    %c0_63 = arith.constant 0 : index
    %152 = vector.load %arg15[%c0_62, %c0_63] : memref<32x1xf32, #tpu.memory_space<vmem>>, vector<32x1xf32>
    %153 = vector.broadcast %152 : vector<32x1xf32> to vector<32x256xf32>
    %154 = arith.addf %151, %153 : vector<32x256xf32>
    %155 = arith.addf %19, %154 : vector<32x256xf32>
    %c0_64 = arith.constant 0 : index
    %c0_65 = arith.constant 0 : index
    %156 = vector.load %arg16[%c0_64, %c0_65] : memref<32x1xf32, #tpu.memory_space<vmem>>, vector<32x1xf32>
    %c0_66 = arith.constant 0 : index
    %c0_67 = arith.constant 0 : index
    %157 = vector.load %arg17[%c0_66, %c0_67] : memref<32x1xf32, #tpu.memory_space<vmem>>, vector<32x1xf32>
    %cst_68 = arith.constant dense<0.000000e+00> : vector<256xf32>
    %158 = vector.multi_reduction <add>, %155, %cst_68 [0] : vector<32x256xf32> to vector<256xf32>
    %159 = vector.shape_cast %158 : vector<256xf32> to vector<1x256xf32>
    %cst_69 = arith.constant 3.200000e+01 : f32
    %160 = vector.broadcast %cst_69 : f32 to vector<1x256xf32>
    %161 = arith.divf %159, %160 : vector<1x256xf32>
    %162 = vector.broadcast %161 : vector<1x256xf32> to vector<32x256xf32>
    %163 = arith.subf %155, %162 : vector<32x256xf32>
    %164 = arith.mulf %163, %163 : vector<32x256xf32>
    %cst_70 = arith.constant dense<0.000000e+00> : vector<256xf32>
    %165 = vector.multi_reduction <add>, %164, %cst_70 [0] : vector<32x256xf32> to vector<256xf32>
    %166 = vector.shape_cast %165 : vector<256xf32> to vector<1x256xf32>
    %cst_71 = arith.constant 3.200000e+01 : f32
    %167 = vector.broadcast %cst_71 : f32 to vector<1x256xf32>
    %168 = arith.divf %166, %167 : vector<1x256xf32>
    %cst_72 = arith.constant 9.99999974E-6 : f32
    %169 = vector.broadcast %cst_72 : f32 to vector<1x256xf32>
    %170 = arith.addf %168, %169 : vector<1x256xf32>
    %171 = math.rsqrt %170 : vector<1x256xf32>
    %172 = vector.broadcast %171 : vector<1x256xf32> to vector<32x256xf32>
    %173 = arith.mulf %163, %172 : vector<32x256xf32>
    %174 = vector.broadcast %156 : vector<32x1xf32> to vector<32x256xf32>
    %175 = arith.mulf %173, %174 : vector<32x256xf32>
    %176 = vector.broadcast %157 : vector<32x1xf32> to vector<32x256xf32>
    %177 = arith.addf %175, %176 : vector<32x256xf32>
    %c0_73 = arith.constant 0 : index
    %c0_74 = arith.constant 0 : index
    %178 = vector.load %arg18[%c0_73, %c0_74] : memref<64x32xbf16, #tpu.memory_space<vmem>>, vector<64x32xbf16>
    %179 = arith.truncf %177 : vector<32x256xf32> to vector<32x256xbf16>
    %cst_75 = arith.constant dense<0.000000e+00> : vector<64x256xf32>
    %180 = tpu.matmul %178, %179, %cst_75 {dimension_numbers = #tpu.dot_dimension_numbers<[1], [0], [0], [1], [0, 0, 1, 1], [], []>} : vector<64x32xbf16>, vector<32x256xbf16>, vector<64x256xf32> -> vector<64x256xf32>
    %c0_76 = arith.constant 0 : index
    %c0_77 = arith.constant 0 : index
    %181 = vector.load %arg19[%c0_76, %c0_77] : memref<64x1xf32, #tpu.memory_space<vmem>>, vector<64x1xf32>
    %182 = vector.broadcast %181 : vector<64x1xf32> to vector<64x256xf32>
    %183 = arith.addf %180, %182 : vector<64x256xf32>
    %cst_78 = arith.constant 0.000000e+00 : f32
    %184 = vector.broadcast %cst_78 : f32 to vector<64x256xf32>
    %185 = arith.maximumf %183, %184 : vector<64x256xf32>
    %c0_79 = arith.constant 0 : index
    %c0_80 = arith.constant 0 : index
    %186 = vector.load %arg20[%c0_79, %c0_80] : memref<32x64xbf16, #tpu.memory_space<vmem>>, vector<32x64xbf16>
    %187 = arith.truncf %185 : vector<64x256xf32> to vector<64x256xbf16>
    %cst_81 = arith.constant dense<0.000000e+00> : vector<32x256xf32>
    %188 = tpu.matmul %186, %187, %cst_81 {dimension_numbers = #tpu.dot_dimension_numbers<[1], [0], [0], [1], [0, 0, 1, 1], [], []>} : vector<32x64xbf16>, vector<64x256xbf16>, vector<32x256xf32> -> vector<32x256xf32>
    %c0_82 = arith.constant 0 : index
    %c0_83 = arith.constant 0 : index
    %189 = vector.load %arg21[%c0_82, %c0_83] : memref<32x1xf32, #tpu.memory_space<vmem>>, vector<32x1xf32>
    %190 = vector.broadcast %189 : vector<32x1xf32> to vector<32x256xf32>
    %191 = arith.addf %188, %190 : vector<32x256xf32>
    %192 = arith.addf %177, %191 : vector<32x256xf32>
    %c0_84 = arith.constant 0 : index
    %c0_85 = arith.constant 0 : index
    %193 = vector.load %arg22[%c0_84, %c0_85] : memref<32x1xf32, #tpu.memory_space<vmem>>, vector<32x1xf32>
    %c0_86 = arith.constant 0 : index
    %c0_87 = arith.constant 0 : index
    %194 = vector.load %arg23[%c0_86, %c0_87] : memref<32x1xf32, #tpu.memory_space<vmem>>, vector<32x1xf32>
    %cst_88 = arith.constant dense<0.000000e+00> : vector<256xf32>
    %195 = vector.multi_reduction <add>, %192, %cst_88 [0] : vector<32x256xf32> to vector<256xf32>
    %196 = vector.shape_cast %195 : vector<256xf32> to vector<1x256xf32>
    %cst_89 = arith.constant 3.200000e+01 : f32
    %197 = vector.broadcast %cst_89 : f32 to vector<1x256xf32>
    %198 = arith.divf %196, %197 : vector<1x256xf32>
    %199 = vector.broadcast %198 : vector<1x256xf32> to vector<32x256xf32>
    %200 = arith.subf %192, %199 : vector<32x256xf32>
    %201 = arith.mulf %200, %200 : vector<32x256xf32>
    %cst_90 = arith.constant dense<0.000000e+00> : vector<256xf32>
    %202 = vector.multi_reduction <add>, %201, %cst_90 [0] : vector<32x256xf32> to vector<256xf32>
    %203 = vector.shape_cast %202 : vector<256xf32> to vector<1x256xf32>
    %cst_91 = arith.constant 3.200000e+01 : f32
    %204 = vector.broadcast %cst_91 : f32 to vector<1x256xf32>
    %205 = arith.divf %203, %204 : vector<1x256xf32>
    %cst_92 = arith.constant 9.99999974E-6 : f32
    %206 = vector.broadcast %cst_92 : f32 to vector<1x256xf32>
    %207 = arith.addf %205, %206 : vector<1x256xf32>
    %208 = math.rsqrt %207 : vector<1x256xf32>
    %209 = vector.broadcast %208 : vector<1x256xf32> to vector<32x256xf32>
    %210 = arith.mulf %200, %209 : vector<32x256xf32>
    %211 = vector.broadcast %193 : vector<32x1xf32> to vector<32x256xf32>
    %212 = arith.mulf %210, %211 : vector<32x256xf32>
    %213 = vector.broadcast %194 : vector<32x1xf32> to vector<32x256xf32>
    %214 = arith.addf %212, %213 : vector<32x256xf32>
    %c0_93 = arith.constant 0 : index
    %c0_94 = arith.constant 0 : index
    %215 = vector.load %arg24[%c0_93, %c0_94] : memref<32x32xbf16, #tpu.memory_space<vmem>>, vector<32x32xbf16>
    %216 = arith.truncf %214 : vector<32x256xf32> to vector<32x256xbf16>
    %cst_95 = arith.constant dense<0.000000e+00> : vector<32x256xf32>
    %217 = tpu.matmul %215, %216, %cst_95 {dimension_numbers = #tpu.dot_dimension_numbers<[1], [0], [0], [1], [0, 0, 1, 1], [], []>} : vector<32x32xbf16>, vector<32x256xbf16>, vector<32x256xf32> -> vector<32x256xf32>
    %c0_96 = arith.constant 0 : index
    %c0_97 = arith.constant 0 : index
    %218 = vector.load %arg25[%c0_96, %c0_97] : memref<32x1xf32, #tpu.memory_space<vmem>>, vector<32x1xf32>
    %219 = vector.broadcast %218 : vector<32x1xf32> to vector<32x256xf32>
    %220 = arith.addf %217, %219 : vector<32x256xf32>
    %c0_98 = arith.constant 0 : index
    %c0_99 = arith.constant 0 : index
    %c0_100 = arith.constant 0 : index
    %221 = vector.load %arg26[%c0_98, %c0_99, %c0_100] : memref<1x32x256xf32, #tpu.memory_space<vmem>>, vector<1x32x256xf32>
    %222 = vector.shape_cast %221 : vector<1x32x256xf32> to vector<32x256xf32>
    %223 = vector.shape_cast %220 : vector<32x256xf32> to vector<1x32x256xf32>
    tpu.vector_store %arg26[%c0_98, %c0_99, %c0_100], %223 {strides = array<i32>} : memref<1x32x256xf32, #tpu.memory_space<vmem>>, vector<1x32x256xf32>,
    return
  }
  func.func @transform_0(%arg0: i32, %arg1: i32) -> (i32, i32, i32) {
    %c0_i32 = arith.constant 0 : i32
    %c0_i32_0 = arith.constant 0 : i32
    return %arg0, %c0_i32, %arg1 : i32, i32, i32
  }
  func.func @transform_1(%arg0: i32, %arg1: i32) -> (i32, i32, i32) {
    %c0_i32 = arith.constant 0 : i32
    %c0_i32_0 = arith.constant 0 : i32
    return %arg0, %c0_i32, %arg1 : i32, i32, i32
  }
  func.func @transform_2(%arg0: i32, %arg1: i32) -> (i32, i32, i32) {
    %c0_i32 = arith.constant 0 : i32
    %c0_i32_0 = arith.constant 0 : i32
    %c0_i32_1 = arith.constant 0 : i32
    return %arg0, %c0_i32, %c0_i32_0 : i32, i32, i32
  }
  func.func @transform_3(%arg0: i32, %arg1: i32) -> (i32, i32, i32) {
    %c0_i32 = arith.constant 0 : i32
    %c0_i32_0 = arith.constant 0 : i32
    %c0_i32_1 = arith.constant 0 : i32
    return %arg0, %c0_i32, %c0_i32_0 : i32, i32, i32
  }
  func.func @transform_4(%arg0: i32, %arg1: i32) -> (i32, i32) {
    %c0_i32 = arith.constant 0 : i32
    %c0_i32_0 = arith.constant 0 : i32
    %c0_i32_1 = arith.constant 0 : i32
    return %c0_i32, %c0_i32_0 : i32, i32
  }
  func.func @transform_5(%arg0: i32, %arg1: i32) -> (i32, i32) {
    %c0_i32 = arith.constant 0 : i32
    %c0_i32_0 = arith.constant 0 : i32
    %c0_i32_1 = arith.constant 0 : i32
    return %c0_i32, %c0_i32_0 : i32, i32
  }
  func.func @transform_6(%arg0: i32, %arg1: i32) -> (i32, i32) {
    %c0_i32 = arith.constant 0 : i32
    %c0_i32_0 = arith.constant 0 : i32
    %c0_i32_1 = arith.constant 0 : i32
    return %c0_i32, %c0_i32_0 : i32, i32
  }
  func.func @transform_7(%arg0: i32, %arg1: i32) -> (i32, i32) {
    %c0_i32 = arith.constant 0 : i32
    %c0_i32_0 = arith.constant 0 : i32
    %c0_i32_1 = arith.constant 0 : i32
    return %c0_i32, %c0_i32_0 : i32, i32
  }
  func.func @transform_8(%arg0: i32, %arg1: i32) -> (i32, i32) {
    %c0_i32 = arith.constant 0 : i32
    %c0_i32_0 = arith.constant 0 : i32
    %c0_i32_1 = arith.constant 0 : i32
    return %c0_i32, %c0_i32_0 : i32, i32
  }
  func.func @transform_9(%arg0: i32, %arg1: i32) -> (i32, i32) {
    %c0_i32 = arith.constant 0 : i32
    %c0_i32_0 = arith.constant 0 : i32
    %c0_i32_1 = arith.constant 0 : i32
    return %c0_i32, %c0_i32_0 : i32, i32
  }
  func.func @transform_10(%arg0: i32, %arg1: i32) -> (i32, i32) {
    %c0_i32 = arith.constant 0 : i32
    %c0_i32_0 = arith.constant 0 : i32
    %c0_i32_1 = arith.constant 0 : i32
    return %c0_i32, %c0_i32_0 : i32, i32
  }
  func.func @transform_11(%arg0: i32, %arg1: i32) -> (i32, i32) {
    %c0_i32 = arith.constant 0 : i32
    %c0_i32_0 = arith.constant 0 : i32
    %c0_i32_1 = arith.constant 0 : i32
    return %c0_i32, %c0_i32_0 : i32, i32
  }
  func.func @transform_12(%arg0: i32, %arg1: i32) -> (i32, i32) {
    %c0_i32 = arith.constant 0 : i32
    %c0_i32_0 = arith.constant 0 : i32
    %c0_i32_1 = arith.constant 0 : i32
    return %c0_i32, %c0_i32_0 : i32, i32
  }
  func.func @transform_13(%arg0: i32, %arg1: i32) -> (i32, i32) {
    %c0_i32 = arith.constant 0 : i32
    %c0_i32_0 = arith.constant 0 : i32
    %c0_i32_1 = arith.constant 0 : i32
    return %c0_i32, %c0_i32_0 : i32, i32
  }
  func.func @transform_14(%arg0: i32, %arg1: i32) -> (i32, i32) {
    %c0_i32 = arith.constant 0 : i32
    %c0_i32_0 = arith.constant 0 : i32
    %c0_i32_1 = arith.constant 0 : i32
    return %c0_i32, %c0_i32_0 : i32, i32
  }
  func.func @transform_15(%arg0: i32, %arg1: i32) -> (i32, i32) {
    %c0_i32 = arith.constant 0 : i32
    %c0_i32_0 = arith.constant 0 : i32
    %c0_i32_1 = arith.constant 0 : i32
    return %c0_i32, %c0_i32_0 : i32, i32
  }
  func.func @transform_16(%arg0: i32, %arg1: i32) -> (i32, i32) {
    %c0_i32 = arith.constant 0 : i32
    %c0_i32_0 = arith.constant 0 : i32
    %c0_i32_1 = arith.constant 0 : i32
    return %c0_i32, %c0_i32_0 : i32, i32
  }
  func.func @transform_17(%arg0: i32, %arg1: i32) -> (i32, i32) {
    %c0_i32 = arith.constant 0 : i32
    %c0_i32_0 = arith.constant 0 : i32
    %c0_i32_1 = arith.constant 0 : i32
    return %c0_i32, %c0_i32_0 : i32, i32
  }
  func.func @transform_18(%arg0: i32, %arg1: i32) -> (i32, i32) {
    %c0_i32 = arith.constant 0 : i32
    %c0_i32_0 = arith.constant 0 : i32
    %c0_i32_1 = arith.constant 0 : i32
    return %c0_i32, %c0_i32_0 : i32, i32
  }
  func.func @transform_19(%arg0: i32, %arg1: i32) -> (i32, i32) {
    %c0_i32 = arith.constant 0 : i32
    %c0_i32_0 = arith.constant 0 : i32
    %c0_i32_1 = arith.constant 0 : i32
    return %c0_i32, %c0_i32_0 : i32, i32
  }
  func.func @transform_20(%arg0: i32, %arg1: i32) -> (i32, i32) {
    %c0_i32 = arith.constant 0 : i32
    %c0_i32_0 = arith.constant 0 : i32
    %c0_i32_1 = arith.constant 0 : i32
    return %c0_i32, %c0_i32_0 : i32, i32
  }
  func.func @transform_21(%arg0: i32, %arg1: i32) -> (i32, i32) {
    %c0_i32 = arith.constant 0 : i32
    %c0_i32_0 = arith.constant 0 : i32
    %c0_i32_1 = arith.constant 0 : i32
    return %c0_i32, %c0_i32_0 : i32, i32
  }
  func.func @transform_22(%arg0: i32, %arg1: i32) -> (i32, i32) {
    %c0_i32 = arith.constant 0 : i32
    %c0_i32_0 = arith.constant 0 : i32
    %c0_i32_1 = arith.constant 0 : i32
    return %c0_i32, %c0_i32_0 : i32, i32
  }
  func.func @transform_23(%arg0: i32, %arg1: i32) -> (i32, i32) {
    %c0_i32 = arith.constant 0 : i32
    %c0_i32_0 = arith.constant 0 : i32
    %c0_i32_1 = arith.constant 0 : i32
    return %c0_i32, %c0_i32_0 : i32, i32
  }
  func.func @transform_24(%arg0: i32, %arg1: i32) -> (i32, i32, i32) {
    %c0_i32 = arith.constant 0 : i32
    %c0_i32_0 = arith.constant 0 : i32
    return %arg0, %c0_i32, %arg1 : i32, i32, i32
  }
}

</mosaic_0001>

<llo_original>
// kernel: point_transformer_layer_g.1
$region0: #{point_transformer_layer_g.1}
  #allocation0 [shape = 'u32[]', space=smem, size = 0x4, offset = 0x4, fixed_abs, tag = 'smem constant byte address 0x4 - core index']
  #allocation1 [shape = 'u32[72,128]{1,0:T(1,128)}', space=vmem, size = 0x9000, scoped, tag = 'internal scratch']
  #allocation2 [shape = 'f32[64,256]{1,0:T(8,128)}', space=vmem, size = 0x10000, scoped, tag = 'scratch operand']
  %s0 = inlined_call_operand.vmem [shape: f32[2,3,256], index: 0, kind: input, shape index: {}, may-alias: {0,2}]
  %s1 = inlined_call_operand.vmem [shape: f32[2,32,256], index: 1, kind: input, shape index: {}, may-alias: {1,3}]
  %s2 = inlined_call_operand.vmem [shape: f32[2,3,256], index: 2, kind: input, shape index: {}, may-alias: {0,2}]
  %s3 = inlined_call_operand.vmem [shape: f32[2,32,256], index: 3, kind: input, shape index: {}, may-alias: {1,3}]
  %s4 = inlined_call_operand.vmem [shape: f32[3,3], index: 4, kind: input, shape index: {}]
  %s5 = inlined_call_operand.vmem [shape: f32[3,1], index: 5, kind: input, shape index: {}]
  %s6 = inlined_call_operand.vmem [shape: f32[32,3], index: 6, kind: input, shape index: {}]
  %s7 = inlined_call_operand.vmem [shape: f32[32,1], index: 7, kind: input, shape index: {}]
  %s8 = inlined_call_operand.vmem [shape: bf16[32,32], index: 8, kind: input, shape index: {}]
  %s9 = inlined_call_operand.vmem [shape: f32[32,1], index: 9, kind: input, shape index: {}]
  %s10 = inlined_call_operand.vmem [shape: bf16[64,32], index: 10, kind: input, shape index: {}]
  %s11 = inlined_call_operand.vmem [shape: f32[64,1], index: 11, kind: input, shape index: {}]
  %s12 = inlined_call_operand.vmem [shape: bf16[32,32], index: 12, kind: input, shape index: {}]
  %s13 = inlined_call_operand.vmem [shape: f32[32,1], index: 13, kind: input, shape index: {}]
  %s14 = inlined_call_operand.vmem [shape: f32[32,1], index: 14, kind: input, shape index: {}]
  %s15 = inlined_call_operand.vmem [shape: f32[32,1], index: 15, kind: input, shape index: {}]
  %s16 = inlined_call_operand.vmem [shape: bf16[64,32], index: 16, kind: input, shape index: {}]
  %s17 = inlined_call_operand.vmem [shape: f32[64,1], index: 17, kind: input, shape index: {}]
  %s18 = inlined_call_operand.vmem [shape: bf16[32,64], index: 18, kind: input, shape index: {}]
  %s19 = inlined_call_operand.vmem [shape: f32[32,1], index: 19, kind: input, shape index: {}]
  %s20 = inlined_call_operand.vmem [shape: f32[32,1], index: 20, kind: input, shape index: {}]
  %s21 = inlined_call_operand.vmem [shape: f32[32,1], index: 21, kind: input, shape index: {}]
  %s22 = inlined_call_operand.vmem [shape: bf16[32,32], index: 22, kind: input, shape index: {}]
  %s23 = inlined_call_operand.vmem [shape: f32[32,1], index: 23, kind: input, shape index: {}]
  %s24 = inlined_call_operand.hbm [shape: f32[2,32,256], index: 24, kind: output, shape index: {}]
  %s25 = sld [smem:[#allocation0]]
  $region133: #{point_transformer_layer_g.1} parent=0
    _
  %s27 = ssub.s32 1, %s25
  %s28 = scalar_select 0, %s27, %s25
  $region1: #{point_transformer_layer_g.1} parent=0
    #allocation3 [shape = 'u8[65536]{0}', space=vmem, size = 0x10000, scoped, tag = 'output window, operand 0']
    #allocation4 [shape = 's32[2]{0}', space=sflag, size = 0x8, scoped, tag = 'scoped memory for point_transformer_layer_g.1']
    %29 = vsyncpa [#allocation4], 0
    %s30 = scalar_lea.sflag [#allocation4], 1
    %31 = vsyncpa %s30, 0
    loop: start=0, step=1, limit=4
    $region2: #{point_transformer_layer_g.1} parent=1 // loop_pre_header
      _
    $region3: #{point_transformer_layer_g.1} parent=1 // loop_header
      %s33 = sphi 0, %s37
      %p34 = scmp.ge.s32.totalorder %s33, 4
      %s40 = sphi 0, %s52
      %s41 = sphi 0, %s48
      %s42 = sphi 0, %s40
      %s43 = sphi 0, %s41
      %s44 = sphi 0, %s42
      %s45 = sphi 0, %s43
      %s57 = sphi 0, %s59
      %s60 = sphi 0, %s57
      %s61 = sphi 0, %s60
      %s77 = sphi 0, %s61
      %s85 = sphi 0, %s87
      %s88 = sphi 0, %s85
      %s89 = sphi 0, %s88
      %s105 = sphi 0, %s89
      %s111 = sphi 0, %s113
      %s114 = sphi 0, %s111
      %s115 = sphi 0, %s114
      %s131 = sphi 0, %s115
      %s137 = sphi 0, %s139
      %s140 = sphi 0, %s137
      %s141 = sphi 0, %s140
      %s157 = sphi 0, %s141
      %s161 = sphi 0, %s161
      %s163 = sphi 0, %s161
      %s164 = sphi 0, %s163
      %s178 = sphi 0, %s164
      %s182 = sphi 0, %s182
      %s184 = sphi 0, %s182
      %s185 = sphi 0, %s184
      %s199 = sphi 0, %s185
      %s203 = sphi 0, %s203
      %s205 = sphi 0, %s203
      %s206 = sphi 0, %s205
      %s220 = sphi 0, %s206
      %s224 = sphi 0, %s224
      %s226 = sphi 0, %s224
      %s227 = sphi 0, %s226
      %s241 = sphi 0, %s227
      %s245 = sphi 0, %s245
      %s247 = sphi 0, %s245
      %s248 = sphi 0, %s247
      %s262 = sphi 0, %s248
      %s266 = sphi 0, %s266
      %s268 = sphi 0, %s266
      %s269 = sphi 0, %s268
      %s283 = sphi 0, %s269
      %s287 = sphi 0, %s287
      %s289 = sphi 0, %s287
      %s290 = sphi 0, %s289
      %s304 = sphi 0, %s290
      %s308 = sphi 0, %s308
      %s310 = sphi 0, %s308
      %s311 = sphi 0, %s310
      %s325 = sphi 0, %s311
      %s329 = sphi 0, %s329
      %s331 = sphi 0, %s329
      %s332 = sphi 0, %s331
      %s346 = sphi 0, %s332
      %s350 = sphi 0, %s350
      %s352 = sphi 0, %s350
      %s353 = sphi 0, %s352
      %s367 = sphi 0, %s353
      %s371 = sphi 0, %s371
      %s373 = sphi 0, %s371
      %s374 = sphi 0, %s373
      %s388 = sphi 0, %s374
      %s392 = sphi 0, %s392
      %s394 = sphi 0, %s392
      %s395 = sphi 0, %s394
      %s409 = sphi 0, %s395
      %s413 = sphi 0, %s413
      %s415 = sphi 0, %s413
      %s416 = sphi 0, %s415
      %s430 = sphi 0, %s416
      %s434 = sphi 0, %s434
      %s436 = sphi 0, %s434
      %s437 = sphi 0, %s436
      %s451 = sphi 0, %s437
      %s455 = sphi 0, %s455
      %s457 = sphi 0, %s455
      %s458 = sphi 0, %s457
      %s472 = sphi 0, %s458
      %s476 = sphi 0, %s476
      %s478 = sphi 0, %s476
      %s479 = sphi 0, %s478
      %s493 = sphi 0, %s479
      %s497 = sphi 0, %s497
      %s499 = sphi 0, %s497
      %s500 = sphi 0, %s499
      %s514 = sphi 0, %s500
      %s518 = sphi 0, %s518
      %s520 = sphi 0, %s518
      %s521 = sphi 0, %s520
      %s535 = sphi 0, %s521
      %s539 = sphi 0, %s539
      %s541 = sphi 0, %s539
      %s542 = sphi 0, %s541
      %s556 = sphi 0, %s542
      %s560 = sphi 0, %s560
      %s562 = sphi 0, %s560
      %s563 = sphi 0, %s562
      %s577 = sphi 0, %s563
      %s585 = sphi 0, %s587
      %s588 = sphi 0, %s585
      %s589 = sphi 0, %s588
      %s605 = sphi 0, %s589
    $region4: #{point_transformer_layer_g.1} parent=1 // loop_header_branch
      %36 = sbr.rel (%p34) target = $region8
    $region5: #{point_transformer_layer_g.1} parent=1 // loop_body
      %s38 = ssub.s32 %s33, 1
      %s39 = ssub.s32 %s33, 2
      %s46 = sadd.s32 1, %s41
      %p47 = scmp.ge.s32.totalorder %s46, 1
      %s48 = scalar_select %p47, 0, %s46
      %s49 = sadd.s32 1, %s40
      %s50 = scalar_select %p47, %s49, %s40
      %p51 = scmp.ge.s32.totalorder %s50, 2
      %s52 = scalar_select %p51, 0, %s50
      %s53 = ssub.s32 %s40, %s52
      %s54 = ssub.s32 %s41, %s48
      %s55 = sor.u32 %s53, %s54
      %p56 = scmp.eq.s32.totalorder %s55, 0
      %s58 = sadd.s32 %s57, 1
      %s59 = scalar_select %p56, %s57, %s58
      %p62 = pneg %p56
      %p63 = scmp.eq.s32.totalorder %s33, 1
      %p64 = por %p62, %p63
      %p65 = scmp.ne.s32.totalorder %s57, %s60
      %p66 = scmp.eq.s32.totalorder %s33, 0
      %p67 = por %p65, %p66
      %p68 = scmp.ne.s32.totalorder %s57, %s60
      %p69 = scmp.eq.s32.totalorder %s38, 1
      %p70 = por %p68, %p69
      %p71 = scmp.ne.s32.totalorder %s60, %s61
      %p72 = scmp.eq.s32.totalorder %s38, 0
      %p73 = por %p71, %p72
      %p74 = scmp.ne.s32.totalorder %s60, %s61
      %p75 = scmp.eq.s32.totalorder %s39, 1
      %p76 = por %p74, %p75
      %p78 = scmp.ne.s32.totalorder %s61, %s77
      %p79 = scmp.eq.s32.totalorder %s39, 0
      %p80 = por %p78, %p79
      %s81 = ssub.s32 %s40, %s52
      %s82 = ssub.s32 %s41, %s48
      %s83 = sor.u32 %s81, %s82
      %p84 = scmp.eq.s32.totalorder %s83, 0
      %s86 = sadd.s32 %s85, 1
      %s87 = scalar_select %p84, %s85, %s86
      %p90 = pneg %p84
      %p91 = scmp.eq.s32.totalorder %s33, 1
      %p92 = por %p90, %p91
      %p93 = scmp.ne.s32.totalorder %s85, %s88
      %p94 = scmp.eq.s32.totalorder %s33, 0
      %p95 = por %p93, %p94
      %p96 = scmp.ne.s32.totalorder %s85, %s88
      %p97 = scmp.eq.s32.totalorder %s38, 1
      %p98 = por %p96, %p97
      %p99 = scmp.ne.s32.totalorder %s88, %s89
      %p100 = scmp.eq.s32.totalorder %s38, 0
      %p101 = por %p99, %p100
      %p102 = scmp.ne.s32.totalorder %s88, %s89
      %p103 = scmp.eq.s32.totalorder %s39, 1
      %p104 = por %p102, %p103
      %p106 = scmp.ne.s32.totalorder %s89, %s105
      %p107 = scmp.eq.s32.totalorder %s39, 0
      %p108 = por %p106, %p107
      %s109 = ssub.s32 %s40, %s52
      %p110 = scmp.eq.s32.totalorder %s109, 0
      %s112 = sadd.s32 %s111, 1
      %s113 = scalar_select %p110, %s111, %s112
      %p116 = pneg %p110
      %p117 = scmp.eq.s32.totalorder %s33, 1
      %p118 = por %p116, %p117
      %p119 = scmp.ne.s32.totalorder %s111, %s114
      %p120 = scmp.eq.s32.totalorder %s33, 0
      %p121 = por %p119, %p120
      %p122 = scmp.ne.s32.totalorder %s111, %s114
      %p123 = scmp.eq.s32.totalorder %s38, 1
      %p124 = por %p122, %p123
      %p125 = scmp.ne.s32.totalorder %s114, %s115
      %p126 = scmp.eq.s32.totalorder %s38, 0
      %p127 = por %p125, %p126
      %p128 = scmp.ne.s32.totalorder %s114, %s115
      %p129 = scmp.eq.s32.totalorder %s39, 1
      %p130 = por %p128, %p129
      %p132 = scmp.ne.s32.totalorder %s115, %s131
      %p133 = scmp.eq.s32.totalorder %s39, 0
      %p134 = por %p132, %p133
      %s135 = ssub.s32 %s40, %s52
      %p136 = scmp.eq.s32.totalorder %s135, 0
      %s138 = sadd.s32 %s137, 1
      %s139 = scalar_select %p136, %s137, %s138
      %p142 = pneg %p136
      %p143 = scmp.eq.s32.totalorder %s33, 1
      %p144 = por %p142, %p143
      %p145 = scmp.ne.s32.totalorder %s137, %s140
      %p146 = scmp.eq.s32.totalorder %s33, 0
      %p147 = por %p145, %p146
      %p148 = scmp.ne.s32.totalorder %s137, %s140
      %p149 = scmp.eq.s32.totalorder %s38, 1
      %p150 = por %p148, %p149
      %p151 = scmp.ne.s32.totalorder %s140, %s141
      %p152 = scmp.eq.s32.totalorder %s38, 0
      %p153 = por %p151, %p152
      %p154 = scmp.ne.s32.totalorder %s140, %s141
      %p155 = scmp.eq.s32.totalorder %s39, 1
      %p156 = por %p154, %p155
      %p158 = scmp.ne.s32.totalorder %s141, %s157
      %p159 = scmp.eq.s32.totalorder %s39, 0
      %p160 = por %p158, %p159
      %s162 = sadd.s32 %s161, 1
      %p165 = scmp.eq.s32.totalorder %s33, 1
      %p166 = scmp.ne.s32.totalorder %s161, %s163
      %p167 = scmp.eq.s32.totalorder %s33, 0
      %p168 = por %p166, %p167
      %p169 = scmp.ne.s32.totalorder %s161, %s163
      %p170 = scmp.eq.s32.totalorder %s38, 1
      %p171 = por %p169, %p170
      %p172 = scmp.ne.s32.totalorder %s163, %s164
      %p173 = scmp.eq.s32.totalorder %s38, 0
      %p174 = por %p172, %p173
      %p175 = scmp.ne.s32.totalorder %s163, %s164
      %p176 = scmp.eq.s32.totalorder %s39, 1
      %p177 = por %p175, %p176
      %p179 = scmp.ne.s32.totalorder %s164, %s178
      %p180 = scmp.eq.s32.totalorder %s39, 0
      %p181 = por %p179, %p180
      %s183 = sadd.s32 %s182, 1
      %p186 = scmp.eq.s32.totalorder %s33, 1
      %p187 = scmp.ne.s32.totalorder %s182, %s184
      %p188 = scmp.eq.s32.totalorder %s33, 0
      %p189 = por %p187, %p188
      %p190 = scmp.ne.s32.totalorder %s182, %s184
      %p191 = scmp.eq.s32.totalorder %s38, 1
      %p192 = por %p190, %p191
      %p193 = scmp.ne.s32.totalorder %s184, %s185
      %p194 = scmp.eq.s32.totalorder %s38, 0
      %p195 = por %p193, %p194
      %p196 = scmp.ne.s32.totalorder %s184, %s185
      %p197 = scmp.eq.s32.totalorder %s39, 1
      %p198 = por %p196, %p197
      %p200 = scmp.ne.s32.totalorder %s185, %s199
      %p201 = scmp.eq.s32.totalorder %s39, 0
      %p202 = por %p200, %p201
      %s204 = sadd.s32 %s203, 1
      %p207 = scmp.eq.s32.totalorder %s33, 1
      %p208 = scmp.ne.s32.totalorder %s203, %s205
      %p209 = scmp.eq.s32.totalorder %s33, 0
      %p210 = por %p208, %p209
      %p211 = scmp.ne.s32.totalorder %s203, %s205
      %p212 = scmp.eq.s32.totalorder %s38, 1
      %p213 = por %p211, %p212
      %p214 = scmp.ne.s32.totalorder %s205, %s206
      %p215 = scmp.eq.s32.totalorder %s38, 0
      %p216 = por %p214, %p215
      %p217 = scmp.ne.s32.totalorder %s205, %s206
      %p218 = scmp.eq.s32.totalorder %s39, 1
      %p219 = por %p217, %p218
      %p221 = scmp.ne.s32.totalorder %s206, %s220
      %p222 = scmp.eq.s32.totalorder %s39, 0
      %p223 = por %p221, %p222
      %s225 = sadd.s32 %s224, 1
      %p228 = scmp.eq.s32.totalorder %s33, 1
      %p229 = scmp.ne.s32.totalorder %s224, %s226
      %p230 = scmp.eq.s32.totalorder %s33, 0
      %p231 = por %p229, %p230
      %p232 = scmp.ne.s32.totalorder %s224, %s226
      %p233 = scmp.eq.s32.totalorder %s38, 1
      %p234 = por %p232, %p233
      %p235 = scmp.ne.s32.totalorder %s226, %s227
      %p236 = scmp.eq.s32.totalorder %s38, 0
      %p237 = por %p235, %p236
      %p238 = scmp.ne.s32.totalorder %s226, %s227
      %p239 = scmp.eq.s32.totalorder %s39, 1
      %p240 = por %p238, %p239
      %p242 = scmp.ne.s32.totalorder %s227, %s241
      %p243 = scmp.eq.s32.totalorder %s39, 0
      %p244 = por %p242, %p243
      %s246 = sadd.s32 %s245, 1
      %p249 = scmp.eq.s32.totalorder %s33, 1
      %p250 = scmp.ne.s32.totalorder %s245, %s247
      %p251 = scmp.eq.s32.totalorder %s33, 0
      %p252 = por %p250, %p251
      %p253 = scmp.ne.s32.totalorder %s245, %s247
      %p254 = scmp.eq.s32.totalorder %s38, 1
      %p255 = por %p253, %p254
      %p256 = scmp.ne.s32.totalorder %s247, %s248
      %p257 = scmp.eq.s32.totalorder %s38, 0
      %p258 = por %p256, %p257
      %p259 = scmp.ne.s32.totalorder %s247, %s248
      %p260 = scmp.eq.s32.totalorder %s39, 1
      %p261 = por %p259, %p260
      %p263 = scmp.ne.s32.totalorder %s248, %s262
      %p264 = scmp.eq.s32.totalorder %s39, 0
      %p265 = por %p263, %p264
      %s267 = sadd.s32 %s266, 1
      %p270 = scmp.eq.s32.totalorder %s33, 1
      %p271 = scmp.ne.s32.totalorder %s266, %s268
      %p272 = scmp.eq.s32.totalorder %s33, 0
      %p273 = por %p271, %p272
      %p274 = scmp.ne.s32.totalorder %s266, %s268
      %p275 = scmp.eq.s32.totalorder %s38, 1
      %p276 = por %p274, %p275
      %p277 = scmp.ne.s32.totalorder %s268, %s269
      %p278 = scmp.eq.s32.totalorder %s38, 0
      %p279 = por %p277, %p278
      %p280 = scmp.ne.s32.totalorder %s268, %s269
      %p281 = scmp.eq.s32.totalorder %s39, 1
      %p282 = por %p280, %p281
      %p284 = scmp.ne.s32.totalorder %s269, %s283
      %p285 = scmp.eq.s32.totalorder %s39, 0
      %p286 = por %p284, %p285
      %s288 = sadd.s32 %s287, 1
      %p291 = scmp.eq.s32.totalorder %s33, 1
      %p292 = scmp.ne.s32.totalorder %s287, %s289
      %p293 = scmp.eq.s32.totalorder %s33, 0
      %p294 = por %p292, %p293
      %p295 = scmp.ne.s32.totalorder %s287, %s289
      %p296 = scmp.eq.s32.totalorder %s38, 1
      %p297 = por %p295, %p296
      %p298 = scmp.ne.s32.totalorder %s289, %s290
      %p299 = scmp.eq.s32.totalorder %s38, 0
      %p300 = por %p298, %p299
      %p301 = scmp.ne.s32.totalorder %s289, %s290
      %p302 = scmp.eq.s32.totalorder %s39, 1
      %p303 = por %p301, %p302
      %p305 = scmp.ne.s32.totalorder %s290, %s304
      %p306 = scmp.eq.s32.totalorder %s39, 0
      %p307 = por %p305, %p306
      %s309 = sadd.s32 %s308, 1
      %p312 = scmp.eq.s32.totalorder %s33, 1
      %p313 = scmp.ne.s32.totalorder %s308, %s310
      %p314 = scmp.eq.s32.totalorder %s33, 0
      %p315 = por %p313, %p314
      %p316 = scmp.ne.s32.totalorder %s308, %s310
      %p317 = scmp.eq.s32.totalorder %s38, 1
      %p318 = por %p316, %p317
      %p319 = scmp.ne.s32.totalorder %s310, %s311
      %p320 = scmp.eq.s32.totalorder %s38, 0
      %p321 = por %p319, %p320
      %p322 = scmp.ne.s32.totalorder %s310, %s311
      %p323 = scmp.eq.s32.totalorder %s39, 1
      %p324 = por %p322, %p323
      %p326 = scmp.ne.s32.totalorder %s311, %s325
      %p327 = scmp.eq.s32.totalorder %s39, 0
      %p328 = por %p326, %p327
      %s330 = sadd.s32 %s329, 1
      %p333 = scmp.eq.s32.totalorder %s33, 1
      %p334 = scmp.ne.s32.totalorder %s329, %s331
      %p335 = scmp.eq.s32.totalorder %s33, 0
      %p336 = por %p334, %p335
      %p337 = scmp.ne.s32.totalorder %s329, %s331
      %p338 = scmp.eq.s32.totalorder %s38, 1
      %p339 = por %p337, %p338
      %p340 = scmp.ne.s32.totalorder %s331, %s332
      %p341 = scmp.eq.s32.totalorder %s38, 0
      %p342 = por %p340, %p341
      %p343 = scmp.ne.s32.totalorder %s331, %s332
      %p344 = scmp.eq.s32.totalorder %s39, 1
      %p345 = por %p343, %p344
      %p347 = scmp.ne.s32.totalorder %s332, %s346
      %p348 = scmp.eq.s32.totalorder %s39, 0
      %p349 = por %p347, %p348
      %s351 = sadd.s32 %s350, 1
      %p354 = scmp.eq.s32.totalorder %s33, 1
      %p355 = scmp.ne.s32.totalorder %s350, %s352
      %p356 = scmp.eq.s32.totalorder %s33, 0
      %p357 = por %p355, %p356
      %p358 = scmp.ne.s32.totalorder %s350, %s352
      %p359 = scmp.eq.s32.totalorder %s38, 1
      %p360 = por %p358, %p359
      %p361 = scmp.ne.s32.totalorder %s352, %s353
      %p362 = scmp.eq.s32.totalorder %s38, 0
      %p363 = por %p361, %p362
      %p364 = scmp.ne.s32.totalorder %s352, %s353
      %p365 = scmp.eq.s32.totalorder %s39, 1
      %p366 = por %p364, %p365
      %p368 = scmp.ne.s32.totalorder %s353, %s367
      %p369 = scmp.eq.s32.totalorder %s39, 0
      %p370 = por %p368, %p369
      %s372 = sadd.s32 %s371, 1
      %p375 = scmp.eq.s32.totalorder %s33, 1
      %p376 = scmp.ne.s32.totalorder %s371, %s373
      %p377 = scmp.eq.s32.totalorder %s33, 0
      %p378 = por %p376, %p377
      %p379 = scmp.ne.s32.totalorder %s371, %s373
      %p380 = scmp.eq.s32.totalorder %s38, 1
      %p381 = por %p379, %p380
      %p382 = scmp.ne.s32.totalorder %s373, %s374
      %p383 = scmp.eq.s32.totalorder %s38, 0
      %p384 = por %p382, %p383
      %p385 = scmp.ne.s32.totalorder %s373, %s374
      %p386 = scmp.eq.s32.totalorder %s39, 1
      %p387 = por %p385, %p386
      %p389 = scmp.ne.s32.totalorder %s374, %s388
      %p390 = scmp.eq.s32.totalorder %s39, 0
      %p391 = por %p389, %p390
      %s393 = sadd.s32 %s392, 1
      %p396 = scmp.eq.s32.totalorder %s33, 1
      %p397 = scmp.ne.s32.totalorder %s392, %s394
      %p398 = scmp.eq.s32.totalorder %s33, 0
      %p399 = por %p397, %p398
      %p400 = scmp.ne.s32.totalorder %s392, %s394
      %p401 = scmp.eq.s32.totalorder %s38, 1
      %p402 = por %p400, %p401
      %p403 = scmp.ne.s32.totalorder %s394, %s395
      %p404 = scmp.eq.s32.totalorder %s38, 0
      %p405 = por %p403, %p404
      %p406 = scmp.ne.s32.totalorder %s394, %s395
      %p407 = scmp.eq.s32.totalorder %s39, 1
      %p408 = por %p406, %p407
      %p410 = scmp.ne.s32.totalorder %s395, %s409
      %p411 = scmp.eq.s32.totalorder %s39, 0
      %p412 = por %p410, %p411
      %s414 = sadd.s32 %s413, 1
      %p417 = scmp.eq.s32.totalorder %s33, 1
      %p418 = scmp.ne.s32.totalorder %s413, %s415
      %p419 = scmp.eq.s32.totalorder %s33, 0
      %p420 = por %p418, %p419
      %p421 = scmp.ne.s32.totalorder %s413, %s415
      %p422 = scmp.eq.s32.totalorder %s38, 1
      %p423 = por %p421, %p422
      %p424 = scmp.ne.s32.totalorder %s415, %s416
      %p425 = scmp.eq.s32.totalorder %s38, 0
      %p426 = por %p424, %p425
      %p427 = scmp.ne.s32.totalorder %s415, %s416
      %p428 = scmp.eq.s32.totalorder %s39, 1
      %p429 = por %p427, %p428
      %p431 = scmp.ne.s32.totalorder %s416, %s430
      %p432 = scmp.eq.s32.totalorder %s39, 0
      %p433 = por %p431, %p432
      %s435 = sadd.s32 %s434, 1
      %p438 = scmp.eq.s32.totalorder %s33, 1
      %p439 = scmp.ne.s32.totalorder %s434, %s436
      %p440 = scmp.eq.s32.totalorder %s33, 0
      %p441 = por %p439, %p440
      %p442 = scmp.ne.s32.totalorder %s434, %s436
      %p443 = scmp.eq.s32.totalorder %s38, 1
      %p444 = por %p442, %p443
      %p445 = scmp.ne.s32.totalorder %s436, %s437
      %p446 = scmp.eq.s32.totalorder %s38, 0
      %p447 = por %p445, %p446
      %p448 = scmp.ne.s32.totalorder %s436, %s437
      %p449 = scmp.eq.s32.totalorder %s39, 1
      %p450 = por %p448, %p449
      %p452 = scmp.ne.s32.totalorder %s437, %s451
      %p453 = scmp.eq.s32.totalorder %s39, 0
      %p454 = por %p452, %p453
      %s456 = sadd.s32 %s455, 1
      %p459 = scmp.eq.s32.totalorder %s33, 1
      %p460 = scmp.ne.s32.totalorder %s455, %s457
      %p461 = scmp.eq.s32.totalorder %s33, 0
      %p462 = por %p460, %p461
      %p463 = scmp.ne.s32.totalorder %s455, %s457
      %p464 = scmp.eq.s32.totalorder %s38, 1
      %p465 = por %p463, %p464
      %p466 = scmp.ne.s32.totalorder %s457, %s458
      %p467 = scmp.eq.s32.totalorder %s38, 0
      %p468 = por %p466, %p467
      %p469 = scmp.ne.s32.totalorder %s457, %s458
      %p470 = scmp.eq.s32.totalorder %s39, 1
      %p471 = por %p469, %p470
      %p473 = scmp.ne.s32.totalorder %s458, %s472
      %p474 = scmp.eq.s32.totalorder %s39, 0
      %p475 = por %p473, %p474
      %s477 = sadd.s32 %s476, 1
      %p480 = scmp.eq.s32.totalorder %s33, 1
      %p481 = scmp.ne.s32.totalorder %s476, %s478
      %p482 = scmp.eq.s32.totalorder %s33, 0
      %p483 = por %p481, %p482
      %p484 = scmp.ne.s32.totalorder %s476, %s478
      %p485 = scmp.eq.s32.totalorder %s38, 1
      %p486 = por %p484, %p485
      %p487 = scmp.ne.s32.totalorder %s478, %s479
      %p488 = scmp.eq.s32.totalorder %s38, 0
      %p489 = por %p487, %p488
      %p490 = scmp.ne.s32.totalorder %s478, %s479
      %p491 = scmp.eq.s32.totalorder %s39, 1
      %p492 = por %p490, %p491
      %p494 = scmp.ne.s32.totalorder %s479, %s493
      %p495 = scmp.eq.s32.totalorder %s39, 0
      %p496 = por %p494, %p495
      %s498 = sadd.s32 %s497, 1
      %p501 = scmp.eq.s32.totalorder %s33, 1
      %p502 = scmp.ne.s32.totalorder %s497, %s499
      %p503 = scmp.eq.s32.totalorder %s33, 0
      %p504 = por %p502, %p503
      %p505 = scmp.ne.s32.totalorder %s497, %s499
      %p506 = scmp.eq.s32.totalorder %s38, 1
      %p507 = por %p505, %p506
      %p508 = scmp.ne.s32.totalorder %s499, %s500
      %p509 = scmp.eq.s32.totalorder %s38, 0
      %p510 = por %p508, %p509
      %p511 = scmp.ne.s32.totalorder %s499, %s500
      %p512 = scmp.eq.s32.totalorder %s39, 1
      %p513 = por %p511, %p512
      %p515 = scmp.ne.s32.totalorder %s500, %s514
      %p516 = scmp.eq.s32.totalorder %s39, 0
      %p517 = por %p515, %p516
      %s519 = sadd.s32 %s518, 1
      %p522 = scmp.eq.s32.totalorder %s33, 1
      %p523 = scmp.ne.s32.totalorder %s518, %s520
      %p524 = scmp.eq.s32.totalorder %s33, 0
      %p525 = por %p523, %p524
      %p526 = scmp.ne.s32.totalorder %s518, %s520
      %p527 = scmp.eq.s32.totalorder %s38, 1
      %p528 = por %p526, %p527
      %p529 = scmp.ne.s32.totalorder %s520, %s521
      %p530 = scmp.eq.s32.totalorder %s38, 0
      %p531 = por %p529, %p530
      %p532 = scmp.ne.s32.totalorder %s520, %s521
      %p533 = scmp.eq.s32.totalorder %s39, 1
      %p534 = por %p532, %p533
      %p536 = scmp.ne.s32.totalorder %s521, %s535
      %p537 = scmp.eq.s32.totalorder %s39, 0
      %p538 = por %p536, %p537
      %s540 = sadd.s32 %s539, 1
      %p543 = scmp.eq.s32.totalorder %s33, 1
      %p544 = scmp.ne.s32.totalorder %s539, %s541
      %p545 = scmp.eq.s32.totalorder %s33, 0
      %p546 = por %p544, %p545
      %p547 = scmp.ne.s32.totalorder %s539, %s541
      %p548 = scmp.eq.s32.totalorder %s38, 1
      %p549 = por %p547, %p548
      %p550 = scmp.ne.s32.totalorder %s541, %s542
      %p551 = scmp.eq.s32.totalorder %s38, 0
      %p552 = por %p550, %p551
      %p553 = scmp.ne.s32.totalorder %s541, %s542
      %p554 = scmp.eq.s32.totalorder %s39, 1
      %p555 = por %p553, %p554
      %p557 = scmp.ne.s32.totalorder %s542, %s556
      %p558 = scmp.eq.s32.totalorder %s39, 0
      %p559 = por %p557, %p558
      %s561 = sadd.s32 %s560, 1
      %p564 = scmp.eq.s32.totalorder %s33, 1
      %p565 = scmp.ne.s32.totalorder %s560, %s562
      %p566 = scmp.eq.s32.totalorder %s33, 0
      %p567 = por %p565, %p566
      %p568 = scmp.ne.s32.totalorder %s560, %s562
      %p569 = scmp.eq.s32.totalorder %s38, 1
      %p570 = por %p568, %p569
      %p571 = scmp.ne.s32.totalorder %s562, %s563
      %p572 = scmp.eq.s32.totalorder %s38, 0
      %p573 = por %p571, %p572
      %p574 = scmp.ne.s32.totalorder %s562, %s563
      %p575 = scmp.eq.s32.totalorder %s39, 1
      %p576 = por %p574, %p575
      %p578 = scmp.ne.s32.totalorder %s563, %s577
      %p579 = scmp.eq.s32.totalorder %s39, 0
      %p580 = por %p578, %p579
      %s581 = ssub.s32 %s40, %s52
      %s582 = ssub.s32 %s41, %s48
      %s583 = sor.u32 %s581, %s582
      %p584 = scmp.eq.s32.totalorder %s583, 0
      %s586 = sadd.s32 %s585, 1
      %s587 = scalar_select %p584, %s585, %s586
      %p590 = pneg %p584
      %p591 = scmp.eq.s32.totalorder %s33, 1
      %p592 = por %p590, %p591
      %p593 = scmp.ne.s32.totalorder %s585, %s588
      %p594 = scmp.eq.s32.totalorder %s33, 0
      %p595 = por %p593, %p594
      %p596 = scmp.ne.s32.totalorder %s585, %s588
      %p597 = scmp.eq.s32.totalorder %s38, 1
      %p598 = por %p596, %p597
      %p599 = scmp.ne.s32.totalorder %s588, %s589
      %p600 = scmp.eq.s32.totalorder %s38, 0
      %p601 = por %p599, %p600
      %p602 = scmp.ne.s32.totalorder %s588, %s589
      %p603 = scmp.eq.s32.totalorder %s39, 1
      %p604 = por %p602, %p603
      %p606 = scmp.ne.s32.totalorder %s589, %s605
      %p607 = scmp.eq.s32.totalorder %s39, 0
      %p608 = por %p606, %p607
      %p609 = scmp.le.s32.totalorder 1, %s33
      %p610 = scmp.lt.s32.totalorder %s33, 3
      %p611 = pnand %p609, %p610
      %p612 = pneg %p611
      // Predicated region
      $region9: #{point_transformer_layer_g.1} parent=5 // pred_check
        _
      $region10: #{point_transformer_layer_g.1} parent=5 // pred_check_branch
        %614 = sbr.rel (%p611) target = $region12
      $region11: #{point_transformer_layer_g.1} parent=5 // pred_region
        %s615 = ssub.s32 %s33, 1
        // Predicated region
        $region13: #{point_transformer_layer_g.1} parent=11 // pred_check
          %p616 = pneg %p174
        $region14: #{point_transformer_layer_g.1} parent=11 // pred_check_branch
          %618 = sbr.rel (%p616) target = $region16
        $region15: #{point_transformer_layer_g.1} parent=11 // pred_region
          _
        $region16: #{point_transformer_layer_g.1} parent=11 // pred_fallthru
          _
        // Predicated region
        $region17: #{point_transformer_layer_g.1} parent=11 // pred_check
          %p619 = pneg %p195
        $region18: #{point_transformer_layer_g.1} parent=11 // pred_check_branch
          %621 = sbr.rel (%p619) target = $region20
        $region19: #{point_transformer_layer_g.1} parent=11 // pred_region
          _
        $region20: #{point_transformer_layer_g.1} parent=11 // pred_fallthru
          _
        // Predicated region
        $region21: #{point_transformer_layer_g.1} parent=11 // pred_check
          %p622 = pneg %p216
        $region22: #{point_transformer_layer_g.1} parent=11 // pred_check_branch
          %624 = sbr.rel (%p622) target = $region24
        $region23: #{point_transformer_layer_g.1} parent=11 // pred_region
          _
        $region24: #{point_transformer_layer_g.1} parent=11 // pred_fallthru
          _
        // Predicated region
        $region25: #{point_transformer_layer_g.1} parent=11 // pred_check
          %p625 = pneg %p237
        $region26: #{point_transformer_layer_g.1} parent=11 // pred_check_branch
          %627 = sbr.rel (%p625) target = $region28
        $region27: #{point_transformer_layer_g.1} parent=11 // pred_region
          _
        $region28: #{point_transformer_layer_g.1} parent=11 // pred_fallthru
          _
        // Predicated region
        $region29: #{point_transformer_layer_g.1} parent=11 // pred_check
          %p628 = pneg %p258
        $region30: #{point_transformer_layer_g.1} parent=11 // pred_check_branch
          %630 = sbr.rel (%p628) target = $region32
        $region31: #{point_transformer_layer_g.1} parent=11 // pred_region
          _
        $region32: #{point_transformer_layer_g.1} parent=11 // pred_fallthru
          _
        // Predicated region
        $region33: #{point_transformer_layer_g.1} parent=11 // pred_check
          %p631 = pneg %p279
        $region34: #{point_transformer_layer_g.1} parent=11 // pred_check_branch
          %633 = sbr.rel (%p631) target = $region36
        $region35: #{point_transformer_layer_g.1} parent=11 // pred_region
          _
        $region36: #{point_transformer_layer_g.1} parent=11 // pred_fallthru
          _
        // Predicated region
        $region37: #{point_transformer_layer_g.1} parent=11 // pred_check
          %p634 = pneg %p300
        $region38: #{point_transformer_layer_g.1} parent=11 // pred_check_branch
          %636 = sbr.rel (%p634) target = $region40
        $region39: #{point_transformer_layer_g.1} parent=11 // pred_region
          _
        $region40: #{point_transformer_layer_g.1} parent=11 // pred_fallthru
          _
        // Predicated region
        $region41: #{point_transformer_layer_g.1} parent=11 // pred_check
          %p637 = pneg %p321
        $region42: #{point_transformer_layer_g.1} parent=11 // pred_check_branch
          %639 = sbr.rel (%p637) target = $region44
        $region43: #{point_transformer_layer_g.1} parent=11 // pred_region
          _
        $region44: #{point_transformer_layer_g.1} parent=11 // pred_fallthru
          _
        // Predicated region
        $region45: #{point_transformer_layer_g.1} parent=11 // pred_check
          %p640 = pneg %p342
        $region46: #{point_transformer_layer_g.1} parent=11 // pred_check_branch
          %642 = sbr.rel (%p640) target = $region48
        $region47: #{point_transformer_layer_g.1} parent=11 // pred_region
          _
        $region48: #{point_transformer_layer_g.1} parent=11 // pred_fallthru
          _
        // Predicated region
        $region49: #{point_transformer_layer_g.1} parent=11 // pred_check
          %p643 = pneg %p363
        $region50: #{point_transformer_layer_g.1} parent=11 // pred_check_branch
          %645 = sbr.rel (%p643) target = $region52
        $region51: #{point_transformer_layer_g.1} parent=11 // pred_region
          _
        $region52: #{point_transformer_layer_g.1} parent=11 // pred_fallthru
          _
        // Predicated region
        $region53: #{point_transformer_layer_g.1} parent=11 // pred_check
          %p646 = pneg %p384
        $region54: #{point_transformer_layer_g.1} parent=11 // pred_check_branch
          %648 = sbr.rel (%p646) target = $region56
        $region55: #{point_transformer_layer_g.1} parent=11 // pred_region
          _
        $region56: #{point_transformer_layer_g.1} parent=11 // pred_fallthru
          _
        // Predicated region
        $region57: #{point_transformer_layer_g.1} parent=11 // pred_check
          %p649 = pneg %p405
        $region58: #{point_transformer_layer_g.1} parent=11 // pred_check_branch
          %651 = sbr.rel (%p649) target = $region60
        $region59: #{point_transformer_layer_g.1} parent=11 // pred_region
          _
        $region60: #{point_transformer_layer_g.1} parent=11 // pred_fallthru
          _
        // Predicated region
        $region61: #{point_transformer_layer_g.1} parent=11 // pred_check
          %p652 = pneg %p426
        $region62: #{point_transformer_layer_g.1} parent=11 // pred_check_branch
          %654 = sbr.rel (%p652) target = $region64
        $region63: #{point_transformer_layer_g.1} parent=11 // pred_region
          _
        $region64: #{point_transformer_layer_g.1} parent=11 // pred_fallthru
          _
        // Predicated region
        $region65: #{point_transformer_layer_g.1} parent=11 // pred_check
          %p655 = pneg %p447
        $region66: #{point_transformer_layer_g.1} parent=11 // pred_check_branch
          %657 = sbr.rel (%p655) target = $region68
        $region67: #{point_transformer_layer_g.1} parent=11 // pred_region
          _
        $region68: #{point_transformer_layer_g.1} parent=11 // pred_fallthru
          _
        // Predicated region
        $region69: #{point_transformer_layer_g.1} parent=11 // pred_check
          %p658 = pneg %p468
        $region70: #{point_transformer_layer_g.1} parent=11 // pred_check_branch
          %660 = sbr.rel (%p658) target = $region72
        $region71: #{point_transformer_layer_g.1} parent=11 // pred_region
          _
        $region72: #{point_transformer_layer_g.1} parent=11 // pred_fallthru
          _
        // Predicated region
        $region73: #{point_transformer_layer_g.1} parent=11 // pred_check
          %p661 = pneg %p489
        $region74: #{point_transformer_layer_g.1} parent=11 // pred_check_branch
          %663 = sbr.rel (%p661) target = $region76
        $region75: #{point_transformer_layer_g.1} parent=11 // pred_region
          _
        $region76: #{point_transformer_layer_g.1} parent=11 // pred_fallthru
          _
        // Predicated region
        $region77: #{point_transformer_layer_g.1} parent=11 // pred_check
          %p664 = pneg %p510
        $region78: #{point_transformer_layer_g.1} parent=11 // pred_check_branch
          %666 = sbr.rel (%p664) target = $region80
        $region79: #{point_transformer_layer_g.1} parent=11 // pred_region
          _
        $region80: #{point_transformer_layer_g.1} parent=11 // pred_fallthru
          _
        // Predicated region
        $region81: #{point_transformer_layer_g.1} parent=11 // pred_check
          %p667 = pneg %p531
        $region82: #{point_transformer_layer_g.1} parent=11 // pred_check_branch
          %669 = sbr.rel (%p667) target = $region84
        $region83: #{point_transformer_layer_g.1} parent=11 // pred_region
          _
        $region84: #{point_transformer_layer_g.1} parent=11 // pred_fallthru
          _
        // Predicated region
        $region85: #{point_transformer_layer_g.1} parent=11 // pred_check
          %p670 = pneg %p552
        $region86: #{point_transformer_layer_g.1} parent=11 // pred_check_branch
          %672 = sbr.rel (%p670) target = $region88
        $region87: #{point_transformer_layer_g.1} parent=11 // pred_region
          _
        $region88: #{point_transformer_layer_g.1} parent=11 // pred_fallthru
          _
        // Predicated region
        $region89: #{point_transformer_layer_g.1} parent=11 // pred_check
          %p673 = pneg %p573
        $region90: #{point_transformer_layer_g.1} parent=11 // pred_check_branch
          %675 = sbr.rel (%p673) target = $region92
        $region91: #{point_transformer_layer_g.1} parent=11 // pred_region
          _
        $region92: #{point_transformer_layer_g.1} parent=11 // pred_fallthru
          _
      $region12: #{point_transformer_layer_g.1} parent=5 // pred_fallthru
        _
      %p676 = scmp.lt.s32.totalorder %s33, 2
      // Predicated region
      $region93: #{point_transformer_layer_g.1} parent=5 // pred_check
        %p677 = pneg %p676
      $region94: #{point_transformer_layer_g.1} parent=5 // pred_check_branch
        %679 = sbr.rel (%p677) target = $region96
      $region95: #{point_transformer_layer_g.1} parent=5 // pred_region
        // Predicated region
        $region97: #{point_transformer_layer_g.1} parent=95 // pred_check
          %p680 = pneg %p67
        $region98: #{point_transformer_layer_g.1} parent=95 // pred_check_branch
          %682 = sbr.rel (%p680) target = $region100
        $region99: #{point_transformer_layer_g.1} parent=95 // pred_region
          %s683 = smul.u32 2, %s41
          %p684 = scmp.lt.s32.totalorder %s40, 1
          %s685 = scalar_select %p684, %s40, 1
          %p686 = scmp.lt.s32.totalorder %s683, 1
          %s687 = scalar_select %p686, %s683, 1
          %s688 = smul.addr %s685, 2
          %s689 = sadd.s32 %s687, %s688
          %s690 = smul.addr %s689, 4
          %s691 = scalar_lea.vmem %s0, %s690
          %s692 = smul.u32 2, %s41
        $region100: #{point_transformer_layer_g.1} parent=95 // pred_fallthru
          _
        // Predicated region
        $region101: #{point_transformer_layer_g.1} parent=95 // pred_check
          %p693 = pneg %p95
        $region102: #{point_transformer_layer_g.1} parent=95 // pred_check_branch
          %695 = sbr.rel (%p693) target = $region104
        $region103: #{point_transformer_layer_g.1} parent=95 // pred_region
          %s696 = smul.u32 2, %s41
          %p697 = scmp.lt.s32.totalorder %s40, 1
          %s698 = scalar_select %p697, %s40, 1
          %p699 = scmp.lt.s32.totalorder %s696, 1
          %s700 = scalar_select %p699, %s696, 1
          %s701 = smul.addr %s698, 8
          %s702 = sadd.s32 %s700, %s701
          %s703 = smul.addr %s702, 8
          %s704 = scalar_lea.vmem %s1, %s703
          %s705 = smul.u32 2, %s41
        $region104: #{point_transformer_layer_g.1} parent=95 // pred_fallthru
          _
        // Predicated region
        $region105: #{point_transformer_layer_g.1} parent=95 // pred_check
          %p706 = pneg %p121
        $region106: #{point_transformer_layer_g.1} parent=95 // pred_check_branch
          %708 = sbr.rel (%p706) target = $region108
        $region107: #{point_transformer_layer_g.1} parent=95 // pred_region
          %p709 = scmp.lt.s32.totalorder %s40, 1
          %s710 = scalar_select %p709, %s40, 1
          %s711 = smul.addr %s710, 2
          %s712 = smul.addr %s711, 4
          %s713 = scalar_lea.vmem %s2, %s712
        $region108: #{point_transformer_layer_g.1} parent=95 // pred_fallthru
          _
        // Predicated region
        $region109: #{point_transformer_layer_g.1} parent=95 // pred_check
          %p714 = pneg %p147
        $region110: #{point_transformer_layer_g.1} parent=95 // pred_check_branch
          %716 = sbr.rel (%p714) target = $region112
        $region111: #{point_transformer_layer_g.1} parent=95 // pred_region
          %p717 = scmp.lt.s32.totalorder %s40, 1
          %s718 = scalar_select %p717, %s40, 1
          %s719 = smul.addr %s718, 8
          %s720 = smul.addr %s719, 8
          %s721 = scalar_lea.vmem %s3, %s720
        $region112: #{point_transformer_layer_g.1} parent=95 // pred_fallthru
          _
      $region96: #{point_transformer_layer_g.1} parent=5 // pred_fallthru
        _
      %p722 = scmp.le.s32.totalorder 1, %s33
      %p723 = scmp.lt.s32.totalorder %s33, 3
      %p724 = pnand %p722, %p723
      %p725 = pneg %p724
      // Predicated region
      $region113: #{point_transformer_layer_g.1} parent=5 // pred_check
        _
      $region114: #{point_transformer_layer_g.1} parent=5 // pred_check_branch
        %727 = sbr.rel (%p724) target = $region116
      $region115: #{point_transformer_layer_g.1} parent=5 // pred_region
        %s728 = ssub.s32 %s33, 1
        %s729 = smul.u32 2, %s43
        %p730 = scmp.lt.s32.totalorder %s42, 1
        %s731 = scalar_select %p730, %s42, 1
        %p732 = scmp.lt.s32.totalorder %s729, 1
        %s733 = scalar_select %p732, %s729, 1
        %s734 = smul.addr %s731, 2
        %s735 = sadd.s32 %s733, %s734
        %s736 = smul.addr %s735, 4
        %s737 = scalar_lea.vmem %s0, %s736
        %p738 = pneg %p73
        %p739 = pneg %p70
        %s740 = smul.u32 2, %s43
        %p741 = scmp.lt.s32.totalorder %s42, 1
        %s742 = scalar_select %p741, %s42, 1
        %p743 = scmp.lt.s32.totalorder %s740, 1
        %s744 = scalar_select %p743, %s740, 1
        %s745 = smul.addr %s742, 8
        %s746 = sadd.s32 %s744, %s745
        %s747 = smul.addr %s746, 8
        %s748 = scalar_lea.vmem %s1, %s747
        %p749 = pneg %p101
        %p750 = pneg %p98
        %p751 = scmp.lt.s32.totalorder %s42, 1
        %s752 = scalar_select %p751, %s42, 1
        %s753 = smul.addr %s752, 2
        %s754 = smul.addr %s753, 4
        %s755 = scalar_lea.vmem %s2, %s754
        %p756 = pneg %p127
        %p757 = pneg %p124
        %p758 = scmp.lt.s32.totalorder %s42, 1
        %s759 = scalar_select %p758, %s42, 1
        %s760 = smul.addr %s759, 8
        %s761 = smul.addr %s760, 8
        %s762 = scalar_lea.vmem %s3, %s761
        %p763 = pneg %p153
        %p764 = pneg %p150
        %p765 = pneg %p174
        %p766 = pneg %p171
        %p767 = pneg %p195
        %p768 = pneg %p192
        %p769 = pneg %p216
        %p770 = pneg %p213
        %p771 = pneg %p237
        %p772 = pneg %p234
        %p773 = pneg %p258
        %p774 = pneg %p255
        %p775 = pneg %p279
        %p776 = pneg %p276
        %p777 = pneg %p300
        %p778 = pneg %p297
        %p779 = pneg %p321
        %p780 = pneg %p318
        %p781 = pneg %p342
        %p782 = pneg %p339
        %p783 = pneg %p363
        %p784 = pneg %p360
        %p785 = pneg %p384
        %p786 = pneg %p381
        %p787 = pneg %p405
        %p788 = pneg %p402
        %p789 = pneg %p426
        %p790 = pneg %p423
        %p791 = pneg %p447
        %p792 = pneg %p444
        %p793 = pneg %p468
        %p794 = pneg %p465
        %p795 = pneg %p489
        %p796 = pneg %p486
        %p797 = pneg %p510
        %p798 = pneg %p507
        %p799 = pneg %p531
        %p800 = pneg %p528
        %p801 = pneg %p552
        %p802 = pneg %p549
        %p803 = pneg %p573
        %p804 = pneg %p570
        %p805 = pneg %p601
        %p806 = pneg %p598
        %s807 = sand.u32 %s588, 1
        %s808 = scalar_lea.sflag [#allocation4], %s807
        %s809 = sand.u32 %s588, 1
        %s810 = smul.addr %s809, 64
        %s811 = scalar_lea.vmem [#allocation3], %s810
        %s812 = smul.u32 2, %s43
        %p813 = scmp.lt.s32.totalorder %s42, 1
        %s814 = scalar_select %p813, %s42, 1
        %p815 = scmp.lt.s32.totalorder %s812, 1
        %s816 = scalar_select %p815, %s812, 1
        %s817 = smul.addr %s814, 2
        %s818 = sadd.s32 %s816, %s817
        %s819 = smul.addr %s818, 4
        %s820 = scalar_lea.vmem %s0, %s819
        %s821 = smul.u32 2, %s43
        %s822 = smul.u32 2, %s43
        %p823 = scmp.lt.s32.totalorder %s42, 1
        %s824 = scalar_select %p823, %s42, 1
        %p825 = scmp.lt.s32.totalorder %s822, 1
        %s826 = scalar_select %p825, %s822, 1
        %s827 = smul.addr %s824, 8
        %s828 = sadd.s32 %s826, %s827
        %s829 = smul.addr %s828, 8
        %s830 = scalar_lea.vmem %s1, %s829
        %s831 = smul.u32 2, %s43
        %p832 = scmp.lt.s32.totalorder %s42, 1
        %s833 = scalar_select %p832, %s42, 1
        %s834 = smul.addr %s833, 2
        %s835 = smul.addr %s834, 4
        %s836 = scalar_lea.vmem %s2, %s835
        %p837 = scmp.lt.s32.totalorder %s42, 1
        %s838 = scalar_select %p837, %s42, 1
        %s839 = smul.addr %s838, 8
        %s840 = smul.addr %s839, 8
        %s841 = scalar_lea.vmem %s3, %s840
        %s842 = smul.u32 2, %s43
        %p844 = scmp.eq.s32.totalorder %s43, 0
        // Predicated region
        $region117: #{point_transformer_layer_g.1} parent=115 // pred_check
          %p845 = pneg %p844
        $region118: #{point_transformer_layer_g.1} parent=115 // pred_check_branch
          %847 = sbr.rel (%p845) target = $region120
        $region119: #{point_transformer_layer_g.1} parent=115 // pred_region
          %v848 = vld [vmem:[%s836] sm:$0x77]
          %v849 = vld [vmem:[%s841] sm:$0xff]
          %v850 = vld [vmem:[%s841 + $0x8] sm:$0xff]
          %v851 = vld [vmem:[%s841 + $0x10] sm:$0xff]
          %v852 = vld [vmem:[%s841 + $0x18] sm:$0xff]
          %v853 = vld [vmem:[%s841 + $0x20] sm:$0xff]
          %v854 = vld [vmem:[%s841 + $0x28] sm:$0xff]
          %v855 = vld [vmem:[%s841 + $0x30] sm:$0xff]
          %v856 = vld [vmem:[%s841 + $0x38] sm:$0xff]
          %v857 = vld [vmem:[%s4] sm:$0x7]
          %v858 = vld [vmem:[%s5] sm:$0x7]
          %860 = vset.pattern.permute.xlu0 0
          %861 = vperm.xlu0 %860, %v858
          %v862 = vpop.permute.xlu0 %861
          %865 = vst [vmem:[#allocation1] ss:$2 sm:$0xff] %v848
          %v866 = vld.sshfl [vmem:[#allocation1] sm:$0xff pattern:$0x75316420]
          %v867 = vld.sshfl [vmem:[#allocation1 + $0x8] sm:$0xff pattern:$0x75316420]
          %vm868 = vcmask 23552
          %v870 = vsel %vm868, %v857, 0
          %vm872 = vcmask 1042432
          %v873 = vsel %vm872, %v866, 0
          %v875 = vsel %vm872, %v867, 0
          %877 = vmatpush.msra.mxu0 0.0
          %878 = vmatpush.msra.mxu0 0.0
          %879 = vmatpush.msra.mxu0 0.0
          %880 = vmatpush.msra.mxu0 0.0
          %881 = vmatpush.msra.mxu0 0.0
          %882 = vmatpush.msra.mxu0 0.0
          %883 = vmatpush.msra.mxu0 0.0
          %884 = vmatpush.msra.mxu0 0.0
          %885 = vmatpush.msra.mxu0 0.0
          %886 = vmatpush.msra.mxu0 0.0
          %887 = vmatpush.msra.mxu0 0.0
          %888 = vmatpush.msra.mxu0 0.0
          %889 = vmatpush.msra.mxu0 0.0
          %890 = vmatpush.msra.mxu0 0.0
          %891 = vmatpush.msra.mxu0 0.0
          %892 = vmatpush.msra.mxu0 %v873
          %893 = vmatmul.f32.gmra.mxu0 %v870
          %v894 = vpop.f32.mrf.mxu0
          %v895 = vadd.f32 %v862, %v894
          %896 = vdwg.mxu0
          %897 = vmatpush.msra.mxu0 0.0
          %898 = vmatpush.msra.mxu0 0.0
          %899 = vmatpush.msra.mxu0 0.0
          %900 = vmatpush.msra.mxu0 0.0
          %901 = vmatpush.msra.mxu0 0.0
          %902 = vmatpush.msra.mxu0 0.0
          %903 = vmatpush.msra.mxu0 0.0
          %904 = vmatpush.msra.mxu0 0.0
          %905 = vmatpush.msra.mxu0 0.0
          %906 = vmatpush.msra.mxu0 0.0
          %907 = vmatpush.msra.mxu0 0.0
          %908 = vmatpush.msra.mxu0 0.0
          %909 = vmatpush.msra.mxu0 0.0
          %910 = vmatpush.msra.mxu0 0.0
          %911 = vmatpush.msra.mxu0 0.0
          %912 = vmatpush.msra.mxu0 %v875
          %913 = vmatmul.f32.gmra.mxu0 %v870
          %v914 = vpop.f32.mrf.mxu0
          %v915 = vadd.f32 %v862, %v914
          %916 = vdwg.mxu0
          %v917 = vmax.f32 %v895, 0.0
          %v918 = vmax.f32 %v915, 0.0
          %v919 = vld [vmem:[%s6] sm:$0xff]
          %v920 = vld [vmem:[%s6 + $0x8] sm:$0xff]
          %v921 = vld [vmem:[%s6 + $0x10] sm:$0xff]
          %v922 = vld [vmem:[%s6 + $0x18] sm:$0xff]
          %v924 = vsel %vm868, %v919, 0
          %v927 = vsel %vm868, %v920, 0
          %v930 = vsel %vm868, %v921, 0
          %v933 = vsel %vm868, %v922, 0
          %v936 = vsel %vm872, %v917, 0
          %v939 = vsel %vm872, %v918, 0
          %941 = vmatpush.msra.mxu0 0.0
          %942 = vmatpush.msra.mxu0 0.0
          %943 = vmatpush.msra.mxu0 0.0
          %944 = vmatpush.msra.mxu0 0.0
          %945 = vmatpush.msra.mxu0 0.0
          %946 = vmatpush.msra.mxu0 0.0
          %947 = vmatpush.msra.mxu0 0.0
          %948 = vmatpush.msra.mxu0 0.0
          %949 = vmatpush.msra.mxu0 0.0
          %950 = vmatpush.msra.mxu0 0.0
          %951 = vmatpush.msra.mxu0 0.0
          %952 = vmatpush.msra.mxu0 0.0
          %953 = vmatpush.msra.mxu0 0.0
          %954 = vmatpush.msra.mxu0 0.0
          %955 = vmatpush.msra.mxu0 0.0
          %956 = vmatpush.msra.mxu0 %v936
          %957 = vmatmul.f32.gmra.mxu0 %v924
          %v958 = vpop.f32.mrf.mxu0
          %v959 = vadd.f32 0.0, %v958
          %960 = vmatmul.f32.gmra.mxu0 %v927
          %v961 = vpop.f32.mrf.mxu0
          %v962 = vadd.f32 0.0, %v961
          %963 = vmatmul.f32.gmra.mxu0 %v930
          %v964 = vpop.f32.mrf.mxu0
          %v965 = vadd.f32 0.0, %v964
          %966 = vmatmul.f32.gmra.mxu0 %v933
          %v967 = vpop.f32.mrf.mxu0
          %v968 = vadd.f32 0.0, %v967
          %969 = vdwg.mxu0
          %970 = vmatpush.msra.mxu0 0.0
          %971 = vmatpush.msra.mxu0 0.0
          %972 = vmatpush.msra.mxu0 0.0
          %973 = vmatpush.msra.mxu0 0.0
          %974 = vmatpush.msra.mxu0 0.0
          %975 = vmatpush.msra.mxu0 0.0
          %976 = vmatpush.msra.mxu0 0.0
          %977 = vmatpush.msra.mxu0 0.0
          %978 = vmatpush.msra.mxu0 0.0
          %979 = vmatpush.msra.mxu0 0.0
          %980 = vmatpush.msra.mxu0 0.0
          %981 = vmatpush.msra.mxu0 0.0
          %982 = vmatpush.msra.mxu0 0.0
          %983 = vmatpush.msra.mxu0 0.0
          %984 = vmatpush.msra.mxu0 0.0
          %985 = vmatpush.msra.mxu0 %v939
          %986 = vmatmul.f32.gmra.mxu0 %v924
          %v987 = vpop.f32.mrf.mxu0
          %v988 = vadd.f32 0.0, %v987
          %989 = vmatmul.f32.gmra.mxu0 %v927
          %v990 = vpop.f32.mrf.mxu0
          %v991 = vadd.f32 0.0, %v990
          %992 = vmatmul.f32.gmra.mxu0 %v930
          %v993 = vpop.f32.mrf.mxu0
          %v994 = vadd.f32 0.0, %v993
          %995 = vmatmul.f32.gmra.mxu0 %v933
          %v996 = vpop.f32.mrf.mxu0
          %v997 = vadd.f32 0.0, %v996
          %998 = vdwg.mxu0
          %v999 = vadd.f32 %v849, %v959
          %v1000 = vadd.f32 %v850, %v988
          %v1001 = vadd.f32 %v851, %v962
          %v1002 = vadd.f32 %v852, %v991
          %v1003 = vadd.f32 %v853, %v965
          %v1004 = vadd.f32 %v854, %v994
          %v1005 = vadd.f32 %v855, %v968
          %v1006 = vadd.f32 %v856, %v997
          %v1007 = vld [vmem:[%s7] sm:$0xff]
          %v1008 = vld [vmem:[%s7 + $0x8] sm:$0xff]
          %v1009 = vld [vmem:[%s7 + $0x10] sm:$0xff]
          %v1010 = vld [vmem:[%s7 + $0x18] sm:$0xff]
          %1012 = vset.pattern.permute.xlu0 0
          %1013 = vperm.xlu0 %1012, %v1007
          %v1014 = vpop.permute.xlu0 %1013
          %1017 = vset.pattern.permute.xlu0 0
          %1018 = vperm.xlu0 %1017, %v1008
          %v1019 = vpop.permute.xlu0 %1018
          %1022 = vset.pattern.permute.xlu0 0
          %1023 = vperm.xlu0 %1022, %v1009
          %v1024 = vpop.permute.xlu0 %1023
          %1027 = vset.pattern.permute.xlu0 0
          %1028 = vperm.xlu0 %1027, %v1010
          %v1029 = vpop.permute.xlu0 %1028
          %v1031 = vadd.f32 %v999, %v1014
          %v1032 = vadd.f32 %v1000, %v1014
          %v1033 = vadd.f32 %v1001, %v1019
          %v1034 = vadd.f32 %v1002, %v1019
          %v1035 = vadd.f32 %v1003, %v1024
          %v1036 = vadd.f32 %v1004, %v1024
          %v1037 = vadd.f32 %v1005, %v1029
          %v1038 = vadd.f32 %v1006, %v1029
          %v1039 = vld [vmem:[%s10] sm:$0xf]
          %v1040 = vld [vmem:[%s10 + $0x4] sm:$0xf]
          %v1041 = vld [vmem:[%s10 + $0x8] sm:$0xf]
          %v1042 = vld [vmem:[%s10 + $0xc] sm:$0xf]
          %v1043 = vld [vmem:[%s10 + $0x10] sm:$0xf]
          %v1044 = vld [vmem:[%s10 + $0x14] sm:$0xf]
          %v1045 = vld [vmem:[%s10 + $0x18] sm:$0xf]
          %v1046 = vld [vmem:[%s10 + $0x1c] sm:$0xf]
          %v1047 = vpack.c.bf16 %v1033, %v1031
          %v1048 = vpack.c.bf16 %v1034, %v1032
          %v1049 = vpack.c.bf16 %v1037, %v1035
          %v1050 = vpack.c.bf16 %v1038, %v1036
          %v1051 = vld [vmem:[%s11] sm:$0xff]
          %v1052 = vld [vmem:[%s11 + $0x8] sm:$0xff]
          %v1053 = vld [vmem:[%s11 + $0x10] sm:$0xff]
          %v1054 = vld [vmem:[%s11 + $0x18] sm:$0xff]
          %v1055 = vld [vmem:[%s11 + $0x20] sm:$0xff]
          %v1056 = vld [vmem:[%s11 + $0x28] sm:$0xff]
          %v1057 = vld [vmem:[%s11 + $0x30] sm:$0xff]
          %v1058 = vld [vmem:[%s11 + $0x38] sm:$0xff]
          %1060 = vset.pattern.permute.xlu0 0
          %1061 = vperm.xlu0 %1060, %v1051
          %v1062 = vpop.permute.xlu0 %1061
          %1065 = vset.pattern.permute.xlu0 0
          %1066 = vperm.xlu0 %1065, %v1052
          %v1067 = vpop.permute.xlu0 %1066
          %1070 = vset.pattern.permute.xlu0 0
          %1071 = vperm.xlu0 %1070, %v1053
          %v1072 = vpop.permute.xlu0 %1071
          %1075 = vset.pattern.permute.xlu0 0
          %1076 = vperm.xlu0 %1075, %v1054
          %v1077 = vpop.permute.xlu0 %1076
          %1080 = vset.pattern.permute.xlu0 0
          %1081 = vperm.xlu0 %1080, %v1055
          %v1082 = vpop.permute.xlu0 %1081
          %1085 = vset.pattern.permute.xlu0 0
          %1086 = vperm.xlu0 %1085, %v1056
          %v1087 = vpop.permute.xlu0 %1086
          %1090 = vset.pattern.permute.xlu0 0
          %1091 = vperm.xlu0 %1090, %v1057
          %v1092 = vpop.permute.xlu0 %1091
          %1095 = vset.pattern.permute.xlu0 0
          %1096 = vperm.xlu0 %1095, %v1058
          %v1097 = vpop.permute.xlu0 %1096
          %v1107 = vunpack.c.l.b16 %v1039
          %v1108 = vunpack.c.l.b16 %v1040
          %v1109 = vunpack.c.l.b16 %v1041
          %v1110 = vunpack.c.l.b16 %v1042
          %v1111 = vunpack.c.l.b16 %v1043
          %v1112 = vunpack.c.l.b16 %v1044
          %v1113 = vunpack.c.l.b16 %v1045
          %v1114 = vunpack.c.l.b16 %v1046
          %v1115 = vpack.c.b16 %v1108, %v1107
          %v1116 = vpack.c.b16 %v1110, %v1109
          %v1117 = vpack.c.b16 %v1112, %v1111
          %v1118 = vpack.c.b16 %v1114, %v1113
          %vm1119 = vcmask 261120
          %v1121 = vsel %vm1119, %v1115, 0
          %v1124 = vsel %vm1119, %v1116, 0
          %v1127 = vsel %vm1119, %v1117, 0
          %v1130 = vsel %vm1119, %v1118, 0
          %1132 = vmatpush.bf16.msra.mxu0 0
          %1133 = vmatpush.bf16.msra.mxu0 0
          %1134 = vmatpush.bf16.msra.mxu0 0
          %1135 = vmatpush.bf16.msra.mxu0 0
          %1136 = vmatpush.bf16.msra.mxu0 0
          %1137 = vmatpush.bf16.msra.mxu0 0
          %1138 = vmatpush.bf16.msra.mxu0 %v1049
          %1139 = vmatpush.bf16.msra.mxu0 %v1047
          %1140 = vmatmul.bf16.gmra.mxu0 %v1121
          %v1141 = vpop.f32.mrf.mxu0
          %v1142 = vadd.f32 %v1062, %v1141
          %v1143 = vpop.f32.mrf.mxu0
          %v1144 = vadd.f32 %v1067, %v1143
          %1145 = vmatmul.bf16.gmra.mxu0 %v1124
          %v1146 = vpop.f32.mrf.mxu0
          %v1147 = vadd.f32 %v1072, %v1146
          %v1148 = vpop.f32.mrf.mxu0
          %v1149 = vadd.f32 %v1077, %v1148
          %1150 = vmatmul.bf16.gmra.mxu0 %v1127
          %v1151 = vpop.f32.mrf.mxu0
          %v1152 = vadd.f32 %v1082, %v1151
          %v1153 = vpop.f32.mrf.mxu0
          %v1154 = vadd.f32 %v1087, %v1153
          %1155 = vmatmul.bf16.gmra.mxu0 %v1130
          %v1156 = vpop.f32.mrf.mxu0
          %v1157 = vadd.f32 %v1092, %v1156
          %v1158 = vpop.f32.mrf.mxu0
          %v1159 = vadd.f32 %v1097, %v1158
          %1160 = vdwg.mxu0
          %1161 = vmatpush.bf16.msra.mxu0 0
          %1162 = vmatpush.bf16.msra.mxu0 0
          %1163 = vmatpush.bf16.msra.mxu0 0
          %1164 = vmatpush.bf16.msra.mxu0 0
          %1165 = vmatpush.bf16.msra.mxu0 0
          %1166 = vmatpush.bf16.msra.mxu0 0
          %1167 = vmatpush.bf16.msra.mxu0 %v1050
          %1168 = vmatpush.bf16.msra.mxu0 %v1048
          %1169 = vmatmul.bf16.gmra.mxu0 %v1121
          %v1170 = vpop.f32.mrf.mxu0
          %v1171 = vadd.f32 %v1062, %v1170
          %v1172 = vpop.f32.mrf.mxu0
          %v1173 = vadd.f32 %v1067, %v1172
          %1174 = vmatmul.bf16.gmra.mxu0 %v1124
          %v1175 = vpop.f32.mrf.mxu0
          %v1176 = vadd.f32 %v1072, %v1175
          %v1177 = vpop.f32.mrf.mxu0
          %v1178 = vadd.f32 %v1077, %v1177
          %1179 = vmatmul.bf16.gmra.mxu0 %v1127
          %v1180 = vpop.f32.mrf.mxu0
          %v1181 = vadd.f32 %v1082, %v1180
          %v1182 = vpop.f32.mrf.mxu0
          %v1183 = vadd.f32 %v1087, %v1182
          %1184 = vmatmul.bf16.gmra.mxu0 %v1130
          %v1185 = vpop.f32.mrf.mxu0
          %v1186 = vadd.f32 %v1092, %v1185
          %v1187 = vpop.f32.mrf.mxu0
          %v1188 = vadd.f32 %v1097, %v1187
          %1189 = vdwg.mxu0
          %1190 = vst [vmem:[#allocation2] sm:$0xff] %v1142
          %1191 = vst [vmem:[#allocation2 + $0x8] sm:$0xff] %v1171
          %1192 = vst [vmem:[#allocation2 + $0x10] sm:$0xff] %v1144
          %1193 = vst [vmem:[#allocation2 + $0x18] sm:$0xff] %v1173
          %1194 = vst [vmem:[#allocation2 + $0x20] sm:$0xff] %v1147
          %1195 = vst [vmem:[#allocation2 + $0x28] sm:$0xff] %v1176
          %1196 = vst [vmem:[#allocation2 + $0x30] sm:$0xff] %v1149
          %1197 = vst [vmem:[#allocation2 + $0x38] sm:$0xff] %v1178
          %1198 = vst [vmem:[#allocation2 + $0x40] sm:$0xff] %v1152
          %1199 = vst [vmem:[#allocation2 + $0x48] sm:$0xff] %v1181
          %1200 = vst [vmem:[#allocation2 + $0x50] sm:$0xff] %v1154
          %1201 = vst [vmem:[#allocation2 + $0x58] sm:$0xff] %v1183
          %1202 = vst [vmem:[#allocation2 + $0x60] sm:$0xff] %v1157
          %1203 = vst [vmem:[#allocation2 + $0x68] sm:$0xff] %v1186
          %1204 = vst [vmem:[#allocation2 + $0x70] sm:$0xff] %v1159
          %1205 = vst [vmem:[#allocation2 + $0x78] sm:$0xff] %v1188
        $region120: #{point_transformer_layer_g.1} parent=115 // pred_fallthru
          _
        %v1206 = vld [vmem:[%s820] sm:$0x77]
        %v1207 = vld [vmem:[%s830] sm:$0xff]
        %v1208 = vld [vmem:[%s830 + $0x8] sm:$0xff]
        %v1209 = vld [vmem:[%s830 + $0x10] sm:$0xff]
        %v1210 = vld [vmem:[%s830 + $0x18] sm:$0xff]
        %v1211 = vld [vmem:[%s830 + $0x20] sm:$0xff]
        %v1212 = vld [vmem:[%s830 + $0x28] sm:$0xff]
        %v1213 = vld [vmem:[%s830 + $0x30] sm:$0xff]
        %v1214 = vld [vmem:[%s830 + $0x38] sm:$0xff]
        %v1215 = vld [vmem:[%s4] sm:$0x7]
        %v1216 = vld [vmem:[%s5] sm:$0x7]
        %1218 = vset.pattern.permute.xlu0 0
        %1219 = vperm.xlu0 %1218, %v1216
        %v1220 = vpop.permute.xlu0 %1219
        %1223 = vst [vmem:[#allocation1] ss:$2 sm:$0xff] %v1206
        %v1224 = vld.sshfl [vmem:[#allocation1] sm:$0xff pattern:$0x75316420]
        %v1225 = vld.sshfl [vmem:[#allocation1 + $0x8] sm:$0xff pattern:$0x75316420]
        %vm1226 = vcmask 23552
        %v1228 = vsel %vm1226, %v1215, 0
        %vm1230 = vcmask 1042432
        %v1231 = vsel %vm1230, %v1224, 0
        %v1233 = vsel %vm1230, %v1225, 0
        %1235 = vmatpush.msra.mxu0 0.0
        %1236 = vmatpush.msra.mxu0 0.0
        %1237 = vmatpush.msra.mxu0 0.0
        %1238 = vmatpush.msra.mxu0 0.0
        %1239 = vmatpush.msra.mxu0 0.0
        %1240 = vmatpush.msra.mxu0 0.0
        %1241 = vmatpush.msra.mxu0 0.0
        %1242 = vmatpush.msra.mxu0 0.0
        %1243 = vmatpush.msra.mxu0 0.0
        %1244 = vmatpush.msra.mxu0 0.0
        %1245 = vmatpush.msra.mxu0 0.0
        %1246 = vmatpush.msra.mxu0 0.0
        %1247 = vmatpush.msra.mxu0 0.0
        %1248 = vmatpush.msra.mxu0 0.0
        %1249 = vmatpush.msra.mxu0 0.0
        %1250 = vmatpush.msra.mxu0 %v1231
        %1251 = vmatmul.f32.gmra.mxu0 %v1228
        %v1252 = vpop.f32.mrf.mxu0
        %v1253 = vadd.f32 %v1220, %v1252
        %1254 = vdwg.mxu0
        %1255 = vmatpush.msra.mxu0 0.0
        %1256 = vmatpush.msra.mxu0 0.0
        %1257 = vmatpush.msra.mxu0 0.0
        %1258 = vmatpush.msra.mxu0 0.0
        %1259 = vmatpush.msra.mxu0 0.0
        %1260 = vmatpush.msra.mxu0 0.0
        %1261 = vmatpush.msra.mxu0 0.0
        %1262 = vmatpush.msra.mxu0 0.0
        %1263 = vmatpush.msra.mxu0 0.0
        %1264 = vmatpush.msra.mxu0 0.0
        %1265 = vmatpush.msra.mxu0 0.0
        %1266 = vmatpush.msra.mxu0 0.0
        %1267 = vmatpush.msra.mxu0 0.0
        %1268 = vmatpush.msra.mxu0 0.0
        %1269 = vmatpush.msra.mxu0 0.0
        %1270 = vmatpush.msra.mxu0 %v1233
        %1271 = vmatmul.f32.gmra.mxu0 %v1228
        %v1272 = vpop.f32.mrf.mxu0
        %v1273 = vadd.f32 %v1220, %v1272
        %1274 = vdwg.mxu0
        %v1275 = vmax.f32 %v1253, 0.0
        %v1276 = vmax.f32 %v1273, 0.0
        %v1277 = vld [vmem:[%s6] sm:$0xff]
        %v1278 = vld [vmem:[%s6 + $0x8] sm:$0xff]
        %v1279 = vld [vmem:[%s6 + $0x10] sm:$0xff]
        %v1280 = vld [vmem:[%s6 + $0x18] sm:$0xff]
        %v1282 = vsel %vm1226, %v1277, 0
        %v1285 = vsel %vm1226, %v1278, 0
        %v1288 = vsel %vm1226, %v1279, 0
        %v1291 = vsel %vm1226, %v1280, 0
        %v1294 = vsel %vm1230, %v1275, 0
        %v1297 = vsel %vm1230, %v1276, 0
        %1299 = vmatpush.msra.mxu0 0.0
        %1300 = vmatpush.msra.mxu0 0.0
        %1301 = vmatpush.msra.mxu0 0.0
        %1302 = vmatpush.msra.mxu0 0.0
        %1303 = vmatpush.msra.mxu0 0.0
        %1304 = vmatpush.msra.mxu0 0.0
        %1305 = vmatpush.msra.mxu0 0.0
        %1306 = vmatpush.msra.mxu0 0.0
        %1307 = vmatpush.msra.mxu0 0.0
        %1308 = vmatpush.msra.mxu0 0.0
        %1309 = vmatpush.msra.mxu0 0.0
        %1310 = vmatpush.msra.mxu0 0.0
        %1311 = vmatpush.msra.mxu0 0.0
        %1312 = vmatpush.msra.mxu0 0.0
        %1313 = vmatpush.msra.mxu0 0.0
        %1314 = vmatpush.msra.mxu0 %v1294
        %1315 = vmatmul.f32.gmra.mxu0 %v1282
        %v1316 = vpop.f32.mrf.mxu0
        %v1317 = vadd.f32 0.0, %v1316
        %1318 = vmatmul.f32.gmra.mxu0 %v1285
        %v1319 = vpop.f32.mrf.mxu0
        %v1320 = vadd.f32 0.0, %v1319
        %1321 = vmatmul.f32.gmra.mxu0 %v1288
        %v1322 = vpop.f32.mrf.mxu0
        %v1323 = vadd.f32 0.0, %v1322
        %1324 = vmatmul.f32.gmra.mxu0 %v1291
        %v1325 = vpop.f32.mrf.mxu0
        %v1326 = vadd.f32 0.0, %v1325
        %1327 = vdwg.mxu0
        %1328 = vmatpush.msra.mxu0 0.0
        %1329 = vmatpush.msra.mxu0 0.0
        %1330 = vmatpush.msra.mxu0 0.0
        %1331 = vmatpush.msra.mxu0 0.0
        %1332 = vmatpush.msra.mxu0 0.0
        %1333 = vmatpush.msra.mxu0 0.0
        %1334 = vmatpush.msra.mxu0 0.0
        %1335 = vmatpush.msra.mxu0 0.0
        %1336 = vmatpush.msra.mxu0 0.0
        %1337 = vmatpush.msra.mxu0 0.0
        %1338 = vmatpush.msra.mxu0 0.0
        %1339 = vmatpush.msra.mxu0 0.0
        %1340 = vmatpush.msra.mxu0 0.0
        %1341 = vmatpush.msra.mxu0 0.0
        %1342 = vmatpush.msra.mxu0 0.0
        %1343 = vmatpush.msra.mxu0 %v1297
        %1344 = vmatmul.f32.gmra.mxu0 %v1282
        %v1345 = vpop.f32.mrf.mxu0
        %v1346 = vadd.f32 0.0, %v1345
        %1347 = vmatmul.f32.gmra.mxu0 %v1285
        %v1348 = vpop.f32.mrf.mxu0
        %v1349 = vadd.f32 0.0, %v1348
        %1350 = vmatmul.f32.gmra.mxu0 %v1288
        %v1351 = vpop.f32.mrf.mxu0
        %v1352 = vadd.f32 0.0, %v1351
        %1353 = vmatmul.f32.gmra.mxu0 %v1291
        %v1354 = vpop.f32.mrf.mxu0
        %v1355 = vadd.f32 0.0, %v1354
        %1356 = vdwg.mxu0
        %v1357 = vadd.f32 %v1207, %v1317
        %v1358 = vadd.f32 %v1208, %v1346
        %v1359 = vadd.f32 %v1209, %v1320
        %v1360 = vadd.f32 %v1210, %v1349
        %v1361 = vadd.f32 %v1211, %v1323
        %v1362 = vadd.f32 %v1212, %v1352
        %v1363 = vadd.f32 %v1213, %v1326
        %v1364 = vadd.f32 %v1214, %v1355
        %v1365 = vld [vmem:[%s7] sm:$0xff]
        %v1366 = vld [vmem:[%s7 + $0x8] sm:$0xff]
        %v1367 = vld [vmem:[%s7 + $0x10] sm:$0xff]
        %v1368 = vld [vmem:[%s7 + $0x18] sm:$0xff]
        %1370 = vset.pattern.permute.xlu0 0
        %1371 = vperm.xlu0 %1370, %v1365
        %v1372 = vpop.permute.xlu0 %1371
        %1375 = vset.pattern.permute.xlu0 0
        %1376 = vperm.xlu0 %1375, %v1366
        %v1377 = vpop.permute.xlu0 %1376
        %1380 = vset.pattern.permute.xlu0 0
        %1381 = vperm.xlu0 %1380, %v1367
        %v1382 = vpop.permute.xlu0 %1381
        %1385 = vset.pattern.permute.xlu0 0
        %1386 = vperm.xlu0 %1385, %v1368
        %v1387 = vpop.permute.xlu0 %1386
        %v1389 = vadd.f32 %v1357, %v1372
        %v1390 = vadd.f32 %v1358, %v1372
        %v1391 = vadd.f32 %v1359, %v1377
        %v1392 = vadd.f32 %v1360, %v1377
        %v1393 = vadd.f32 %v1361, %v1382
        %v1394 = vadd.f32 %v1362, %v1382
        %v1395 = vadd.f32 %v1363, %v1387
        %v1396 = vadd.f32 %v1364, %v1387
        %v1397 = vld [vmem:[%s8] sm:$0xf]
        %v1398 = vld [vmem:[%s8 + $0x4] sm:$0xf]
        %v1399 = vld [vmem:[%s8 + $0x8] sm:$0xf]
        %v1400 = vld [vmem:[%s8 + $0xc] sm:$0xf]
        %v1401 = vpack.c.bf16 %v1391, %v1389
        %v1402 = vpack.c.bf16 %v1392, %v1390
        %v1403 = vpack.c.bf16 %v1395, %v1393
        %v1404 = vpack.c.bf16 %v1396, %v1394
        %v1405 = vld [vmem:[%s9] sm:$0xff]
        %v1406 = vld [vmem:[%s9 + $0x8] sm:$0xff]
        %v1407 = vld [vmem:[%s9 + $0x10] sm:$0xff]
        %v1408 = vld [vmem:[%s9 + $0x18] sm:$0xff]
        %1410 = vset.pattern.permute.xlu0 0
        %1411 = vperm.xlu0 %1410, %v1405
        %v1412 = vpop.permute.xlu0 %1411
        %1415 = vset.pattern.permute.xlu0 0
        %1416 = vperm.xlu0 %1415, %v1406
        %v1417 = vpop.permute.xlu0 %1416
        %1420 = vset.pattern.permute.xlu0 0
        %1421 = vperm.xlu0 %1420, %v1407
        %v1422 = vpop.permute.xlu0 %1421
        %1425 = vset.pattern.permute.xlu0 0
        %1426 = vperm.xlu0 %1425, %v1408
        %v1427 = vpop.permute.xlu0 %1426
        %v1433 = vunpack.c.l.b16 %v1397
        %v1434 = vunpack.c.l.b16 %v1398
        %v1435 = vunpack.c.l.b16 %v1399
        %v1436 = vunpack.c.l.b16 %v1400
        %v1437 = vpack.c.b16 %v1434, %v1433
        %v1438 = vpack.c.b16 %v1436, %v1435
        %vm1439 = vcmask 261120
        %v1441 = vsel %vm1439, %v1437, 0
        %v1444 = vsel %vm1439, %v1438, 0
        %1446 = vmatpush.bf16.msra.mxu0 0
        %1447 = vmatpush.bf16.msra.mxu0 0
        %1448 = vmatpush.bf16.msra.mxu0 0
        %1449 = vmatpush.bf16.msra.mxu0 0
        %1450 = vmatpush.bf16.msra.mxu0 0
        %1451 = vmatpush.bf16.msra.mxu0 0
        %1452 = vmatpush.bf16.msra.mxu0 %v1403
        %1453 = vmatpush.bf16.msra.mxu0 %v1401
        %1454 = vmatmul.bf16.gmra.mxu0 %v1441
        %v1455 = vpop.f32.mrf.mxu0
        %v1456 = vadd.f32 %v1412, %v1455
        %v1457 = vpop.f32.mrf.mxu0
        %v1458 = vadd.f32 %v1417, %v1457
        %1459 = vmatmul.bf16.gmra.mxu0 %v1444
        %v1460 = vpop.f32.mrf.mxu0
        %v1461 = vadd.f32 %v1422, %v1460
        %v1462 = vpop.f32.mrf.mxu0
        %v1463 = vadd.f32 %v1427, %v1462
        %1464 = vdwg.mxu0
        %1465 = vmatpush.bf16.msra.mxu0 0
        %1466 = vmatpush.bf16.msra.mxu0 0
        %1467 = vmatpush.bf16.msra.mxu0 0
        %1468 = vmatpush.bf16.msra.mxu0 0
        %1469 = vmatpush.bf16.msra.mxu0 0
        %1470 = vmatpush.bf16.msra.mxu0 0
        %1471 = vmatpush.bf16.msra.mxu0 %v1404
        %1472 = vmatpush.bf16.msra.mxu0 %v1402
        %1473 = vmatmul.bf16.gmra.mxu0 %v1441
        %v1474 = vpop.f32.mrf.mxu0
        %v1475 = vadd.f32 %v1412, %v1474
        %v1476 = vpop.f32.mrf.mxu0
        %v1477 = vadd.f32 %v1417, %v1476
        %1478 = vmatmul.bf16.gmra.mxu0 %v1444
        %v1479 = vpop.f32.mrf.mxu0
        %v1480 = vadd.f32 %v1422, %v1479
        %v1481 = vpop.f32.mrf.mxu0
        %v1482 = vadd.f32 %v1427, %v1481
        %1483 = vdwg.mxu0
        %v1484 = vmul.f32 %v1456, 0.35355338
        %v1485 = vmul.f32 %v1475, 0.35355338
        %v1486 = vmul.f32 %v1458, 0.35355338
        %v1487 = vmul.f32 %v1477, 0.35355338
        %v1488 = vmul.f32 %v1461, 0.35355338
        %v1489 = vmul.f32 %v1480, 0.35355338
        %v1490 = vmul.f32 %v1463, 0.35355338
        %v1491 = vmul.f32 %v1482, 0.35355338
        %v1492 = vpack.c.bf16 %v1484, %v1484
        %v1493 = vpack.c.bf16 %v1485, %v1485
        %v1494 = vld [vmem:[#allocation2] sm:$0xff]
        %v1495 = vld [vmem:[#allocation2 + $0x8] sm:$0xff]
        %v1496 = vpack.c.bf16 %v1494, %v1494
        %v1497 = vpack.c.bf16 %v1495, %v1495
        %v1498 = vld [vmem:[#allocation2 + $0x40] sm:$0xff]
        %v1499 = vld [vmem:[#allocation2 + $0x48] sm:$0xff]
        %v1500 = vpack.c.bf16 %v1498, %v1498
        %v1501 = vpack.c.bf16 %v1499, %v1499
        %1502 = vxpose.binary.xlu0.c.b16.start [1/16] %v1497, %v1496, 128
        %1503 = vxpose.binary.xlu0.c.b16.cont [2/16] 0, 0, 128
        %1504 = vxpose.binary.xlu0.c.b16.cont [3/16] 0, 0, 128
        %1505 = vxpose.binary.xlu0.c.b16.cont [4/16] 0, 0, 128
        %1506 = vxpose.binary.xlu0.c.b16.cont [5/16] 0, 0, 128
        %1507 = vxpose.binary.xlu0.c.b16.cont [6/16] 0, 0, 128
        %1508 = vxpose.binary.xlu0.c.b16.cont [7/16] 0, 0, 128
        %1509 = vxpose.binary.xlu0.c.b16.end [8/16] 0, 0, 128
        %v1510 = vpop.trf.xlu0
        %v1511 = vpop.trf.xlu0
        %v1512 = vpop.trf.xlu0
        %v1513 = vpop.trf.xlu0
        %v1514 = vpop.trf.xlu0
        %v1515 = vpop.trf.xlu0
        %v1516 = vpop.trf.xlu0
        %v1517 = vpop.trf.xlu0
        %v1518 = vpop.trf.xlu0
        %v1519 = vpop.trf.xlu0
        %v1520 = vpop.trf.xlu0
        %v1521 = vpop.trf.xlu0
        %v1522 = vpop.trf.xlu0
        %v1523 = vpop.trf.xlu0
        %v1524 = vpop.trf.xlu0
        %v1525 = vpop.trf.xlu0
        %vm1526 = vcmask 64512
        %v1528 = vsel %vm1526, %v1510, 0
        %v1531 = vsel %vm1526, %v1512, 0
        %v1534 = vsel %vm1526, %v1514, 0
        %v1537 = vsel %vm1526, %v1516, 0
        %v1540 = vsel %vm1526, %v1518, 0
        %v1543 = vsel %vm1526, %v1520, 0
        %v1546 = vsel %vm1526, %v1522, 0
        %v1549 = vsel %vm1526, %v1524, 0
        %v1552 = vsel %vm1526, %v1511, 0
        %v1555 = vsel %vm1526, %v1513, 0
        %v1558 = vsel %vm1526, %v1515, 0
        %v1561 = vsel %vm1526, %v1517, 0
        %v1564 = vsel %vm1526, %v1519, 0
        %v1567 = vsel %vm1526, %v1521, 0
        %v1570 = vsel %vm1526, %v1523, 0
        %v1573 = vsel %vm1526, %v1525, 0
        %vm1575 = vcmask 1043456
        %v1577 = vsel %vm1575, %v1492, 0
        %v1580 = vsel %vm1575, %v1493, 0
        %1582 = vmatpush.bf16.msra.mxu0 0
        %1583 = vmatpush.bf16.msra.mxu0 0
        %1584 = vmatpush.bf16.msra.mxu0 0
        %1585 = vmatpush.bf16.msra.mxu0 0
        %1586 = vmatpush.bf16.msra.mxu0 0
        %1587 = vmatpush.bf16.msra.mxu0 0
        %1588 = vmatpush.bf16.msra.mxu0 0
        %1589 = vmatpush.bf16.msra.mxu0 %v1577
        %1590 = vmatmul.bf16.gmra.mxu0 %v1528
        %v1591 = vpop.f32.mrf.mxu0
        %v1592 = vadd.f32 0.0, %v1591
        %v1593 = vpop.f32.mrf.mxu0
        %v1594 = vadd.f32 0.0, %v1593
        %1595 = vmatmul.bf16.gmra.mxu0 %v1531
        %v1596 = vpop.f32.mrf.mxu0
        %v1597 = vadd.f32 0.0, %v1596
        %v1598 = vpop.f32.mrf.mxu0
        %v1599 = vadd.f32 0.0, %v1598
        %1600 = vmatmul.bf16.gmra.mxu0 %v1534
        %v1601 = vpop.f32.mrf.mxu0
        %v1602 = vadd.f32 0.0, %v1601
        %v1603 = vpop.f32.mrf.mxu0
        %v1604 = vadd.f32 0.0, %v1603
        %1605 = vmatmul.bf16.gmra.mxu0 %v1537
        %v1606 = vpop.f32.mrf.mxu0
        %v1607 = vadd.f32 0.0, %v1606
        %v1608 = vpop.f32.mrf.mxu0
        %v1609 = vadd.f32 0.0, %v1608
        %1610 = vmatmul.bf16.gmra.mxu0 %v1540
        %v1611 = vpop.f32.mrf.mxu0
        %v1612 = vadd.f32 0.0, %v1611
        %v1613 = vpop.f32.mrf.mxu0
        %v1614 = vadd.f32 0.0, %v1613
        %1615 = vmatmul.bf16.gmra.mxu0 %v1543
        %v1616 = vpop.f32.mrf.mxu0
        %v1617 = vadd.f32 0.0, %v1616
        %v1618 = vpop.f32.mrf.mxu0
        %v1619 = vadd.f32 0.0, %v1618
        %1620 = vmatmul.bf16.gmra.mxu0 %v1546
        %v1621 = vpop.f32.mrf.mxu0
        %v1622 = vadd.f32 0.0, %v1621
        %v1623 = vpop.f32.mrf.mxu0
        %v1624 = vadd.f32 0.0, %v1623
        %1625 = vmatmul.bf16.gmra.mxu0 %v1549
        %v1626 = vpop.f32.mrf.mxu0
        %v1627 = vadd.f32 0.0, %v1626
        %v1628 = vpop.f32.mrf.mxu0
        %v1629 = vadd.f32 0.0, %v1628
        %1630 = vmatmul.bf16.gmra.mxu0 %v1552
        %v1631 = vpop.f32.mrf.mxu0
        %v1632 = vadd.f32 0.0, %v1631
        %v1633 = vpop.f32.mrf.mxu0
        %v1634 = vadd.f32 0.0, %v1633
        %1635 = vmatmul.bf16.gmra.mxu0 %v1555
        %v1636 = vpop.f32.mrf.mxu0
        %v1637 = vadd.f32 0.0, %v1636
        %v1638 = vpop.f32.mrf.mxu0
        %v1639 = vadd.f32 0.0, %v1638
        %1640 = vmatmul.bf16.gmra.mxu0 %v1558
        %v1641 = vpop.f32.mrf.mxu0
        %v1642 = vadd.f32 0.0, %v1641
        %v1643 = vpop.f32.mrf.mxu0
        %v1644 = vadd.f32 0.0, %v1643
        %1645 = vmatmul.bf16.gmra.mxu0 %v1561
        %v1646 = vpop.f32.mrf.mxu0
        %v1647 = vadd.f32 0.0, %v1646
        %v1648 = vpop.f32.mrf.mxu0
        %v1649 = vadd.f32 0.0, %v1648
        %1650 = vmatmul.bf16.gmra.mxu0 %v1564
        %v1651 = vpop.f32.mrf.mxu0
        %v1652 = vadd.f32 0.0, %v1651
        %v1653 = vpop.f32.mrf.mxu0
        %v1654 = vadd.f32 0.0, %v1653
        %1655 = vmatmul.bf16.gmra.mxu0 %v1567
        %v1656 = vpop.f32.mrf.mxu0
        %v1657 = vadd.f32 0.0, %v1656
        %v1658 = vpop.f32.mrf.mxu0
        %v1659 = vadd.f32 0.0, %v1658
        %1660 = vmatmul.bf16.gmra.mxu0 %v1570
        %v1661 = vpop.f32.mrf.mxu0
        %v1662 = vadd.f32 0.0, %v1661
        %v1663 = vpop.f32.mrf.mxu0
        %v1664 = vadd.f32 0.0, %v1663
        %1665 = vmatmul.bf16.gmra.mxu0 %v1573
        %v1666 = vpop.f32.mrf.mxu0
        %v1667 = vadd.f32 0.0, %v1666
        %v1668 = vpop.f32.mrf.mxu0
        %v1669 = vadd.f32 0.0, %v1668
        %1670 = vdwg.mxu0
        %1671 = vmatpush.bf16.msra.mxu0 0
        %1672 = vmatpush.bf16.msra.mxu0 0
        %1673 = vmatpush.bf16.msra.mxu0 0
        %1674 = vmatpush.bf16.msra.mxu0 0
        %1675 = vmatpush.bf16.msra.mxu0 0
        %1676 = vmatpush.bf16.msra.mxu0 0
        %1677 = vmatpush.bf16.msra.mxu0 0
        %1678 = vmatpush.bf16.msra.mxu0 %v1580
        %1679 = vmatmul.bf16.gmra.mxu0 %v1528
        %v1680 = vpop.f32.mrf.mxu0
        %v1681 = vadd.f32 0.0, %v1680
        %v1682 = vpop.f32.mrf.mxu0
        %v1683 = vadd.f32 0.0, %v1682
        %1684 = vmatmul.bf16.gmra.mxu0 %v1531
        %v1685 = vpop.f32.mrf.mxu0
        %v1686 = vadd.f32 0.0, %v1685
        %v1687 = vpop.f32.mrf.mxu0
        %v1688 = vadd.f32 0.0, %v1687
        %1689 = vmatmul.bf16.gmra.mxu0 %v1534
        %v1690 = vpop.f32.mrf.mxu0
        %v1691 = vadd.f32 0.0, %v1690
        %v1692 = vpop.f32.mrf.mxu0
        %v1693 = vadd.f32 0.0, %v1692
        %1694 = vmatmul.bf16.gmra.mxu0 %v1537
        %v1695 = vpop.f32.mrf.mxu0
        %v1696 = vadd.f32 0.0, %v1695
        %v1697 = vpop.f32.mrf.mxu0
        %v1698 = vadd.f32 0.0, %v1697
        %1699 = vmatmul.bf16.gmra.mxu0 %v1540
        %v1700 = vpop.f32.mrf.mxu0
        %v1701 = vadd.f32 0.0, %v1700
        %v1702 = vpop.f32.mrf.mxu0
        %v1703 = vadd.f32 0.0, %v1702
        %1704 = vmatmul.bf16.gmra.mxu0 %v1543
        %v1705 = vpop.f32.mrf.mxu0
        %v1706 = vadd.f32 0.0, %v1705
        %v1707 = vpop.f32.mrf.mxu0
        %v1708 = vadd.f32 0.0, %v1707
        %1709 = vmatmul.bf16.gmra.mxu0 %v1546
        %v1710 = vpop.f32.mrf.mxu0
        %v1711 = vadd.f32 0.0, %v1710
        %v1712 = vpop.f32.mrf.mxu0
        %v1713 = vadd.f32 0.0, %v1712
        %1714 = vmatmul.bf16.gmra.mxu0 %v1549
        %v1715 = vpop.f32.mrf.mxu0
        %v1716 = vadd.f32 0.0, %v1715
        %v1717 = vpop.f32.mrf.mxu0
        %v1718 = vadd.f32 0.0, %v1717
        %1719 = vmatmul.bf16.gmra.mxu0 %v1552
        %v1720 = vpop.f32.mrf.mxu0
        %v1721 = vadd.f32 0.0, %v1720
        %v1722 = vpop.f32.mrf.mxu0
        %v1723 = vadd.f32 0.0, %v1722
        %1724 = vmatmul.bf16.gmra.mxu0 %v1555
        %v1725 = vpop.f32.mrf.mxu0
        %v1726 = vadd.f32 0.0, %v1725
        %v1727 = vpop.f32.mrf.mxu0
        %v1728 = vadd.f32 0.0, %v1727
        %1729 = vmatmul.bf16.gmra.mxu0 %v1558
        %v1730 = vpop.f32.mrf.mxu0
        %v1731 = vadd.f32 0.0, %v1730
        %v1732 = vpop.f32.mrf.mxu0
        %v1733 = vadd.f32 0.0, %v1732
        %1734 = vmatmul.bf16.gmra.mxu0 %v1561
        %v1735 = vpop.f32.mrf.mxu0
        %v1736 = vadd.f32 0.0, %v1735
        %v1737 = vpop.f32.mrf.mxu0
        %v1738 = vadd.f32 0.0, %v1737
        %1739 = vmatmul.bf16.gmra.mxu0 %v1564
        %v1740 = vpop.f32.mrf.mxu0
        %v1741 = vadd.f32 0.0, %v1740
        %v1742 = vpop.f32.mrf.mxu0
        %v1743 = vadd.f32 0.0, %v1742
        %1744 = vmatmul.bf16.gmra.mxu0 %v1567
        %v1745 = vpop.f32.mrf.mxu0
        %v1746 = vadd.f32 0.0, %v1745
        %v1747 = vpop.f32.mrf.mxu0
        %v1748 = vadd.f32 0.0, %v1747
        %1749 = vmatmul.bf16.gmra.mxu0 %v1570
        %v1750 = vpop.f32.mrf.mxu0
        %v1751 = vadd.f32 0.0, %v1750
        %v1752 = vpop.f32.mrf.mxu0
        %v1753 = vadd.f32 0.0, %v1752
        %1754 = vmatmul.bf16.gmra.mxu0 %v1573
        %v1755 = vpop.f32.mrf.mxu0
        %v1756 = vadd.f32 0.0, %v1755
        %v1757 = vpop.f32.mrf.mxu0
        %v1758 = vadd.f32 0.0, %v1757
        %1759 = vdwg.mxu0
        %v1760 = vmax.f32 %v1592, %v1597
        %v1761 = vmax.f32 %v1594, %v1599
        %v1762 = vmax.f32 %v1760, %v1602
        %v1763 = vmax.f32 %v1761, %v1604
        %v1764 = vmax.f32 %v1762, %v1607
        %v1765 = vmax.f32 %v1763, %v1609
        %v1766 = vmax.f32 %v1764, %v1612
        %v1767 = vmax.f32 %v1765, %v1614
        %v1768 = vmax.f32 %v1766, %v1617
        %v1769 = vmax.f32 %v1767, %v1619
        %v1770 = vmax.f32 %v1768, %v1622
        %v1771 = vmax.f32 %v1769, %v1624
        %v1772 = vmax.f32 %v1770, %v1627
        %v1773 = vmax.f32 %v1771, %v1629
        %v1774 = vmax.f32 %v1772, %v1632
        %v1775 = vmax.f32 %v1773, %v1634
        %v1776 = vmax.f32 %v1774, %v1637
        %v1777 = vmax.f32 %v1775, %v1639
        %v1778 = vmax.f32 %v1776, %v1642
        %v1779 = vmax.f32 %v1777, %v1644
        %v1780 = vmax.f32 %v1778, %v1647
        %v1781 = vmax.f32 %v1779, %v1649
        %v1782 = vmax.f32 %v1780, %v1652
        %v1783 = vmax.f32 %v1781, %v1654
        %v1784 = vmax.f32 %v1782, %v1657
        %v1785 = vmax.f32 %v1783, %v1659
        %v1786 = vmax.f32 %v1784, %v1662
        %v1787 = vmax.f32 %v1785, %v1664
        %v1788 = vmax.f32 %v1786, %v1667
        %v1789 = vmax.f32 %v1787, %v1669
        %v1790 = vmax.f32 %v1788, %v1789
        %v1791 = vrot.slane %v1790, 4
        %v1792 = vmax.f32 %v1790, %v1791
        %v1793 = vrot.slane %v1792, 2
        %v1794 = vmax.f32 %v1792, %v1793
        %v1795 = vrot.slane %v1794, 1
        %v1796 = vmax.f32 %v1794, %v1795
        %v1797 = vmax.f32 %v1681, %v1686
        %v1798 = vmax.f32 %v1683, %v1688
        %v1799 = vmax.f32 %v1797, %v1691
        %v1800 = vmax.f32 %v1798, %v1693
        %v1801 = vmax.f32 %v1799, %v1696
        %v1802 = vmax.f32 %v1800, %v1698
        %v1803 = vmax.f32 %v1801, %v1701
        %v1804 = vmax.f32 %v1802, %v1703
        %v1805 = vmax.f32 %v1803, %v1706
        %v1806 = vmax.f32 %v1804, %v1708
        %v1807 = vmax.f32 %v1805, %v1711
        %v1808 = vmax.f32 %v1806, %v1713
        %v1809 = vmax.f32 %v1807, %v1716
        %v1810 = vmax.f32 %v1808, %v1718
        %v1811 = vmax.f32 %v1809, %v1721
        %v1812 = vmax.f32 %v1810, %v1723
        %v1813 = vmax.f32 %v1811, %v1726
        %v1814 = vmax.f32 %v1812, %v1728
        %v1815 = vmax.f32 %v1813, %v1731
        %v1816 = vmax.f32 %v1814, %v1733
        %v1817 = vmax.f32 %v1815, %v1736
        %v1818 = vmax.f32 %v1816, %v1738
        %v1819 = vmax.f32 %v1817, %v1741
        %v1820 = vmax.f32 %v1818, %v1743
        %v1821 = vmax.f32 %v1819, %v1746
        %v1822 = vmax.f32 %v1820, %v1748
        %v1823 = vmax.f32 %v1821, %v1751
        %v1824 = vmax.f32 %v1822, %v1753
        %v1825 = vmax.f32 %v1823, %v1756
        %v1826 = vmax.f32 %v1824, %v1758
        %v1827 = vmax.f32 %v1825, %v1826
        %v1828 = vrot.slane %v1827, 4
        %v1829 = vmax.f32 %v1827, %v1828
        %v1830 = vrot.slane %v1829, 2
        %v1831 = vmax.f32 %v1829, %v1830
        %v1832 = vrot.slane %v1831, 1
        %v1833 = vmax.f32 %v1831, %v1832
        %v1834 = vsub.f32 -inf, %v1796
        %v1835 = vsub.f32 -inf, %v1833
        %v1836 = vmul.f32 %v1834, 1.442695
        %v1837 = vpow.pop %v1836
        %v1838 = vmul.f32 %v1835, 1.442695
        %v1839 = vpow.pop %v1838
        %v1840 = vsub.f32 %v1592, %v1796
        %v1841 = vsub.f32 %v1681, %v1833
        %v1842 = vsub.f32 %v1594, %v1796
        %v1843 = vsub.f32 %v1683, %v1833
        %v1844 = vsub.f32 %v1597, %v1796
        %v1845 = vsub.f32 %v1686, %v1833
        %v1846 = vsub.f32 %v1599, %v1796
        %v1847 = vsub.f32 %v1688, %v1833
        %v1848 = vsub.f32 %v1602, %v1796
        %v1849 = vsub.f32 %v1691, %v1833
        %v1850 = vsub.f32 %v1604, %v1796
        %v1851 = vsub.f32 %v1693, %v1833
        %v1852 = vsub.f32 %v1607, %v1796
        %v1853 = vsub.f32 %v1696, %v1833
        %v1854 = vsub.f32 %v1609, %v1796
        %v1855 = vsub.f32 %v1698, %v1833
        %v1856 = vsub.f32 %v1612, %v1796
        %v1857 = vsub.f32 %v1701, %v1833
        %v1858 = vsub.f32 %v1614, %v1796
        %v1859 = vsub.f32 %v1703, %v1833
        %v1860 = vsub.f32 %v1617, %v1796
        %v1861 = vsub.f32 %v1706, %v1833
        %v1862 = vsub.f32 %v1619, %v1796
        %v1863 = vsub.f32 %v1708, %v1833
        %v1864 = vsub.f32 %v1622, %v1796
        %v1865 = vsub.f32 %v1711, %v1833
        %v1866 = vsub.f32 %v1624, %v1796
        %v1867 = vsub.f32 %v1713, %v1833
        %v1868 = vsub.f32 %v1627, %v1796
        %v1869 = vsub.f32 %v1716, %v1833
        %v1870 = vsub.f32 %v1629, %v1796
        %v1871 = vsub.f32 %v1718, %v1833
        %v1872 = vsub.f32 %v1632, %v1796
        %v1873 = vsub.f32 %v1721, %v1833
        %v1874 = vsub.f32 %v1634, %v1796
        %v1875 = vsub.f32 %v1723, %v1833
        %v1876 = vsub.f32 %v1637, %v1796
        %v1877 = vsub.f32 %v1726, %v1833
        %v1878 = vsub.f32 %v1639, %v1796
        %v1879 = vsub.f32 %v1728, %v1833
        %v1880 = vsub.f32 %v1642, %v1796
        %v1881 = vsub.f32 %v1731, %v1833
        %v1882 = vsub.f32 %v1644, %v1796
        %v1883 = vsub.f32 %v1733, %v1833
        %v1884 = vsub.f32 %v1647, %v1796
        %v1885 = vsub.f32 %v1736, %v1833
        %v1886 = vsub.f32 %v1649, %v1796
        %v1887 = vsub.f32 %v1738, %v1833
        %v1888 = vsub.f32 %v1652, %v1796
        %v1889 = vsub.f32 %v1741, %v1833
        %v1890 = vsub.f32 %v1654, %v1796
        %v1891 = vsub.f32 %v1743, %v1833
        %v1892 = vsub.f32 %v1657, %v1796
        %v1893 = vsub.f32 %v1746, %v1833
        %v1894 = vsub.f32 %v1659, %v1796
        %v1895 = vsub.f32 %v1748, %v1833
        %v1896 = vsub.f32 %v1662, %v1796
        %v1897 = vsub.f32 %v1751, %v1833
        %v1898 = vsub.f32 %v1664, %v1796
        %v1899 = vsub.f32 %v1753, %v1833
        %v1900 = vsub.f32 %v1667, %v1796
        %v1901 = vsub.f32 %v1756, %v1833
        %v1902 = vsub.f32 %v1669, %v1796
        %v1903 = vsub.f32 %v1758, %v1833
        %v1904 = vmul.f32 %v1840, 1.442695
        %v1905 = vpow.pop %v1904
        %v1906 = vmul.f32 %v1841, 1.442695
        %v1907 = vpow.pop %v1906
        %v1908 = vmul.f32 %v1842, 1.442695
        %v1909 = vpow.pop %v1908
        %v1910 = vmul.f32 %v1843, 1.442695
        %v1911 = vpow.pop %v1910
        %v1912 = vmul.f32 %v1844, 1.442695
        %v1913 = vpow.pop %v1912
        %v1914 = vmul.f32 %v1845, 1.442695
        %v1915 = vpow.pop %v1914
        %v1916 = vmul.f32 %v1846, 1.442695
        %v1917 = vpow.pop %v1916
        %v1918 = vmul.f32 %v1847, 1.442695
        %v1919 = vpow.pop %v1918
        %v1920 = vmul.f32 %v1848, 1.442695
        %v1921 = vpow.pop %v1920
        %v1922 = vmul.f32 %v1849, 1.442695
        %v1923 = vpow.pop %v1922
        %v1924 = vmul.f32 %v1850, 1.442695
        %v1925 = vpow.pop %v1924
        %v1926 = vmul.f32 %v1851, 1.442695
        %v1927 = vpow.pop %v1926
        %v1928 = vmul.f32 %v1852, 1.442695
        %v1929 = vpow.pop %v1928
        %v1930 = vmul.f32 %v1853, 1.442695
        %v1931 = vpow.pop %v1930
        %v1932 = vmul.f32 %v1854, 1.442695
        %v1933 = vpow.pop %v1932
        %v1934 = vmul.f32 %v1855, 1.442695
        %v1935 = vpow.pop %v1934
        %v1936 = vmul.f32 %v1856, 1.442695
        %v1937 = vpow.pop %v1936
        %v1938 = vmul.f32 %v1857, 1.442695
        %v1939 = vpow.pop %v1938
        %v1940 = vmul.f32 %v1858, 1.442695
        %v1941 = vpow.pop %v1940
        %v1942 = vmul.f32 %v1859, 1.442695
        %v1943 = vpow.pop %v1942
        %v1944 = vmul.f32 %v1860, 1.442695
        %v1945 = vpow.pop %v1944
        %v1946 = vmul.f32 %v1861, 1.442695
        %v1947 = vpow.pop %v1946
        %v1948 = vmul.f32 %v1862, 1.442695
        %v1949 = vpow.pop %v1948
        %v1950 = vmul.f32 %v1863, 1.442695
        %v1951 = vpow.pop %v1950
        %v1952 = vmul.f32 %v1864, 1.442695
        %v1953 = vpow.pop %v1952
        %v1954 = vmul.f32 %v1865, 1.442695
        %v1955 = vpow.pop %v1954
        %v1956 = vmul.f32 %v1866, 1.442695
        %v1957 = vpow.pop %v1956
        %v1958 = vmul.f32 %v1867, 1.442695
        %v1959 = vpow.pop %v1958
        %v1960 = vmul.f32 %v1868, 1.442695
        %v1961 = vpow.pop %v1960
        %v1962 = vmul.f32 %v1869, 1.442695
        %v1963 = vpow.pop %v1962
        %v1964 = vmul.f32 %v1870, 1.442695
        %v1965 = vpow.pop %v1964
        %v1966 = vmul.f32 %v1871, 1.442695
        %v1967 = vpow.pop %v1966
        %v1968 = vmul.f32 %v1872, 1.442695
        %v1969 = vpow.pop %v1968
        %v1970 = vmul.f32 %v1873, 1.442695
        %v1971 = vpow.pop %v1970
        %v1972 = vmul.f32 %v1874, 1.442695
        %v1973 = vpow.pop %v1972
        %v1974 = vmul.f32 %v1875, 1.442695
        %v1975 = vpow.pop %v1974
        %v1976 = vmul.f32 %v1876, 1.442695
        %v1977 = vpow.pop %v1976
        %v1978 = vmul.f32 %v1877, 1.442695
        %v1979 = vpow.pop %v1978
        %v1980 = vmul.f32 %v1878, 1.442695
        %v1981 = vpow.pop %v1980
        %v1982 = vmul.f32 %v1879, 1.442695
        %v1983 = vpow.pop %v1982
        %v1984 = vmul.f32 %v1880, 1.442695
        %v1985 = vpow.pop %v1984
        %v1986 = vmul.f32 %v1881, 1.442695
        %v1987 = vpow.pop %v1986
        %v1988 = vmul.f32 %v1882, 1.442695
        %v1989 = vpow.pop %v1988
        %v1990 = vmul.f32 %v1883, 1.442695
        %v1991 = vpow.pop %v1990
        %v1992 = vmul.f32 %v1884, 1.442695
        %v1993 = vpow.pop %v1992
        %v1994 = vmul.f32 %v1885, 1.442695
        %v1995 = vpow.pop %v1994
        %v1996 = vmul.f32 %v1886, 1.442695
        %v1997 = vpow.pop %v1996
        %v1998 = vmul.f32 %v1887, 1.442695
        %v1999 = vpow.pop %v1998
        %v2000 = vmul.f32 %v1888, 1.442695
        %v2001 = vpow.pop %v2000
        %v2002 = vmul.f32 %v1889, 1.442695
        %v2003 = vpow.pop %v2002
        %v2004 = vmul.f32 %v1890, 1.442695
        %v2005 = vpow.pop %v2004
        %v2006 = vmul.f32 %v1891, 1.442695
        %v2007 = vpow.pop %v2006
        %v2008 = vmul.f32 %v1892, 1.442695
        %v2009 = vpow.pop %v2008
        %v2010 = vmul.f32 %v1893, 1.442695
        %v2011 = vpow.pop %v2010
        %v2012 = vmul.f32 %v1894, 1.442695
        %v2013 = vpow.pop %v2012
        %v2014 = vmul.f32 %v1895, 1.442695
        %v2015 = vpow.pop %v2014
        %v2016 = vmul.f32 %v1896, 1.442695
        %v2017 = vpow.pop %v2016
        %v2018 = vmul.f32 %v1897, 1.442695
        %v2019 = vpow.pop %v2018
        %v2020 = vmul.f32 %v1898, 1.442695
        %v2021 = vpow.pop %v2020
        %v2022 = vmul.f32 %v1899, 1.442695
        %v2023 = vpow.pop %v2022
        %v2024 = vmul.f32 %v1900, 1.442695
        %v2025 = vpow.pop %v2024
        %v2026 = vmul.f32 %v1901, 1.442695
        %v2027 = vpow.pop %v2026
        %v2028 = vmul.f32 %v1902, 1.442695
        %v2029 = vpow.pop %v2028
        %v2030 = vmul.f32 %v1903, 1.442695
        %v2031 = vpow.pop %v2030
        %v2032 = vmul.f32 %v1837, 0.0
        %v2033 = vmul.f32 %v1839, 0.0
        %v2034 = vadd.f32 %v1905, %v1909
        %v2035 = vadd.f32 %v2034, %v1913
        %v2036 = vadd.f32 %v2035, %v1917
        %v2037 = vadd.f32 %v2036, %v1921
        %v2038 = vadd.f32 %v2037, %v1925
        %v2039 = vadd.f32 %v2038, %v1929
        %v2040 = vadd.f32 %v2039, %v1933
        %v2041 = vadd.f32 %v2040, %v1937
        %v2042 = vadd.f32 %v2041, %v1941
        %v2043 = vadd.f32 %v2042, %v1945
        %v2044 = vadd.f32 %v2043, %v1949
        %v2045 = vadd.f32 %v2044, %v1953
        %v2046 = vadd.f32 %v2045, %v1957
        %v2047 = vadd.f32 %v2046, %v1961
        %v2048 = vadd.f32 %v2047, %v1965
        %v2049 = vadd.f32 %v2048, %v1969
        %v2050 = vadd.f32 %v2049, %v1973
        %v2051 = vadd.f32 %v2050, %v1977
        %v2052 = vadd.f32 %v2051, %v1981
        %v2053 = vadd.f32 %v2052, %v1985
        %v2054 = vadd.f32 %v2053, %v1989
        %v2055 = vadd.f32 %v2054, %v1993
        %v2056 = vadd.f32 %v2055, %v1997
        %v2057 = vadd.f32 %v2056, %v2001
        %v2058 = vadd.f32 %v2057, %v2005
        %v2059 = vadd.f32 %v2058, %v2009
        %v2060 = vadd.f32 %v2059, %v2013
        %v2061 = vadd.f32 %v2060, %v2017
        %v2062 = vadd.f32 %v2061, %v2021
        %v2063 = vadd.f32 %v2062, %v2025
        %v2064 = vadd.f32 %v2063, %v2029
        %v2065 = vrot.slane %v2064, 4
        %v2066 = vadd.f32 %v2064, %v2065
        %v2067 = vrot.slane %v2066, 2
        %v2068 = vadd.f32 %v2066, %v2067
        %v2069 = vrot.slane %v2068, 1
        %v2070 = vadd.f32 %v2068, %v2069
        %v2071 = vadd.f32 %v1907, %v1911
        %v2072 = vadd.f32 %v2071, %v1915
        %v2073 = vadd.f32 %v2072, %v1919
        %v2074 = vadd.f32 %v2073, %v1923
        %v2075 = vadd.f32 %v2074, %v1927
        %v2076 = vadd.f32 %v2075, %v1931
        %v2077 = vadd.f32 %v2076, %v1935
        %v2078 = vadd.f32 %v2077, %v1939
        %v2079 = vadd.f32 %v2078, %v1943
        %v2080 = vadd.f32 %v2079, %v1947
        %v2081 = vadd.f32 %v2080, %v1951
        %v2082 = vadd.f32 %v2081, %v1955
        %v2083 = vadd.f32 %v2082, %v1959
        %v2084 = vadd.f32 %v2083, %v1963
        %v2085 = vadd.f32 %v2084, %v1967
        %v2086 = vadd.f32 %v2085, %v1971
        %v2087 = vadd.f32 %v2086, %v1975
        %v2088 = vadd.f32 %v2087, %v1979
        %v2089 = vadd.f32 %v2088, %v1983
        %v2090 = vadd.f32 %v2089, %v1987
        %v2091 = vadd.f32 %v2090, %v1991
        %v2092 = vadd.f32 %v2091, %v1995
        %v2093 = vadd.f32 %v2092, %v1999
        %v2094 = vadd.f32 %v2093, %v2003
        %v2095 = vadd.f32 %v2094, %v2007
        %v2096 = vadd.f32 %v2095, %v2011
        %v2097 = vadd.f32 %v2096, %v2015
        %v2098 = vadd.f32 %v2097, %v2019
        %v2099 = vadd.f32 %v2098, %v2023
        %v2100 = vadd.f32 %v2099, %v2027
        %v2101 = vadd.f32 %v2100, %v2031
        %v2102 = vrot.slane %v2101, 4
        %v2103 = vadd.f32 %v2101, %v2102
        %v2104 = vrot.slane %v2103, 2
        %v2105 = vadd.f32 %v2103, %v2104
        %v2106 = vrot.slane %v2105, 1
        %v2107 = vadd.f32 %v2105, %v2106
        %v2108 = vadd.f32 %v2032, %v2070
        %v2109 = vadd.f32 %v2033, %v2107
        %v2110 = vpack.c.bf16 %v1909, %v1905
        %v2111 = vpack.c.bf16 %v1911, %v1907
        %v2112 = vpack.c.bf16 %v1917, %v1913
        %v2113 = vpack.c.bf16 %v1919, %v1915
        %v2114 = vpack.c.bf16 %v1925, %v1921
        %v2115 = vpack.c.bf16 %v1927, %v1923
        %v2116 = vpack.c.bf16 %v1933, %v1929
        %v2117 = vpack.c.bf16 %v1935, %v1931
        %v2118 = vpack.c.bf16 %v1941, %v1937
        %v2119 = vpack.c.bf16 %v1943, %v1939
        %v2120 = vpack.c.bf16 %v1949, %v1945
        %v2121 = vpack.c.bf16 %v1951, %v1947
        %v2122 = vpack.c.bf16 %v1957, %v1953
        %v2123 = vpack.c.bf16 %v1959, %v1955
        %v2124 = vpack.c.bf16 %v1965, %v1961
        %v2125 = vpack.c.bf16 %v1967, %v1963
        %v2126 = vpack.c.bf16 %v1973, %v1969
        %v2127 = vpack.c.bf16 %v1975, %v1971
        %v2128 = vpack.c.bf16 %v1981, %v1977
        %v2129 = vpack.c.bf16 %v1983, %v1979
        %v2130 = vpack.c.bf16 %v1989, %v1985
        %v2131 = vpack.c.bf16 %v1991, %v1987
        %v2132 = vpack.c.bf16 %v1997, %v1993
        %v2133 = vpack.c.bf16 %v1999, %v1995
        %v2134 = vpack.c.bf16 %v2005, %v2001
        %v2135 = vpack.c.bf16 %v2007, %v2003
        %v2136 = vpack.c.bf16 %v2013, %v2009
        %v2137 = vpack.c.bf16 %v2015, %v2011
        %v2138 = vpack.c.bf16 %v2021, %v2017
        %v2139 = vpack.c.bf16 %v2023, %v2019
        %v2140 = vpack.c.bf16 %v2029, %v2025
        %v2141 = vpack.c.bf16 %v2031, %v2027
        %2142 = vmatpush.bf16.msra.mxu0 %v2124
        %2143 = vmatpush.bf16.msra.mxu0 %v2122
        %2144 = vmatpush.bf16.msra.mxu0 %v2120
        %2145 = vmatpush.bf16.msra.mxu0 %v2118
        %2146 = vmatpush.bf16.msra.mxu0 %v2116
        %2147 = vmatpush.bf16.msra.mxu0 %v2114
        %2148 = vmatpush.bf16.msra.mxu0 %v2112
        %2149 = vmatpush.bf16.msra.mxu0 %v2110
        %2150 = vmatmul.bf16.gmra.mxu0 %v1500
        %v2151 = vpop.f32.mrf.mxu0
        %v2152 = vadd.f32 0.0, %v2151
        %v2153 = vpop.f32.mrf.mxu0
        %2154 = vdwg.mxu0
        %2155 = vmatpush.bf16.msra.mxu0 %v2140
        %2156 = vmatpush.bf16.msra.mxu0 %v2138
        %2157 = vmatpush.bf16.msra.mxu0 %v2136
        %2158 = vmatpush.bf16.msra.mxu0 %v2134
        %2159 = vmatpush.bf16.msra.mxu0 %v2132
        %2160 = vmatpush.bf16.msra.mxu0 %v2130
        %2161 = vmatpush.bf16.msra.mxu0 %v2128
        %2162 = vmatpush.bf16.msra.mxu0 %v2126
        %2163 = vmatmul.bf16.gmra.mxu0 %v1501
        %v2164 = vpop.f32.mrf.mxu0
        %v2165 = vadd.f32 %v2152, %v2164
        %v2166 = vpop.f32.mrf.mxu0
        %2167 = vdwg.mxu0
        %2168 = vmatpush.bf16.msra.mxu0 %v2125
        %2169 = vmatpush.bf16.msra.mxu0 %v2123
        %2170 = vmatpush.bf16.msra.mxu0 %v2121
        %2171 = vmatpush.bf16.msra.mxu0 %v2119
        %2172 = vmatpush.bf16.msra.mxu0 %v2117
        %2173 = vmatpush.bf16.msra.mxu0 %v2115
        %2174 = vmatpush.bf16.msra.mxu0 %v2113
        %2175 = vmatpush.bf16.msra.mxu0 %v2111
        %2176 = vmatmul.bf16.gmra.mxu0 %v1500
        %v2177 = vpop.f32.mrf.mxu0
        %v2178 = vadd.f32 0.0, %v2177
        %v2179 = vpop.f32.mrf.mxu0
        %2180 = vdwg.mxu0
        %2181 = vmatpush.bf16.msra.mxu0 %v2141
        %2182 = vmatpush.bf16.msra.mxu0 %v2139
        %2183 = vmatpush.bf16.msra.mxu0 %v2137
        %2184 = vmatpush.bf16.msra.mxu0 %v2135
        %2185 = vmatpush.bf16.msra.mxu0 %v2133
        %2186 = vmatpush.bf16.msra.mxu0 %v2131
        %2187 = vmatpush.bf16.msra.mxu0 %v2129
        %2188 = vmatpush.bf16.msra.mxu0 %v2127
        %2189 = vmatmul.bf16.gmra.mxu0 %v1501
        %v2190 = vpop.f32.mrf.mxu0
        %v2191 = vadd.f32 %v2178, %v2190
        %v2192 = vpop.f32.mrf.mxu0
        %2193 = vdwg.mxu0
        %v2194 = vadd.f32 %v2032, %v2165
        %v2195 = vadd.f32 %v2033, %v2191
        %v2196 = vrcp.pop %v2108
        %v2197 = vmul.f32 %v2108, %v2196
        %v2198 = vsub.f32 1.0, %v2197
        %v2199 = vmul.f32 %v2196, %v2198
        %v2200 = vadd.f32 %v2196, %v2199
        %vm2201 = vweird.f32 %v2108
        %vm2202 = vweird.f32 %v2196
        %vm2203 = vmor %vm2201, %vm2202
        %v2204 = vsel %vm2203, %v2196, %v2200
        %v2205 = vand.u32 2147483647, %v2108
        %vm2206 = vcmp.eq.f32.partialorder %v2205, 8.507059e+37
        %v2207 = vand.u32 %v2108, 2147483648
        %v2208 = vor.u32 1.1754944e-38, %v2207
        %v2209 = vsel %vm2206, %v2208, %v2204
        %v2210 = vrcp.pop %v2109
        %v2211 = vmul.f32 %v2109, %v2210
        %v2212 = vsub.f32 1.0, %v2211
        %v2213 = vmul.f32 %v2210, %v2212
        %v2214 = vadd.f32 %v2210, %v2213
        %vm2215 = vweird.f32 %v2109
        %vm2216 = vweird.f32 %v2210
        %vm2217 = vmor %vm2215, %vm2216
        %v2218 = vsel %vm2217, %v2210, %v2214
        %v2219 = vand.u32 2147483647, %v2109
        %vm2220 = vcmp.eq.f32.partialorder %v2219, 8.507059e+37
        %v2221 = vand.u32 %v2109, 2147483648
        %v2222 = vor.u32 1.1754944e-38, %v2221
        %v2223 = vsel %vm2220, %v2222, %v2218
        %v2224 = vmul.f32 %v2194, %v2209
        %v2225 = vmul.f32 %v2195, %v2223
        %v2226 = vpack.c.bf16 %v1486, %v1486
        %v2227 = vpack.c.bf16 %v1487, %v1487
        %v2228 = vld [vmem:[#allocation2 + $0x10] sm:$0xff]
        %v2229 = vld [vmem:[#allocation2 + $0x18] sm:$0xff]
        %v2230 = vpack.c.bf16 %v2228, %v2228
        %v2231 = vpack.c.bf16 %v2229, %v2229
        %v2232 = vld [vmem:[#allocation2 + $0x50] sm:$0xff]
        %v2233 = vld [vmem:[#allocation2 + $0x58] sm:$0xff]
        %v2234 = vpack.c.bf16 %v2232, %v2232
        %v2235 = vpack.c.bf16 %v2233, %v2233
        %2236 = vxpose.binary.xlu0.c.b16.start [1/16] %v2231, %v2230, 128
        %2237 = vxpose.binary.xlu0.c.b16.cont [2/16] 0, 0, 128
        %2238 = vxpose.binary.xlu0.c.b16.cont [3/16] 0, 0, 128
        %2239 = vxpose.binary.xlu0.c.b16.cont [4/16] 0, 0, 128
        %2240 = vxpose.binary.xlu0.c.b16.cont [5/16] 0, 0, 128
        %2241 = vxpose.binary.xlu0.c.b16.cont [6/16] 0, 0, 128
        %2242 = vxpose.binary.xlu0.c.b16.cont [7/16] 0, 0, 128
        %2243 = vxpose.binary.xlu0.c.b16.end [8/16] 0, 0, 128
        %v2244 = vpop.trf.xlu0
        %v2245 = vpop.trf.xlu0
        %v2246 = vpop.trf.xlu0
        %v2247 = vpop.trf.xlu0
        %v2248 = vpop.trf.xlu0
        %v2249 = vpop.trf.xlu0
        %v2250 = vpop.trf.xlu0
        %v2251 = vpop.trf.xlu0
        %v2252 = vpop.trf.xlu0
        %v2253 = vpop.trf.xlu0
        %v2254 = vpop.trf.xlu0
        %v2255 = vpop.trf.xlu0
        %v2256 = vpop.trf.xlu0
        %v2257 = vpop.trf.xlu0
        %v2258 = vpop.trf.xlu0
        %v2259 = vpop.trf.xlu0
        %v2261 = vsel %vm1526, %v2244, 0
        %v2264 = vsel %vm1526, %v2246, 0
        %v2267 = vsel %vm1526, %v2248, 0
        %v2270 = vsel %vm1526, %v2250, 0
        %v2273 = vsel %vm1526, %v2252, 0
        %v2276 = vsel %vm1526, %v2254, 0
        %v2279 = vsel %vm1526, %v2256, 0
        %v2282 = vsel %vm1526, %v2258, 0
        %v2285 = vsel %vm1526, %v2245, 0
        %v2288 = vsel %vm1526, %v2247, 0
        %v2291 = vsel %vm1526, %v2249, 0
        %v2294 = vsel %vm1526, %v2251, 0
        %v2297 = vsel %vm1526, %v2253, 0
        %v2300 = vsel %vm1526, %v2255, 0
        %v2303 = vsel %vm1526, %v2257, 0
        %v2306 = vsel %vm1526, %v2259, 0
        %v2309 = vsel %vm1575, %v2226, 0
        %v2312 = vsel %vm1575, %v2227, 0
        %2314 = vmatpush.bf16.msra.mxu0 0
        %2315 = vmatpush.bf16.msra.mxu0 0
        %2316 = vmatpush.bf16.msra.mxu0 0
        %2317 = vmatpush.bf16.msra.mxu0 0
        %2318 = vmatpush.bf16.msra.mxu0 0
        %2319 = vmatpush.bf16.msra.mxu0 0
        %2320 = vmatpush.bf16.msra.mxu0 0
        %2321 = vmatpush.bf16.msra.mxu0 %v2309
        %2322 = vmatmul.bf16.gmra.mxu0 %v2261
        %v2323 = vpop.f32.mrf.mxu0
        %v2324 = vadd.f32 0.0, %v2323
        %v2325 = vpop.f32.mrf.mxu0
        %v2326 = vadd.f32 0.0, %v2325
        %2327 = vmatmul.bf16.gmra.mxu0 %v2264
        %v2328 = vpop.f32.mrf.mxu0
        %v2329 = vadd.f32 0.0, %v2328
        %v2330 = vpop.f32.mrf.mxu0
        %v2331 = vadd.f32 0.0, %v2330
        %2332 = vmatmul.bf16.gmra.mxu0 %v2267
        %v2333 = vpop.f32.mrf.mxu0
        %v2334 = vadd.f32 0.0, %v2333
        %v2335 = vpop.f32.mrf.mxu0
        %v2336 = vadd.f32 0.0, %v2335
        %2337 = vmatmul.bf16.gmra.mxu0 %v2270
        %v2338 = vpop.f32.mrf.mxu0
        %v2339 = vadd.f32 0.0, %v2338
        %v2340 = vpop.f32.mrf.mxu0
        %v2341 = vadd.f32 0.0, %v2340
        %2342 = vmatmul.bf16.gmra.mxu0 %v2273
        %v2343 = vpop.f32.mrf.mxu0
        %v2344 = vadd.f32 0.0, %v2343
        %v2345 = vpop.f32.mrf.mxu0
        %v2346 = vadd.f32 0.0, %v2345
        %2347 = vmatmul.bf16.gmra.mxu0 %v2276
        %v2348 = vpop.f32.mrf.mxu0
        %v2349 = vadd.f32 0.0, %v2348
        %v2350 = vpop.f32.mrf.mxu0
        %v2351 = vadd.f32 0.0, %v2350
        %2352 = vmatmul.bf16.gmra.mxu0 %v2279
        %v2353 = vpop.f32.mrf.mxu0
        %v2354 = vadd.f32 0.0, %v2353
        %v2355 = vpop.f32.mrf.mxu0
        %v2356 = vadd.f32 0.0, %v2355
        %2357 = vmatmul.bf16.gmra.mxu0 %v2282
        %v2358 = vpop.f32.mrf.mxu0
        %v2359 = vadd.f32 0.0, %v2358
        %v2360 = vpop.f32.mrf.mxu0
        %v2361 = vadd.f32 0.0, %v2360
        %2362 = vmatmul.bf16.gmra.mxu0 %v2285
        %v2363 = vpop.f32.mrf.mxu0
        %v2364 = vadd.f32 0.0, %v2363
        %v2365 = vpop.f32.mrf.mxu0
        %v2366 = vadd.f32 0.0, %v2365
        %2367 = vmatmul.bf16.gmra.mxu0 %v2288
        %v2368 = vpop.f32.mrf.mxu0
        %v2369 = vadd.f32 0.0, %v2368
        %v2370 = vpop.f32.mrf.mxu0
        %v2371 = vadd.f32 0.0, %v2370
        %2372 = vmatmul.bf16.gmra.mxu0 %v2291
        %v2373 = vpop.f32.mrf.mxu0
        %v2374 = vadd.f32 0.0, %v2373
        %v2375 = vpop.f32.mrf.mxu0
        %v2376 = vadd.f32 0.0, %v2375
        %2377 = vmatmul.bf16.gmra.mxu0 %v2294
        %v2378 = vpop.f32.mrf.mxu0
        %v2379 = vadd.f32 0.0, %v2378
        %v2380 = vpop.f32.mrf.mxu0
        %v2381 = vadd.f32 0.0, %v2380
        %2382 = vmatmul.bf16.gmra.mxu0 %v2297
        %v2383 = vpop.f32.mrf.mxu0
        %v2384 = vadd.f32 0.0, %v2383
        %v2385 = vpop.f32.mrf.mxu0
        %v2386 = vadd.f32 0.0, %v2385
        %2387 = vmatmul.bf16.gmra.mxu0 %v2300
        %v2388 = vpop.f32.mrf.mxu0
        %v2389 = vadd.f32 0.0, %v2388
        %v2390 = vpop.f32.mrf.mxu0
        %v2391 = vadd.f32 0.0, %v2390
        %2392 = vmatmul.bf16.gmra.mxu0 %v2303
        %v2393 = vpop.f32.mrf.mxu0
        %v2394 = vadd.f32 0.0, %v2393
        %v2395 = vpop.f32.mrf.mxu0
        %v2396 = vadd.f32 0.0, %v2395
        %2397 = vmatmul.bf16.gmra.mxu0 %v2306
        %v2398 = vpop.f32.mrf.mxu0
        %v2399 = vadd.f32 0.0, %v2398
        %v2400 = vpop.f32.mrf.mxu0
        %v2401 = vadd.f32 0.0, %v2400
        %2402 = vdwg.mxu0
        %2403 = vmatpush.bf16.msra.mxu0 0
        %2404 = vmatpush.bf16.msra.mxu0 0
        %2405 = vmatpush.bf16.msra.mxu0 0
        %2406 = vmatpush.bf16.msra.mxu0 0
        %2407 = vmatpush.bf16.msra.mxu0 0
        %2408 = vmatpush.bf16.msra.mxu0 0
        %2409 = vmatpush.bf16.msra.mxu0 0
        %2410 = vmatpush.bf16.msra.mxu0 %v2312
        %2411 = vmatmul.bf16.gmra.mxu0 %v2261
        %v2412 = vpop.f32.mrf.mxu0
        %v2413 = vadd.f32 0.0, %v2412
        %v2414 = vpop.f32.mrf.mxu0
        %v2415 = vadd.f32 0.0, %v2414
        %2416 = vmatmul.bf16.gmra.mxu0 %v2264
        %v2417 = vpop.f32.mrf.mxu0
        %v2418 = vadd.f32 0.0, %v2417
        %v2419 = vpop.f32.mrf.mxu0
        %v2420 = vadd.f32 0.0, %v2419
        %2421 = vmatmul.bf16.gmra.mxu0 %v2267
        %v2422 = vpop.f32.mrf.mxu0
        %v2423 = vadd.f32 0.0, %v2422
        %v2424 = vpop.f32.mrf.mxu0
        %v2425 = vadd.f32 0.0, %v2424
        %2426 = vmatmul.bf16.gmra.mxu0 %v2270
        %v2427 = vpop.f32.mrf.mxu0
        %v2428 = vadd.f32 0.0, %v2427
        %v2429 = vpop.f32.mrf.mxu0
        %v2430 = vadd.f32 0.0, %v2429
        %2431 = vmatmul.bf16.gmra.mxu0 %v2273
        %v2432 = vpop.f32.mrf.mxu0
        %v2433 = vadd.f32 0.0, %v2432
        %v2434 = vpop.f32.mrf.mxu0
        %v2435 = vadd.f32 0.0, %v2434
        %2436 = vmatmul.bf16.gmra.mxu0 %v2276
        %v2437 = vpop.f32.mrf.mxu0
        %v2438 = vadd.f32 0.0, %v2437
        %v2439 = vpop.f32.mrf.mxu0
        %v2440 = vadd.f32 0.0, %v2439
        %2441 = vmatmul.bf16.gmra.mxu0 %v2279
        %v2442 = vpop.f32.mrf.mxu0
        %v2443 = vadd.f32 0.0, %v2442
        %v2444 = vpop.f32.mrf.mxu0
        %v2445 = vadd.f32 0.0, %v2444
        %2446 = vmatmul.bf16.gmra.mxu0 %v2282
        %v2447 = vpop.f32.mrf.mxu0
        %v2448 = vadd.f32 0.0, %v2447
        %v2449 = vpop.f32.mrf.mxu0
        %v2450 = vadd.f32 0.0, %v2449
        %2451 = vmatmul.bf16.gmra.mxu0 %v2285
        %v2452 = vpop.f32.mrf.mxu0
        %v2453 = vadd.f32 0.0, %v2452
        %v2454 = vpop.f32.mrf.mxu0
        %v2455 = vadd.f32 0.0, %v2454
        %2456 = vmatmul.bf16.gmra.mxu0 %v2288
        %v2457 = vpop.f32.mrf.mxu0
        %v2458 = vadd.f32 0.0, %v2457
        %v2459 = vpop.f32.mrf.mxu0
        %v2460 = vadd.f32 0.0, %v2459
        %2461 = vmatmul.bf16.gmra.mxu0 %v2291
        %v2462 = vpop.f32.mrf.mxu0
        %v2463 = vadd.f32 0.0, %v2462
        %v2464 = vpop.f32.mrf.mxu0
        %v2465 = vadd.f32 0.0, %v2464
        %2466 = vmatmul.bf16.gmra.mxu0 %v2294
        %v2467 = vpop.f32.mrf.mxu0
        %v2468 = vadd.f32 0.0, %v2467
        %v2469 = vpop.f32.mrf.mxu0
        %v2470 = vadd.f32 0.0, %v2469
        %2471 = vmatmul.bf16.gmra.mxu0 %v2297
        %v2472 = vpop.f32.mrf.mxu0
        %v2473 = vadd.f32 0.0, %v2472
        %v2474 = vpop.f32.mrf.mxu0
        %v2475 = vadd.f32 0.0, %v2474
        %2476 = vmatmul.bf16.gmra.mxu0 %v2300
        %v2477 = vpop.f32.mrf.mxu0
        %v2478 = vadd.f32 0.0, %v2477
        %v2479 = vpop.f32.mrf.mxu0
        %v2480 = vadd.f32 0.0, %v2479
        %2481 = vmatmul.bf16.gmra.mxu0 %v2303
        %v2482 = vpop.f32.mrf.mxu0
        %v2483 = vadd.f32 0.0, %v2482
        %v2484 = vpop.f32.mrf.mxu0
        %v2485 = vadd.f32 0.0, %v2484
        %2486 = vmatmul.bf16.gmra.mxu0 %v2306
        %v2487 = vpop.f32.mrf.mxu0
        %v2488 = vadd.f32 0.0, %v2487
        %v2489 = vpop.f32.mrf.mxu0
        %v2490 = vadd.f32 0.0, %v2489
        %2491 = vdwg.mxu0
        %v2492 = vmax.f32 %v2324, %v2329
        %v2493 = vmax.f32 %v2326, %v2331
        %v2494 = vmax.f32 %v2492, %v2334
        %v2495 = vmax.f32 %v2493, %v2336
        %v2496 = vmax.f32 %v2494, %v2339
        %v2497 = vmax.f32 %v2495, %v2341
        %v2498 = vmax.f32 %v2496, %v2344
        %v2499 = vmax.f32 %v2497, %v2346
        %v2500 = vmax.f32 %v2498, %v2349
        %v2501 = vmax.f32 %v2499, %v2351
        %v2502 = vmax.f32 %v2500, %v2354
        %v2503 = vmax.f32 %v2501, %v2356
        %v2504 = vmax.f32 %v2502, %v2359
        %v2505 = vmax.f32 %v2503, %v2361
        %v2506 = vmax.f32 %v2504, %v2364
        %v2507 = vmax.f32 %v2505, %v2366
        %v2508 = vmax.f32 %v2506, %v2369
        %v2509 = vmax.f32 %v2507, %v2371
        %v2510 = vmax.f32 %v2508, %v2374
        %v2511 = vmax.f32 %v2509, %v2376
        %v2512 = vmax.f32 %v2510, %v2379
        %v2513 = vmax.f32 %v2511, %v2381
        %v2514 = vmax.f32 %v2512, %v2384
        %v2515 = vmax.f32 %v2513, %v2386
        %v2516 = vmax.f32 %v2514, %v2389
        %v2517 = vmax.f32 %v2515, %v2391
        %v2518 = vmax.f32 %v2516, %v2394
        %v2519 = vmax.f32 %v2517, %v2396
        %v2520 = vmax.f32 %v2518, %v2399
        %v2521 = vmax.f32 %v2519, %v2401
        %v2522 = vmax.f32 %v2520, %v2521
        %v2523 = vrot.slane %v2522, 4
        %v2524 = vmax.f32 %v2522, %v2523
        %v2525 = vrot.slane %v2524, 2
        %v2526 = vmax.f32 %v2524, %v2525
        %v2527 = vrot.slane %v2526, 1
        %v2528 = vmax.f32 %v2526, %v2527
        %v2529 = vmax.f32 %v2413, %v2418
        %v2530 = vmax.f32 %v2415, %v2420
        %v2531 = vmax.f32 %v2529, %v2423
        %v2532 = vmax.f32 %v2530, %v2425
        %v2533 = vmax.f32 %v2531, %v2428
        %v2534 = vmax.f32 %v2532, %v2430
        %v2535 = vmax.f32 %v2533, %v2433
        %v2536 = vmax.f32 %v2534, %v2435
        %v2537 = vmax.f32 %v2535, %v2438
        %v2538 = vmax.f32 %v2536, %v2440
        %v2539 = vmax.f32 %v2537, %v2443
        %v2540 = vmax.f32 %v2538, %v2445
        %v2541 = vmax.f32 %v2539, %v2448
        %v2542 = vmax.f32 %v2540, %v2450
        %v2543 = vmax.f32 %v2541, %v2453
        %v2544 = vmax.f32 %v2542, %v2455
        %v2545 = vmax.f32 %v2543, %v2458
        %v2546 = vmax.f32 %v2544, %v2460
        %v2547 = vmax.f32 %v2545, %v2463
        %v2548 = vmax.f32 %v2546, %v2465
        %v2549 = vmax.f32 %v2547, %v2468
        %v2550 = vmax.f32 %v2548, %v2470
        %v2551 = vmax.f32 %v2549, %v2473
        %v2552 = vmax.f32 %v2550, %v2475
        %v2553 = vmax.f32 %v2551, %v2478
        %v2554 = vmax.f32 %v2552, %v2480
        %v2555 = vmax.f32 %v2553, %v2483
        %v2556 = vmax.f32 %v2554, %v2485
        %v2557 = vmax.f32 %v2555, %v2488
        %v2558 = vmax.f32 %v2556, %v2490
        %v2559 = vmax.f32 %v2557, %v2558
        %v2560 = vrot.slane %v2559, 4
        %v2561 = vmax.f32 %v2559, %v2560
        %v2562 = vrot.slane %v2561, 2
        %v2563 = vmax.f32 %v2561, %v2562
        %v2564 = vrot.slane %v2563, 1
        %v2565 = vmax.f32 %v2563, %v2564
        %v2566 = vsub.f32 -inf, %v2528
        %v2567 = vsub.f32 -inf, %v2565
        %v2568 = vmul.f32 %v2566, 1.442695
        %v2569 = vpow.pop %v2568
        %v2570 = vmul.f32 %v2567, 1.442695
        %v2571 = vpow.pop %v2570
        %v2572 = vsub.f32 %v2324, %v2528
        %v2573 = vsub.f32 %v2413, %v2565
        %v2574 = vsub.f32 %v2326, %v2528
        %v2575 = vsub.f32 %v2415, %v2565
        %v2576 = vsub.f32 %v2329, %v2528
        %v2577 = vsub.f32 %v2418, %v2565
        %v2578 = vsub.f32 %v2331, %v2528
        %v2579 = vsub.f32 %v2420, %v2565
        %v2580 = vsub.f32 %v2334, %v2528
        %v2581 = vsub.f32 %v2423, %v2565
        %v2582 = vsub.f32 %v2336, %v2528
        %v2583 = vsub.f32 %v2425, %v2565
        %v2584 = vsub.f32 %v2339, %v2528
        %v2585 = vsub.f32 %v2428, %v2565
        %v2586 = vsub.f32 %v2341, %v2528
        %v2587 = vsub.f32 %v2430, %v2565
        %v2588 = vsub.f32 %v2344, %v2528
        %v2589 = vsub.f32 %v2433, %v2565
        %v2590 = vsub.f32 %v2346, %v2528
        %v2591 = vsub.f32 %v2435, %v2565
        %v2592 = vsub.f32 %v2349, %v2528
        %v2593 = vsub.f32 %v2438, %v2565
        %v2594 = vsub.f32 %v2351, %v2528
        %v2595 = vsub.f32 %v2440, %v2565
        %v2596 = vsub.f32 %v2354, %v2528
        %v2597 = vsub.f32 %v2443, %v2565
        %v2598 = vsub.f32 %v2356, %v2528
        %v2599 = vsub.f32 %v2445, %v2565
        %v2600 = vsub.f32 %v2359, %v2528
        %v2601 = vsub.f32 %v2448, %v2565
        %v2602 = vsub.f32 %v2361, %v2528
        %v2603 = vsub.f32 %v2450, %v2565
        %v2604 = vsub.f32 %v2364, %v2528
        %v2605 = vsub.f32 %v2453, %v2565
        %v2606 = vsub.f32 %v2366, %v2528
        %v2607 = vsub.f32 %v2455, %v2565
        %v2608 = vsub.f32 %v2369, %v2528
        %v2609 = vsub.f32 %v2458, %v2565
        %v2610 = vsub.f32 %v2371, %v2528
        %v2611 = vsub.f32 %v2460, %v2565
        %v2612 = vsub.f32 %v2374, %v2528
        %v2613 = vsub.f32 %v2463, %v2565
        %v2614 = vsub.f32 %v2376, %v2528
        %v2615 = vsub.f32 %v2465, %v2565
        %v2616 = vsub.f32 %v2379, %v2528
        %v2617 = vsub.f32 %v2468, %v2565
        %v2618 = vsub.f32 %v2381, %v2528
        %v2619 = vsub.f32 %v2470, %v2565
        %v2620 = vsub.f32 %v2384, %v2528
        %v2621 = vsub.f32 %v2473, %v2565
        %v2622 = vsub.f32 %v2386, %v2528
        %v2623 = vsub.f32 %v2475, %v2565
        %v2624 = vsub.f32 %v2389, %v2528
        %v2625 = vsub.f32 %v2478, %v2565
        %v2626 = vsub.f32 %v2391, %v2528
        %v2627 = vsub.f32 %v2480, %v2565
        %v2628 = vsub.f32 %v2394, %v2528
        %v2629 = vsub.f32 %v2483, %v2565
        %v2630 = vsub.f32 %v2396, %v2528
        %v2631 = vsub.f32 %v2485, %v2565
        %v2632 = vsub.f32 %v2399, %v2528
        %v2633 = vsub.f32 %v2488, %v2565
        %v2634 = vsub.f32 %v2401, %v2528
        %v2635 = vsub.f32 %v2490, %v2565
        %v2636 = vmul.f32 %v2572, 1.442695
        %v2637 = vpow.pop %v2636
        %v2638 = vmul.f32 %v2573, 1.442695
        %v2639 = vpow.pop %v2638
        %v2640 = vmul.f32 %v2574, 1.442695
        %v2641 = vpow.pop %v2640
        %v2642 = vmul.f32 %v2575, 1.442695
        %v2643 = vpow.pop %v2642
        %v2644 = vmul.f32 %v2576, 1.442695
        %v2645 = vpow.pop %v2644
        %v2646 = vmul.f32 %v2577, 1.442695
        %v2647 = vpow.pop %v2646
        %v2648 = vmul.f32 %v2578, 1.442695
        %v2649 = vpow.pop %v2648
        %v2650 = vmul.f32 %v2579, 1.442695
        %v2651 = vpow.pop %v2650
        %v2652 = vmul.f32 %v2580, 1.442695
        %v2653 = vpow.pop %v2652
        %v2654 = vmul.f32 %v2581, 1.442695
        %v2655 = vpow.pop %v2654
        %v2656 = vmul.f32 %v2582, 1.442695
        %v2657 = vpow.pop %v2656
        %v2658 = vmul.f32 %v2583, 1.442695
        %v2659 = vpow.pop %v2658
        %v2660 = vmul.f32 %v2584, 1.442695
        %v2661 = vpow.pop %v2660
        %v2662 = vmul.f32 %v2585, 1.442695
        %v2663 = vpow.pop %v2662
        %v2664 = vmul.f32 %v2586, 1.442695
        %v2665 = vpow.pop %v2664
        %v2666 = vmul.f32 %v2587, 1.442695
        %v2667 = vpow.pop %v2666
        %v2668 = vmul.f32 %v2588, 1.442695
        %v2669 = vpow.pop %v2668
        %v2670 = vmul.f32 %v2589, 1.442695
        %v2671 = vpow.pop %v2670
        %v2672 = vmul.f32 %v2590, 1.442695
        %v2673 = vpow.pop %v2672
        %v2674 = vmul.f32 %v2591, 1.442695
        %v2675 = vpow.pop %v2674
        %v2676 = vmul.f32 %v2592, 1.442695
        %v2677 = vpow.pop %v2676
        %v2678 = vmul.f32 %v2593, 1.442695
        %v2679 = vpow.pop %v2678
        %v2680 = vmul.f32 %v2594, 1.442695
        %v2681 = vpow.pop %v2680
        %v2682 = vmul.f32 %v2595, 1.442695
        %v2683 = vpow.pop %v2682
        %v2684 = vmul.f32 %v2596, 1.442695
        %v2685 = vpow.pop %v2684
        %v2686 = vmul.f32 %v2597, 1.442695
        %v2687 = vpow.pop %v2686
        %v2688 = vmul.f32 %v2598, 1.442695
        %v2689 = vpow.pop %v2688
        %v2690 = vmul.f32 %v2599, 1.442695
        %v2691 = vpow.pop %v2690
        %v2692 = vmul.f32 %v2600, 1.442695
        %v2693 = vpow.pop %v2692
        %v2694 = vmul.f32 %v2601, 1.442695
        %v2695 = vpow.pop %v2694
        %v2696 = vmul.f32 %v2602, 1.442695
        %v2697 = vpow.pop %v2696
        %v2698 = vmul.f32 %v2603, 1.442695
        %v2699 = vpow.pop %v2698
        %v2700 = vmul.f32 %v2604, 1.442695
        %v2701 = vpow.pop %v2700
        %v2702 = vmul.f32 %v2605, 1.442695
        %v2703 = vpow.pop %v2702
        %v2704 = vmul.f32 %v2606, 1.442695
        %v2705 = vpow.pop %v2704
        %v2706 = vmul.f32 %v2607, 1.442695
        %v2707 = vpow.pop %v2706
        %v2708 = vmul.f32 %v2608, 1.442695
        %v2709 = vpow.pop %v2708
        %v2710 = vmul.f32 %v2609, 1.442695
        %v2711 = vpow.pop %v2710
        %v2712 = vmul.f32 %v2610, 1.442695
        %v2713 = vpow.pop %v2712
        %v2714 = vmul.f32 %v2611, 1.442695
        %v2715 = vpow.pop %v2714
        %v2716 = vmul.f32 %v2612, 1.442695
        %v2717 = vpow.pop %v2716
        %v2718 = vmul.f32 %v2613, 1.442695
        %v2719 = vpow.pop %v2718
        %v2720 = vmul.f32 %v2614, 1.442695
        %v2721 = vpow.pop %v2720
        %v2722 = vmul.f32 %v2615, 1.442695
        %v2723 = vpow.pop %v2722
        %v2724 = vmul.f32 %v2616, 1.442695
        %v2725 = vpow.pop %v2724
        %v2726 = vmul.f32 %v2617, 1.442695
        %v2727 = vpow.pop %v2726
        %v2728 = vmul.f32 %v2618, 1.442695
        %v2729 = vpow.pop %v2728
        %v2730 = vmul.f32 %v2619, 1.442695
        %v2731 = vpow.pop %v2730
        %v2732 = vmul.f32 %v2620, 1.442695
        %v2733 = vpow.pop %v2732
        %v2734 = vmul.f32 %v2621, 1.442695
        %v2735 = vpow.pop %v2734
        %v2736 = vmul.f32 %v2622, 1.442695
        %v2737 = vpow.pop %v2736
        %v2738 = vmul.f32 %v2623, 1.442695
        %v2739 = vpow.pop %v2738
        %v2740 = vmul.f32 %v2624, 1.442695
        %v2741 = vpow.pop %v2740
        %v2742 = vmul.f32 %v2625, 1.442695
        %v2743 = vpow.pop %v2742
        %v2744 = vmul.f32 %v2626, 1.442695
        %v2745 = vpow.pop %v2744
        %v2746 = vmul.f32 %v2627, 1.442695
        %v2747 = vpow.pop %v2746
        %v2748 = vmul.f32 %v2628, 1.442695
        %v2749 = vpow.pop %v2748
        %v2750 = vmul.f32 %v2629, 1.442695
        %v2751 = vpow.pop %v2750
        %v2752 = vmul.f32 %v2630, 1.442695
        %v2753 = vpow.pop %v2752
        %v2754 = vmul.f32 %v2631, 1.442695
        %v2755 = vpow.pop %v2754
        %v2756 = vmul.f32 %v2632, 1.442695
        %v2757 = vpow.pop %v2756
        %v2758 = vmul.f32 %v2633, 1.442695
        %v2759 = vpow.pop %v2758
        %v2760 = vmul.f32 %v2634, 1.442695
        %v2761 = vpow.pop %v2760
        %v2762 = vmul.f32 %v2635, 1.442695
        %v2763 = vpow.pop %v2762
        %v2764 = vmul.f32 %v2569, 0.0
        %v2765 = vmul.f32 %v2571, 0.0
        %v2766 = vadd.f32 %v2637, %v2641
        %v2767 = vadd.f32 %v2766, %v2645
        %v2768 = vadd.f32 %v2767, %v2649
        %v2769 = vadd.f32 %v2768, %v2653
        %v2770 = vadd.f32 %v2769, %v2657
        %v2771 = vadd.f32 %v2770, %v2661
        %v2772 = vadd.f32 %v2771, %v2665
        %v2773 = vadd.f32 %v2772, %v2669
        %v2774 = vadd.f32 %v2773, %v2673
        %v2775 = vadd.f32 %v2774, %v2677
        %v2776 = vadd.f32 %v2775, %v2681
        %v2777 = vadd.f32 %v2776, %v2685
        %v2778 = vadd.f32 %v2777, %v2689
        %v2779 = vadd.f32 %v2778, %v2693
        %v2780 = vadd.f32 %v2779, %v2697
        %v2781 = vadd.f32 %v2780, %v2701
        %v2782 = vadd.f32 %v2781, %v2705
        %v2783 = vadd.f32 %v2782, %v2709
        %v2784 = vadd.f32 %v2783, %v2713
        %v2785 = vadd.f32 %v2784, %v2717
        %v2786 = vadd.f32 %v2785, %v2721
        %v2787 = vadd.f32 %v2786, %v2725
        %v2788 = vadd.f32 %v2787, %v2729
        %v2789 = vadd.f32 %v2788, %v2733
        %v2790 = vadd.f32 %v2789, %v2737
        %v2791 = vadd.f32 %v2790, %v2741
        %v2792 = vadd.f32 %v2791, %v2745
        %v2793 = vadd.f32 %v2792, %v2749
        %v2794 = vadd.f32 %v2793, %v2753
        %v2795 = vadd.f32 %v2794, %v2757
        %v2796 = vadd.f32 %v2795, %v2761
        %v2797 = vrot.slane %v2796, 4
        %v2798 = vadd.f32 %v2796, %v2797
        %v2799 = vrot.slane %v2798, 2
        %v2800 = vadd.f32 %v2798, %v2799
        %v2801 = vrot.slane %v2800, 1
        %v2802 = vadd.f32 %v2800, %v2801
        %v2803 = vadd.f32 %v2639, %v2643
        %v2804 = vadd.f32 %v2803, %v2647
        %v2805 = vadd.f32 %v2804, %v2651
        %v2806 = vadd.f32 %v2805, %v2655
        %v2807 = vadd.f32 %v2806, %v2659
        %v2808 = vadd.f32 %v2807, %v2663
        %v2809 = vadd.f32 %v2808, %v2667
        %v2810 = vadd.f32 %v2809, %v2671
        %v2811 = vadd.f32 %v2810, %v2675
        %v2812 = vadd.f32 %v2811, %v2679
        %v2813 = vadd.f32 %v2812, %v2683
        %v2814 = vadd.f32 %v2813, %v2687
        %v2815 = vadd.f32 %v2814, %v2691
        %v2816 = vadd.f32 %v2815, %v2695
        %v2817 = vadd.f32 %v2816, %v2699
        %v2818 = vadd.f32 %v2817, %v2703
        %v2819 = vadd.f32 %v2818, %v2707
        %v2820 = vadd.f32 %v2819, %v2711
        %v2821 = vadd.f32 %v2820, %v2715
        %v2822 = vadd.f32 %v2821, %v2719
        %v2823 = vadd.f32 %v2822, %v2723
        %v2824 = vadd.f32 %v2823, %v2727
        %v2825 = vadd.f32 %v2824, %v2731
        %v2826 = vadd.f32 %v2825, %v2735
        %v2827 = vadd.f32 %v2826, %v2739
        %v2828 = vadd.f32 %v2827, %v2743
        %v2829 = vadd.f32 %v2828, %v2747
        %v2830 = vadd.f32 %v2829, %v2751
        %v2831 = vadd.f32 %v2830, %v2755
        %v2832 = vadd.f32 %v2831, %v2759
        %v2833 = vadd.f32 %v2832, %v2763
        %v2834 = vrot.slane %v2833, 4
        %v2835 = vadd.f32 %v2833, %v2834
        %v2836 = vrot.slane %v2835, 2
        %v2837 = vadd.f32 %v2835, %v2836
        %v2838 = vrot.slane %v2837, 1
        %v2839 = vadd.f32 %v2837, %v2838
        %v2840 = vadd.f32 %v2764, %v2802
        %v2841 = vadd.f32 %v2765, %v2839
        %v2842 = vpack.c.bf16 %v2641, %v2637
        %v2843 = vpack.c.bf16 %v2643, %v2639
        %v2844 = vpack.c.bf16 %v2649, %v2645
        %v2845 = vpack.c.bf16 %v2651, %v2647
        %v2846 = vpack.c.bf16 %v2657, %v2653
        %v2847 = vpack.c.bf16 %v2659, %v2655
        %v2848 = vpack.c.bf16 %v2665, %v2661
        %v2849 = vpack.c.bf16 %v2667, %v2663
        %v2850 = vpack.c.bf16 %v2673, %v2669
        %v2851 = vpack.c.bf16 %v2675, %v2671
        %v2852 = vpack.c.bf16 %v2681, %v2677
        %v2853 = vpack.c.bf16 %v2683, %v2679
        %v2854 = vpack.c.bf16 %v2689, %v2685
        %v2855 = vpack.c.bf16 %v2691, %v2687
        %v2856 = vpack.c.bf16 %v2697, %v2693
        %v2857 = vpack.c.bf16 %v2699, %v2695
        %v2858 = vpack.c.bf16 %v2705, %v2701
        %v2859 = vpack.c.bf16 %v2707, %v2703
        %v2860 = vpack.c.bf16 %v2713, %v2709
        %v2861 = vpack.c.bf16 %v2715, %v2711
        %v2862 = vpack.c.bf16 %v2721, %v2717
        %v2863 = vpack.c.bf16 %v2723, %v2719
        %v2864 = vpack.c.bf16 %v2729, %v2725
        %v2865 = vpack.c.bf16 %v2731, %v2727
        %v2866 = vpack.c.bf16 %v2737, %v2733
        %v2867 = vpack.c.bf16 %v2739, %v2735
        %v2868 = vpack.c.bf16 %v2745, %v2741
        %v2869 = vpack.c.bf16 %v2747, %v2743
        %v2870 = vpack.c.bf16 %v2753, %v2749
        %v2871 = vpack.c.bf16 %v2755, %v2751
        %v2872 = vpack.c.bf16 %v2761, %v2757
        %v2873 = vpack.c.bf16 %v2763, %v2759
        %2874 = vmatpush.bf16.msra.mxu0 %v2856
        %2875 = vmatpush.bf16.msra.mxu0 %v2854
        %2876 = vmatpush.bf16.msra.mxu0 %v2852
        %2877 = vmatpush.bf16.msra.mxu0 %v2850
        %2878 = vmatpush.bf16.msra.mxu0 %v2848
        %2879 = vmatpush.bf16.msra.mxu0 %v2846
        %2880 = vmatpush.bf16.msra.mxu0 %v2844
        %2881 = vmatpush.bf16.msra.mxu0 %v2842
        %2882 = vmatmul.bf16.gmra.mxu0 %v2234
        %v2883 = vpop.f32.mrf.mxu0
        %v2884 = vadd.f32 0.0, %v2883
        %v2885 = vpop.f32.mrf.mxu0
        %2886 = vdwg.mxu0
        %2887 = vmatpush.bf16.msra.mxu0 %v2872
        %2888 = vmatpush.bf16.msra.mxu0 %v2870
        %2889 = vmatpush.bf16.msra.mxu0 %v2868
        %2890 = vmatpush.bf16.msra.mxu0 %v2866
        %2891 = vmatpush.bf16.msra.mxu0 %v2864
        %2892 = vmatpush.bf16.msra.mxu0 %v2862
        %2893 = vmatpush.bf16.msra.mxu0 %v2860
        %2894 = vmatpush.bf16.msra.mxu0 %v2858
        %2895 = vmatmul.bf16.gmra.mxu0 %v2235
        %v2896 = vpop.f32.mrf.mxu0
        %v2897 = vadd.f32 %v2884, %v2896
        %v2898 = vpop.f32.mrf.mxu0
        %2899 = vdwg.mxu0
        %2900 = vmatpush.bf16.msra.mxu0 %v2857
        %2901 = vmatpush.bf16.msra.mxu0 %v2855
        %2902 = vmatpush.bf16.msra.mxu0 %v2853
        %2903 = vmatpush.bf16.msra.mxu0 %v2851
        %2904 = vmatpush.bf16.msra.mxu0 %v2849
        %2905 = vmatpush.bf16.msra.mxu0 %v2847
        %2906 = vmatpush.bf16.msra.mxu0 %v2845
        %2907 = vmatpush.bf16.msra.mxu0 %v2843
        %2908 = vmatmul.bf16.gmra.mxu0 %v2234
        %v2909 = vpop.f32.mrf.mxu0
        %v2910 = vadd.f32 0.0, %v2909
        %v2911 = vpop.f32.mrf.mxu0
        %2912 = vdwg.mxu0
        %2913 = vmatpush.bf16.msra.mxu0 %v2873
        %2914 = vmatpush.bf16.msra.mxu0 %v2871
        %2915 = vmatpush.bf16.msra.mxu0 %v2869
        %2916 = vmatpush.bf16.msra.mxu0 %v2867
        %2917 = vmatpush.bf16.msra.mxu0 %v2865
        %2918 = vmatpush.bf16.msra.mxu0 %v2863
        %2919 = vmatpush.bf16.msra.mxu0 %v2861
        %2920 = vmatpush.bf16.msra.mxu0 %v2859
        %2921 = vmatmul.bf16.gmra.mxu0 %v2235
        %v2922 = vpop.f32.mrf.mxu0
        %v2923 = vadd.f32 %v2910, %v2922
        %v2924 = vpop.f32.mrf.mxu0
        %2925 = vdwg.mxu0
        %v2926 = vadd.f32 %v2764, %v2897
        %v2927 = vadd.f32 %v2765, %v2923
        %v2928 = vrcp.pop %v2840
        %v2929 = vmul.f32 %v2840, %v2928
        %v2930 = vsub.f32 1.0, %v2929
        %v2931 = vmul.f32 %v2928, %v2930
        %v2932 = vadd.f32 %v2928, %v2931
        %vm2933 = vweird.f32 %v2840
        %vm2934 = vweird.f32 %v2928
        %vm2935 = vmor %vm2933, %vm2934
        %v2936 = vsel %vm2935, %v2928, %v2932
        %v2937 = vand.u32 2147483647, %v2840
        %vm2938 = vcmp.eq.f32.partialorder %v2937, 8.507059e+37
        %v2939 = vand.u32 %v2840, 2147483648
        %v2940 = vor.u32 1.1754944e-38, %v2939
        %v2941 = vsel %vm2938, %v2940, %v2936
        %v2942 = vrcp.pop %v2841
        %v2943 = vmul.f32 %v2841, %v2942
        %v2944 = vsub.f32 1.0, %v2943
        %v2945 = vmul.f32 %v2942, %v2944
        %v2946 = vadd.f32 %v2942, %v2945
        %vm2947 = vweird.f32 %v2841
        %vm2948 = vweird.f32 %v2942
        %vm2949 = vmor %vm2947, %vm2948
        %v2950 = vsel %vm2949, %v2942, %v2946
        %v2951 = vand.u32 2147483647, %v2841
        %vm2952 = vcmp.eq.f32.partialorder %v2951, 8.507059e+37
        %v2953 = vand.u32 %v2841, 2147483648
        %v2954 = vor.u32 1.1754944e-38, %v2953
        %v2955 = vsel %vm2952, %v2954, %v2950
        %v2956 = vmul.f32 %v2926, %v2941
        %v2957 = vmul.f32 %v2927, %v2955
        %v2958 = vpack.c.bf16 %v1488, %v1488
        %v2959 = vpack.c.bf16 %v1489, %v1489
        %v2960 = vld [vmem:[#allocation2 + $0x20] sm:$0xff]
        %v2961 = vld [vmem:[#allocation2 + $0x28] sm:$0xff]
        %v2962 = vpack.c.bf16 %v2960, %v2960
        %v2963 = vpack.c.bf16 %v2961, %v2961
        %v2964 = vld [vmem:[#allocation2 + $0x60] sm:$0xff]
        %v2965 = vld [vmem:[#allocation2 + $0x68] sm:$0xff]
        %v2966 = vpack.c.bf16 %v2964, %v2964
        %v2967 = vpack.c.bf16 %v2965, %v2965
        %2968 = vxpose.binary.xlu0.c.b16.start [1/16] %v2963, %v2962, 128
        %2969 = vxpose.binary.xlu0.c.b16.cont [2/16] 0, 0, 128
        %2970 = vxpose.binary.xlu0.c.b16.cont [3/16] 0, 0, 128
        %2971 = vxpose.binary.xlu0.c.b16.cont [4/16] 0, 0, 128
        %2972 = vxpose.binary.xlu0.c.b16.cont [5/16] 0, 0, 128
        %2973 = vxpose.binary.xlu0.c.b16.cont [6/16] 0, 0, 128
        %2974 = vxpose.binary.xlu0.c.b16.cont [7/16] 0, 0, 128
        %2975 = vxpose.binary.xlu0.c.b16.end [8/16] 0, 0, 128
        %v2976 = vpop.trf.xlu0
        %v2977 = vpop.trf.xlu0
        %v2978 = vpop.trf.xlu0
        %v2979 = vpop.trf.xlu0
        %v2980 = vpop.trf.xlu0
        %v2981 = vpop.trf.xlu0
        %v2982 = vpop.trf.xlu0
        %v2983 = vpop.trf.xlu0
        %v2984 = vpop.trf.xlu0
        %v2985 = vpop.trf.xlu0
        %v2986 = vpop.trf.xlu0
        %v2987 = vpop.trf.xlu0
        %v2988 = vpop.trf.xlu0
        %v2989 = vpop.trf.xlu0
        %v2990 = vpop.trf.xlu0
        %v2991 = vpop.trf.xlu0
        %v2993 = vsel %vm1526, %v2976, 0
        %v2996 = vsel %vm1526, %v2978, 0
        %v2999 = vsel %vm1526, %v2980, 0
        %v3002 = vsel %vm1526, %v2982, 0
        %v3005 = vsel %vm1526, %v2984, 0
        %v3008 = vsel %vm1526, %v2986, 0
        %v3011 = vsel %vm1526, %v2988, 0
        %v3014 = vsel %vm1526, %v2990, 0
        %v3017 = vsel %vm1526, %v2977, 0
        %v3020 = vsel %vm1526, %v2979, 0
        %v3023 = vsel %vm1526, %v2981, 0
        %v3026 = vsel %vm1526, %v2983, 0
        %v3029 = vsel %vm1526, %v2985, 0
        %v3032 = vsel %vm1526, %v2987, 0
        %v3035 = vsel %vm1526, %v2989, 0
        %v3038 = vsel %vm1526, %v2991, 0
        %v3041 = vsel %vm1575, %v2958, 0
        %v3044 = vsel %vm1575, %v2959, 0
        %3046 = vmatpush.bf16.msra.mxu0 0
        %3047 = vmatpush.bf16.msra.mxu0 0
        %3048 = vmatpush.bf16.msra.mxu0 0
        %3049 = vmatpush.bf16.msra.mxu0 0
        %3050 = vmatpush.bf16.msra.mxu0 0
        %3051 = vmatpush.bf16.msra.mxu0 0
        %3052 = vmatpush.bf16.msra.mxu0 0
        %3053 = vmatpush.bf16.msra.mxu0 %v3041
        %3054 = vmatmul.bf16.gmra.mxu0 %v2993
        %v3055 = vpop.f32.mrf.mxu0
        %v3056 = vadd.f32 0.0, %v3055
        %v3057 = vpop.f32.mrf.mxu0
        %v3058 = vadd.f32 0.0, %v3057
        %3059 = vmatmul.bf16.gmra.mxu0 %v2996
        %v3060 = vpop.f32.mrf.mxu0
        %v3061 = vadd.f32 0.0, %v3060
        %v3062 = vpop.f32.mrf.mxu0
        %v3063 = vadd.f32 0.0, %v3062
        %3064 = vmatmul.bf16.gmra.mxu0 %v2999
        %v3065 = vpop.f32.mrf.mxu0
        %v3066 = vadd.f32 0.0, %v3065
        %v3067 = vpop.f32.mrf.mxu0
        %v3068 = vadd.f32 0.0, %v3067
        %3069 = vmatmul.bf16.gmra.mxu0 %v3002
        %v3070 = vpop.f32.mrf.mxu0
        %v3071 = vadd.f32 0.0, %v3070
        %v3072 = vpop.f32.mrf.mxu0
        %v3073 = vadd.f32 0.0, %v3072
        %3074 = vmatmul.bf16.gmra.mxu0 %v3005
        %v3075 = vpop.f32.mrf.mxu0
        %v3076 = vadd.f32 0.0, %v3075
        %v3077 = vpop.f32.mrf.mxu0
        %v3078 = vadd.f32 0.0, %v3077
        %3079 = vmatmul.bf16.gmra.mxu0 %v3008
        %v3080 = vpop.f32.mrf.mxu0
        %v3081 = vadd.f32 0.0, %v3080
        %v3082 = vpop.f32.mrf.mxu0
        %v3083 = vadd.f32 0.0, %v3082
        %3084 = vmatmul.bf16.gmra.mxu0 %v3011
        %v3085 = vpop.f32.mrf.mxu0
        %v3086 = vadd.f32 0.0, %v3085
        %v3087 = vpop.f32.mrf.mxu0
        %v3088 = vadd.f32 0.0, %v3087
        %3089 = vmatmul.bf16.gmra.mxu0 %v3014
        %v3090 = vpop.f32.mrf.mxu0
        %v3091 = vadd.f32 0.0, %v3090
        %v3092 = vpop.f32.mrf.mxu0
        %v3093 = vadd.f32 0.0, %v3092
        %3094 = vmatmul.bf16.gmra.mxu0 %v3017
        %v3095 = vpop.f32.mrf.mxu0
        %v3096 = vadd.f32 0.0, %v3095
        %v3097 = vpop.f32.mrf.mxu0
        %v3098 = vadd.f32 0.0, %v3097
        %3099 = vmatmul.bf16.gmra.mxu0 %v3020
        %v3100 = vpop.f32.mrf.mxu0
        %v3101 = vadd.f32 0.0, %v3100
        %v3102 = vpop.f32.mrf.mxu0
        %v3103 = vadd.f32 0.0, %v3102
        %3104 = vmatmul.bf16.gmra.mxu0 %v3023
        %v3105 = vpop.f32.mrf.mxu0
        %v3106 = vadd.f32 0.0, %v3105
        %v3107 = vpop.f32.mrf.mxu0
        %v3108 = vadd.f32 0.0, %v3107
        %3109 = vmatmul.bf16.gmra.mxu0 %v3026
        %v3110 = vpop.f32.mrf.mxu0
        %v3111 = vadd.f32 0.0, %v3110
        %v3112 = vpop.f32.mrf.mxu0
        %v3113 = vadd.f32 0.0, %v3112
        %3114 = vmatmul.bf16.gmra.mxu0 %v3029
        %v3115 = vpop.f32.mrf.mxu0
        %v3116 = vadd.f32 0.0, %v3115
        %v3117 = vpop.f32.mrf.mxu0
        %v3118 = vadd.f32 0.0, %v3117
        %3119 = vmatmul.bf16.gmra.mxu0 %v3032
        %v3120 = vpop.f32.mrf.mxu0
        %v3121 = vadd.f32 0.0, %v3120
        %v3122 = vpop.f32.mrf.mxu0
        %v3123 = vadd.f32 0.0, %v3122
        %3124 = vmatmul.bf16.gmra.mxu0 %v3035
        %v3125 = vpop.f32.mrf.mxu0
        %v3126 = vadd.f32 0.0, %v3125
        %v3127 = vpop.f32.mrf.mxu0
        %v3128 = vadd.f32 0.0, %v3127
        %3129 = vmatmul.bf16.gmra.mxu0 %v3038
        %v3130 = vpop.f32.mrf.mxu0
        %v3131 = vadd.f32 0.0, %v3130
        %v3132 = vpop.f32.mrf.mxu0
        %v3133 = vadd.f32 0.0, %v3132
        %3134 = vdwg.mxu0
        %3135 = vmatpush.bf16.msra.mxu0 0
        %3136 = vmatpush.bf16.msra.mxu0 0
        %3137 = vmatpush.bf16.msra.mxu0 0
        %3138 = vmatpush.bf16.msra.mxu0 0
        %3139 = vmatpush.bf16.msra.mxu0 0
        %3140 = vmatpush.bf16.msra.mxu0 0
        %3141 = vmatpush.bf16.msra.mxu0 0
        %3142 = vmatpush.bf16.msra.mxu0 %v3044
        %3143 = vmatmul.bf16.gmra.mxu0 %v2993
        %v3144 = vpop.f32.mrf.mxu0
        %v3145 = vadd.f32 0.0, %v3144
        %v3146 = vpop.f32.mrf.mxu0
        %v3147 = vadd.f32 0.0, %v3146
        %3148 = vmatmul.bf16.gmra.mxu0 %v2996
        %v3149 = vpop.f32.mrf.mxu0
        %v3150 = vadd.f32 0.0, %v3149
        %v3151 = vpop.f32.mrf.mxu0
        %v3152 = vadd.f32 0.0, %v3151
        %3153 = vmatmul.bf16.gmra.mxu0 %v2999
        %v3154 = vpop.f32.mrf.mxu0
        %v3155 = vadd.f32 0.0, %v3154
        %v3156 = vpop.f32.mrf.mxu0
        %v3157 = vadd.f32 0.0, %v3156
        %3158 = vmatmul.bf16.gmra.mxu0 %v3002
        %v3159 = vpop.f32.mrf.mxu0
        %v3160 = vadd.f32 0.0, %v3159
        %v3161 = vpop.f32.mrf.mxu0
        %v3162 = vadd.f32 0.0, %v3161
        %3163 = vmatmul.bf16.gmra.mxu0 %v3005
        %v3164 = vpop.f32.mrf.mxu0
        %v3165 = vadd.f32 0.0, %v3164
        %v3166 = vpop.f32.mrf.mxu0
        %v3167 = vadd.f32 0.0, %v3166
        %3168 = vmatmul.bf16.gmra.mxu0 %v3008
        %v3169 = vpop.f32.mrf.mxu0
        %v3170 = vadd.f32 0.0, %v3169
        %v3171 = vpop.f32.mrf.mxu0
        %v3172 = vadd.f32 0.0, %v3171
        %3173 = vmatmul.bf16.gmra.mxu0 %v3011
        %v3174 = vpop.f32.mrf.mxu0
        %v3175 = vadd.f32 0.0, %v3174
        %v3176 = vpop.f32.mrf.mxu0
        %v3177 = vadd.f32 0.0, %v3176
        %3178 = vmatmul.bf16.gmra.mxu0 %v3014
        %v3179 = vpop.f32.mrf.mxu0
        %v3180 = vadd.f32 0.0, %v3179
        %v3181 = vpop.f32.mrf.mxu0
        %v3182 = vadd.f32 0.0, %v3181
        %3183 = vmatmul.bf16.gmra.mxu0 %v3017
        %v3184 = vpop.f32.mrf.mxu0
        %v3185 = vadd.f32 0.0, %v3184
        %v3186 = vpop.f32.mrf.mxu0
        %v3187 = vadd.f32 0.0, %v3186
        %3188 = vmatmul.bf16.gmra.mxu0 %v3020
        %v3189 = vpop.f32.mrf.mxu0
        %v3190 = vadd.f32 0.0, %v3189
        %v3191 = vpop.f32.mrf.mxu0
        %v3192 = vadd.f32 0.0, %v3191
        %3193 = vmatmul.bf16.gmra.mxu0 %v3023
        %v3194 = vpop.f32.mrf.mxu0
        %v3195 = vadd.f32 0.0, %v3194
        %v3196 = vpop.f32.mrf.mxu0
        %v3197 = vadd.f32 0.0, %v3196
        %3198 = vmatmul.bf16.gmra.mxu0 %v3026
        %v3199 = vpop.f32.mrf.mxu0
        %v3200 = vadd.f32 0.0, %v3199
        %v3201 = vpop.f32.mrf.mxu0
        %v3202 = vadd.f32 0.0, %v3201
        %3203 = vmatmul.bf16.gmra.mxu0 %v3029
        %v3204 = vpop.f32.mrf.mxu0
        %v3205 = vadd.f32 0.0, %v3204
        %v3206 = vpop.f32.mrf.mxu0
        %v3207 = vadd.f32 0.0, %v3206
        %3208 = vmatmul.bf16.gmra.mxu0 %v3032
        %v3209 = vpop.f32.mrf.mxu0
        %v3210 = vadd.f32 0.0, %v3209
        %v3211 = vpop.f32.mrf.mxu0
        %v3212 = vadd.f32 0.0, %v3211
        %3213 = vmatmul.bf16.gmra.mxu0 %v3035
        %v3214 = vpop.f32.mrf.mxu0
        %v3215 = vadd.f32 0.0, %v3214
        %v3216 = vpop.f32.mrf.mxu0
        %v3217 = vadd.f32 0.0, %v3216
        %3218 = vmatmul.bf16.gmra.mxu0 %v3038
        %v3219 = vpop.f32.mrf.mxu0
        %v3220 = vadd.f32 0.0, %v3219
        %v3221 = vpop.f32.mrf.mxu0
        %v3222 = vadd.f32 0.0, %v3221
        %3223 = vdwg.mxu0
        %v3224 = vmax.f32 %v3056, %v3061
        %v3225 = vmax.f32 %v3058, %v3063
        %v3226 = vmax.f32 %v3224, %v3066
        %v3227 = vmax.f32 %v3225, %v3068
        %v3228 = vmax.f32 %v3226, %v3071
        %v3229 = vmax.f32 %v3227, %v3073
        %v3230 = vmax.f32 %v3228, %v3076
        %v3231 = vmax.f32 %v3229, %v3078
        %v3232 = vmax.f32 %v3230, %v3081
        %v3233 = vmax.f32 %v3231, %v3083
        %v3234 = vmax.f32 %v3232, %v3086
        %v3235 = vmax.f32 %v3233, %v3088
        %v3236 = vmax.f32 %v3234, %v3091
        %v3237 = vmax.f32 %v3235, %v3093
        %v3238 = vmax.f32 %v3236, %v3096
        %v3239 = vmax.f32 %v3237, %v3098
        %v3240 = vmax.f32 %v3238, %v3101
        %v3241 = vmax.f32 %v3239, %v3103
        %v3242 = vmax.f32 %v3240, %v3106
        %v3243 = vmax.f32 %v3241, %v3108
        %v3244 = vmax.f32 %v3242, %v3111
        %v3245 = vmax.f32 %v3243, %v3113
        %v3246 = vmax.f32 %v3244, %v3116
        %v3247 = vmax.f32 %v3245, %v3118
        %v3248 = vmax.f32 %v3246, %v3121
        %v3249 = vmax.f32 %v3247, %v3123
        %v3250 = vmax.f32 %v3248, %v3126
        %v3251 = vmax.f32 %v3249, %v3128
        %v3252 = vmax.f32 %v3250, %v3131
        %v3253 = vmax.f32 %v3251, %v3133
        %v3254 = vmax.f32 %v3252, %v3253
        %v3255 = vrot.slane %v3254, 4
        %v3256 = vmax.f32 %v3254, %v3255
        %v3257 = vrot.slane %v3256, 2
        %v3258 = vmax.f32 %v3256, %v3257
        %v3259 = vrot.slane %v3258, 1
        %v3260 = vmax.f32 %v3258, %v3259
        %v3261 = vmax.f32 %v3145, %v3150
        %v3262 = vmax.f32 %v3147, %v3152
        %v3263 = vmax.f32 %v3261, %v3155
        %v3264 = vmax.f32 %v3262, %v3157
        %v3265 = vmax.f32 %v3263, %v3160
        %v3266 = vmax.f32 %v3264, %v3162
        %v3267 = vmax.f32 %v3265, %v3165
        %v3268 = vmax.f32 %v3266, %v3167
        %v3269 = vmax.f32 %v3267, %v3170
        %v3270 = vmax.f32 %v3268, %v3172
        %v3271 = vmax.f32 %v3269, %v3175
        %v3272 = vmax.f32 %v3270, %v3177
        %v3273 = vmax.f32 %v3271, %v3180
        %v3274 = vmax.f32 %v3272, %v3182
        %v3275 = vmax.f32 %v3273, %v3185
        %v3276 = vmax.f32 %v3274, %v3187
        %v3277 = vmax.f32 %v3275, %v3190
        %v3278 = vmax.f32 %v3276, %v3192
        %v3279 = vmax.f32 %v3277, %v3195
        %v3280 = vmax.f32 %v3278, %v3197
        %v3281 = vmax.f32 %v3279, %v3200
        %v3282 = vmax.f32 %v3280, %v3202
        %v3283 = vmax.f32 %v3281, %v3205
        %v3284 = vmax.f32 %v3282, %v3207
        %v3285 = vmax.f32 %v3283, %v3210
        %v3286 = vmax.f32 %v3284, %v3212
        %v3287 = vmax.f32 %v3285, %v3215
        %v3288 = vmax.f32 %v3286, %v3217
        %v3289 = vmax.f32 %v3287, %v3220
        %v3290 = vmax.f32 %v3288, %v3222
        %v3291 = vmax.f32 %v3289, %v3290
        %v3292 = vrot.slane %v3291, 4
        %v3293 = vmax.f32 %v3291, %v3292
        %v3294 = vrot.slane %v3293, 2
        %v3295 = vmax.f32 %v3293, %v3294
        %v3296 = vrot.slane %v3295, 1
        %v3297 = vmax.f32 %v3295, %v3296
        %v3298 = vsub.f32 -inf, %v3260
        %v3299 = vsub.f32 -inf, %v3297
        %v3300 = vmul.f32 %v3298, 1.442695
        %v3301 = vpow.pop %v3300
        %v3302 = vmul.f32 %v3299, 1.442695
        %v3303 = vpow.pop %v3302
        %v3304 = vsub.f32 %v3056, %v3260
        %v3305 = vsub.f32 %v3145, %v3297
        %v3306 = vsub.f32 %v3058, %v3260
        %v3307 = vsub.f32 %v3147, %v3297
        %v3308 = vsub.f32 %v3061, %v3260
        %v3309 = vsub.f32 %v3150, %v3297
        %v3310 = vsub.f32 %v3063, %v3260
        %v3311 = vsub.f32 %v3152, %v3297
        %v3312 = vsub.f32 %v3066, %v3260
        %v3313 = vsub.f32 %v3155, %v3297
        %v3314 = vsub.f32 %v3068, %v3260
        %v3315 = vsub.f32 %v3157, %v3297
        %v3316 = vsub.f32 %v3071, %v3260
        %v3317 = vsub.f32 %v3160, %v3297
        %v3318 = vsub.f32 %v3073, %v3260
        %v3319 = vsub.f32 %v3162, %v3297
        %v3320 = vsub.f32 %v3076, %v3260
        %v3321 = vsub.f32 %v3165, %v3297
        %v3322 = vsub.f32 %v3078, %v3260
        %v3323 = vsub.f32 %v3167, %v3297
        %v3324 = vsub.f32 %v3081, %v3260
        %v3325 = vsub.f32 %v3170, %v3297
        %v3326 = vsub.f32 %v3083, %v3260
        %v3327 = vsub.f32 %v3172, %v3297
        %v3328 = vsub.f32 %v3086, %v3260
        %v3329 = vsub.f32 %v3175, %v3297
        %v3330 = vsub.f32 %v3088, %v3260
        %v3331 = vsub.f32 %v3177, %v3297
        %v3332 = vsub.f32 %v3091, %v3260
        %v3333 = vsub.f32 %v3180, %v3297
        %v3334 = vsub.f32 %v3093, %v3260
        %v3335 = vsub.f32 %v3182, %v3297
        %v3336 = vsub.f32 %v3096, %v3260
        %v3337 = vsub.f32 %v3185, %v3297
        %v3338 = vsub.f32 %v3098, %v3260
        %v3339 = vsub.f32 %v3187, %v3297
        %v3340 = vsub.f32 %v3101, %v3260
        %v3341 = vsub.f32 %v3190, %v3297
        %v3342 = vsub.f32 %v3103, %v3260
        %v3343 = vsub.f32 %v3192, %v3297
        %v3344 = vsub.f32 %v3106, %v3260
        %v3345 = vsub.f32 %v3195, %v3297
        %v3346 = vsub.f32 %v3108, %v3260
        %v3347 = vsub.f32 %v3197, %v3297
        %v3348 = vsub.f32 %v3111, %v3260
        %v3349 = vsub.f32 %v3200, %v3297
        %v3350 = vsub.f32 %v3113, %v3260
        %v3351 = vsub.f32 %v3202, %v3297
        %v3352 = vsub.f32 %v3116, %v3260
        %v3353 = vsub.f32 %v3205, %v3297
        %v3354 = vsub.f32 %v3118, %v3260
        %v3355 = vsub.f32 %v3207, %v3297
        %v3356 = vsub.f32 %v3121, %v3260
        %v3357 = vsub.f32 %v3210, %v3297
        %v3358 = vsub.f32 %v3123, %v3260
        %v3359 = vsub.f32 %v3212, %v3297
        %v3360 = vsub.f32 %v3126, %v3260
        %v3361 = vsub.f32 %v3215, %v3297
        %v3362 = vsub.f32 %v3128, %v3260
        %v3363 = vsub.f32 %v3217, %v3297
        %v3364 = vsub.f32 %v3131, %v3260
        %v3365 = vsub.f32 %v3220, %v3297
        %v3366 = vsub.f32 %v3133, %v3260
        %v3367 = vsub.f32 %v3222, %v3297
        %v3368 = vmul.f32 %v3304, 1.442695
        %v3369 = vpow.pop %v3368
        %v3370 = vmul.f32 %v3305, 1.442695
        %v3371 = vpow.pop %v3370
        %v3372 = vmul.f32 %v3306, 1.442695
        %v3373 = vpow.pop %v3372
        %v3374 = vmul.f32 %v3307, 1.442695
        %v3375 = vpow.pop %v3374
        %v3376 = vmul.f32 %v3308, 1.442695
        %v3377 = vpow.pop %v3376
        %v3378 = vmul.f32 %v3309, 1.442695
        %v3379 = vpow.pop %v3378
        %v3380 = vmul.f32 %v3310, 1.442695
        %v3381 = vpow.pop %v3380
        %v3382 = vmul.f32 %v3311, 1.442695
        %v3383 = vpow.pop %v3382
        %v3384 = vmul.f32 %v3312, 1.442695
        %v3385 = vpow.pop %v3384
        %v3386 = vmul.f32 %v3313, 1.442695
        %v3387 = vpow.pop %v3386
        %v3388 = vmul.f32 %v3314, 1.442695
        %v3389 = vpow.pop %v3388
        %v3390 = vmul.f32 %v3315, 1.442695
        %v3391 = vpow.pop %v3390
        %v3392 = vmul.f32 %v3316, 1.442695
        %v3393 = vpow.pop %v3392
        %v3394 = vmul.f32 %v3317, 1.442695
        %v3395 = vpow.pop %v3394
        %v3396 = vmul.f32 %v3318, 1.442695
        %v3397 = vpow.pop %v3396
        %v3398 = vmul.f32 %v3319, 1.442695
        %v3399 = vpow.pop %v3398
        %v3400 = vmul.f32 %v3320, 1.442695
        %v3401 = vpow.pop %v3400
        %v3402 = vmul.f32 %v3321, 1.442695
        %v3403 = vpow.pop %v3402
        %v3404 = vmul.f32 %v3322, 1.442695
        %v3405 = vpow.pop %v3404
        %v3406 = vmul.f32 %v3323, 1.442695
        %v3407 = vpow.pop %v3406
        %v3408 = vmul.f32 %v3324, 1.442695
        %v3409 = vpow.pop %v3408
        %v3410 = vmul.f32 %v3325, 1.442695
        %v3411 = vpow.pop %v3410
        %v3412 = vmul.f32 %v3326, 1.442695
        %v3413 = vpow.pop %v3412
        %v3414 = vmul.f32 %v3327, 1.442695
        %v3415 = vpow.pop %v3414
        %v3416 = vmul.f32 %v3328, 1.442695
        %v3417 = vpow.pop %v3416
        %v3418 = vmul.f32 %v3329, 1.442695
        %v3419 = vpow.pop %v3418
        %v3420 = vmul.f32 %v3330, 1.442695
        %v3421 = vpow.pop %v3420
        %v3422 = vmul.f32 %v3331, 1.442695
        %v3423 = vpow.pop %v3422
        %v3424 = vmul.f32 %v3332, 1.442695
        %v3425 = vpow.pop %v3424
        %v3426 = vmul.f32 %v3333, 1.442695
        %v3427 = vpow.pop %v3426
        %v3428 = vmul.f32 %v3334, 1.442695
        %v3429 = vpow.pop %v3428
        %v3430 = vmul.f32 %v3335, 1.442695
        %v3431 = vpow.pop %v3430
        %v3432 = vmul.f32 %v3336, 1.442695
        %v3433 = vpow.pop %v3432
        %v3434 = vmul.f32 %v3337, 1.442695
        %v3435 = vpow.pop %v3434
        %v3436 = vmul.f32 %v3338, 1.442695
        %v3437 = vpow.pop %v3436
        %v3438 = vmul.f32 %v3339, 1.442695
        %v3439 = vpow.pop %v3438
        %v3440 = vmul.f32 %v3340, 1.442695
        %v3441 = vpow.pop %v3440
        %v3442 = vmul.f32 %v3341, 1.442695
        %v3443 = vpow.pop %v3442
        %v3444 = vmul.f32 %v3342, 1.442695
        %v3445 = vpow.pop %v3444
        %v3446 = vmul.f32 %v3343, 1.442695
        %v3447 = vpow.pop %v3446
        %v3448 = vmul.f32 %v3344, 1.442695
        %v3449 = vpow.pop %v3448
        %v3450 = vmul.f32 %v3345, 1.442695
        %v3451 = vpow.pop %v3450
        %v3452 = vmul.f32 %v3346, 1.442695
        %v3453 = vpow.pop %v3452
        %v3454 = vmul.f32 %v3347, 1.442695
        %v3455 = vpow.pop %v3454
        %v3456 = vmul.f32 %v3348, 1.442695
        %v3457 = vpow.pop %v3456
        %v3458 = vmul.f32 %v3349, 1.442695
        %v3459 = vpow.pop %v3458
        %v3460 = vmul.f32 %v3350, 1.442695
        %v3461 = vpow.pop %v3460
        %v3462 = vmul.f32 %v3351, 1.442695
        %v3463 = vpow.pop %v3462
        %v3464 = vmul.f32 %v3352, 1.442695
        %v3465 = vpow.pop %v3464
        %v3466 = vmul.f32 %v3353, 1.442695
        %v3467 = vpow.pop %v3466
        %v3468 = vmul.f32 %v3354, 1.442695
        %v3469 = vpow.pop %v3468
        %v3470 = vmul.f32 %v3355, 1.442695
        %v3471 = vpow.pop %v3470
        %v3472 = vmul.f32 %v3356, 1.442695
        %v3473 = vpow.pop %v3472
        %v3474 = vmul.f32 %v3357, 1.442695
        %v3475 = vpow.pop %v3474
        %v3476 = vmul.f32 %v3358, 1.442695
        %v3477 = vpow.pop %v3476
        %v3478 = vmul.f32 %v3359, 1.442695
        %v3479 = vpow.pop %v3478
        %v3480 = vmul.f32 %v3360, 1.442695
        %v3481 = vpow.pop %v3480
        %v3482 = vmul.f32 %v3361, 1.442695
        %v3483 = vpow.pop %v3482
        %v3484 = vmul.f32 %v3362, 1.442695
        %v3485 = vpow.pop %v3484
        %v3486 = vmul.f32 %v3363, 1.442695
        %v3487 = vpow.pop %v3486
        %v3488 = vmul.f32 %v3364, 1.442695
        %v3489 = vpow.pop %v3488
        %v3490 = vmul.f32 %v3365, 1.442695
        %v3491 = vpow.pop %v3490
        %v3492 = vmul.f32 %v3366, 1.442695
        %v3493 = vpow.pop %v3492
        %v3494 = vmul.f32 %v3367, 1.442695
        %v3495 = vpow.pop %v3494
        %v3496 = vmul.f32 %v3301, 0.0
        %v3497 = vmul.f32 %v3303, 0.0
        %v3498 = vadd.f32 %v3369, %v3373
        %v3499 = vadd.f32 %v3498, %v3377
        %v3500 = vadd.f32 %v3499, %v3381
        %v3501 = vadd.f32 %v3500, %v3385
        %v3502 = vadd.f32 %v3501, %v3389
        %v3503 = vadd.f32 %v3502, %v3393
        %v3504 = vadd.f32 %v3503, %v3397
        %v3505 = vadd.f32 %v3504, %v3401
        %v3506 = vadd.f32 %v3505, %v3405
        %v3507 = vadd.f32 %v3506, %v3409
        %v3508 = vadd.f32 %v3507, %v3413
        %v3509 = vadd.f32 %v3508, %v3417
        %v3510 = vadd.f32 %v3509, %v3421
        %v3511 = vadd.f32 %v3510, %v3425
        %v3512 = vadd.f32 %v3511, %v3429
        %v3513 = vadd.f32 %v3512, %v3433
        %v3514 = vadd.f32 %v3513, %v3437
        %v3515 = vadd.f32 %v3514, %v3441
        %v3516 = vadd.f32 %v3515, %v3445
        %v3517 = vadd.f32 %v3516, %v3449
        %v3518 = vadd.f32 %v3517, %v3453
        %v3519 = vadd.f32 %v3518, %v3457
        %v3520 = vadd.f32 %v3519, %v3461
        %v3521 = vadd.f32 %v3520, %v3465
        %v3522 = vadd.f32 %v3521, %v3469
        %v3523 = vadd.f32 %v3522, %v3473
        %v3524 = vadd.f32 %v3523, %v3477
        %v3525 = vadd.f32 %v3524, %v3481
        %v3526 = vadd.f32 %v3525, %v3485
        %v3527 = vadd.f32 %v3526, %v3489
        %v3528 = vadd.f32 %v3527, %v3493
        %v3529 = vrot.slane %v3528, 4
        %v3530 = vadd.f32 %v3528, %v3529
        %v3531 = vrot.slane %v3530, 2
        %v3532 = vadd.f32 %v3530, %v3531
        %v3533 = vrot.slane %v3532, 1
        %v3534 = vadd.f32 %v3532, %v3533
        %v3535 = vadd.f32 %v3371, %v3375
        %v3536 = vadd.f32 %v3535, %v3379
        %v3537 = vadd.f32 %v3536, %v3383
        %v3538 = vadd.f32 %v3537, %v3387
        %v3539 = vadd.f32 %v3538, %v3391
        %v3540 = vadd.f32 %v3539, %v3395
        %v3541 = vadd.f32 %v3540, %v3399
        %v3542 = vadd.f32 %v3541, %v3403
        %v3543 = vadd.f32 %v3542, %v3407
        %v3544 = vadd.f32 %v3543, %v3411
        %v3545 = vadd.f32 %v3544, %v3415
        %v3546 = vadd.f32 %v3545, %v3419
        %v3547 = vadd.f32 %v3546, %v3423
        %v3548 = vadd.f32 %v3547, %v3427
        %v3549 = vadd.f32 %v3548, %v3431
        %v3550 = vadd.f32 %v3549, %v3435
        %v3551 = vadd.f32 %v3550, %v3439
        %v3552 = vadd.f32 %v3551, %v3443
        %v3553 = vadd.f32 %v3552, %v3447
        %v3554 = vadd.f32 %v3553, %v3451
        %v3555 = vadd.f32 %v3554, %v3455
        %v3556 = vadd.f32 %v3555, %v3459
        %v3557 = vadd.f32 %v3556, %v3463
        %v3558 = vadd.f32 %v3557, %v3467
        %v3559 = vadd.f32 %v3558, %v3471
        %v3560 = vadd.f32 %v3559, %v3475
        %v3561 = vadd.f32 %v3560, %v3479
        %v3562 = vadd.f32 %v3561, %v3483
        %v3563 = vadd.f32 %v3562, %v3487
        %v3564 = vadd.f32 %v3563, %v3491
        %v3565 = vadd.f32 %v3564, %v3495
        %v3566 = vrot.slane %v3565, 4
        %v3567 = vadd.f32 %v3565, %v3566
        %v3568 = vrot.slane %v3567, 2
        %v3569 = vadd.f32 %v3567, %v3568
        %v3570 = vrot.slane %v3569, 1
        %v3571 = vadd.f32 %v3569, %v3570
        %v3572 = vadd.f32 %v3496, %v3534
        %v3573 = vadd.f32 %v3497, %v3571
        %v3574 = vpack.c.bf16 %v3373, %v3369
        %v3575 = vpack.c.bf16 %v3375, %v3371
        %v3576 = vpack.c.bf16 %v3381, %v3377
        %v3577 = vpack.c.bf16 %v3383, %v3379
        %v3578 = vpack.c.bf16 %v3389, %v3385
        %v3579 = vpack.c.bf16 %v3391, %v3387
        %v3580 = vpack.c.bf16 %v3397, %v3393
        %v3581 = vpack.c.bf16 %v3399, %v3395
        %v3582 = vpack.c.bf16 %v3405, %v3401
        %v3583 = vpack.c.bf16 %v3407, %v3403
        %v3584 = vpack.c.bf16 %v3413, %v3409
        %v3585 = vpack.c.bf16 %v3415, %v3411
        %v3586 = vpack.c.bf16 %v3421, %v3417
        %v3587 = vpack.c.bf16 %v3423, %v3419
        %v3588 = vpack.c.bf16 %v3429, %v3425
        %v3589 = vpack.c.bf16 %v3431, %v3427
        %v3590 = vpack.c.bf16 %v3437, %v3433
        %v3591 = vpack.c.bf16 %v3439, %v3435
        %v3592 = vpack.c.bf16 %v3445, %v3441
        %v3593 = vpack.c.bf16 %v3447, %v3443
        %v3594 = vpack.c.bf16 %v3453, %v3449
        %v3595 = vpack.c.bf16 %v3455, %v3451
        %v3596 = vpack.c.bf16 %v3461, %v3457
        %v3597 = vpack.c.bf16 %v3463, %v3459
        %v3598 = vpack.c.bf16 %v3469, %v3465
        %v3599 = vpack.c.bf16 %v3471, %v3467
        %v3600 = vpack.c.bf16 %v3477, %v3473
        %v3601 = vpack.c.bf16 %v3479, %v3475
        %v3602 = vpack.c.bf16 %v3485, %v3481
        %v3603 = vpack.c.bf16 %v3487, %v3483
        %v3604 = vpack.c.bf16 %v3493, %v3489
        %v3605 = vpack.c.bf16 %v3495, %v3491
        %3606 = vmatpush.bf16.msra.mxu0 %v3588
        %3607 = vmatpush.bf16.msra.mxu0 %v3586
        %3608 = vmatpush.bf16.msra.mxu0 %v3584
        %3609 = vmatpush.bf16.msra.mxu0 %v3582
        %3610 = vmatpush.bf16.msra.mxu0 %v3580
        %3611 = vmatpush.bf16.msra.mxu0 %v3578
        %3612 = vmatpush.bf16.msra.mxu0 %v3576
        %3613 = vmatpush.bf16.msra.mxu0 %v3574
        %3614 = vmatmul.bf16.gmra.mxu0 %v2966
        %v3615 = vpop.f32.mrf.mxu0
        %v3616 = vadd.f32 0.0, %v3615
        %v3617 = vpop.f32.mrf.mxu0
        %3618 = vdwg.mxu0
        %3619 = vmatpush.bf16.msra.mxu0 %v3604
        %3620 = vmatpush.bf16.msra.mxu0 %v3602
        %3621 = vmatpush.bf16.msra.mxu0 %v3600
        %3622 = vmatpush.bf16.msra.mxu0 %v3598
        %3623 = vmatpush.bf16.msra.mxu0 %v3596
        %3624 = vmatpush.bf16.msra.mxu0 %v3594
        %3625 = vmatpush.bf16.msra.mxu0 %v3592
        %3626 = vmatpush.bf16.msra.mxu0 %v3590
        %3627 = vmatmul.bf16.gmra.mxu0 %v2967
        %v3628 = vpop.f32.mrf.mxu0
        %v3629 = vadd.f32 %v3616, %v3628
        %v3630 = vpop.f32.mrf.mxu0
        %3631 = vdwg.mxu0
        %3632 = vmatpush.bf16.msra.mxu0 %v3589
        %3633 = vmatpush.bf16.msra.mxu0 %v3587
        %3634 = vmatpush.bf16.msra.mxu0 %v3585
        %3635 = vmatpush.bf16.msra.mxu0 %v3583
        %3636 = vmatpush.bf16.msra.mxu0 %v3581
        %3637 = vmatpush.bf16.msra.mxu0 %v3579
        %3638 = vmatpush.bf16.msra.mxu0 %v3577
        %3639 = vmatpush.bf16.msra.mxu0 %v3575
        %3640 = vmatmul.bf16.gmra.mxu0 %v2966
        %v3641 = vpop.f32.mrf.mxu0
        %v3642 = vadd.f32 0.0, %v3641
        %v3643 = vpop.f32.mrf.mxu0
        %3644 = vdwg.mxu0
        %3645 = vmatpush.bf16.msra.mxu0 %v3605
        %3646 = vmatpush.bf16.msra.mxu0 %v3603
        %3647 = vmatpush.bf16.msra.mxu0 %v3601
        %3648 = vmatpush.bf16.msra.mxu0 %v3599
        %3649 = vmatpush.bf16.msra.mxu0 %v3597
        %3650 = vmatpush.bf16.msra.mxu0 %v3595
        %3651 = vmatpush.bf16.msra.mxu0 %v3593
        %3652 = vmatpush.bf16.msra.mxu0 %v3591
        %3653 = vmatmul.bf16.gmra.mxu0 %v2967
        %v3654 = vpop.f32.mrf.mxu0
        %v3655 = vadd.f32 %v3642, %v3654
        %v3656 = vpop.f32.mrf.mxu0
        %3657 = vdwg.mxu0
        %v3658 = vadd.f32 %v3496, %v3629
        %v3659 = vadd.f32 %v3497, %v3655
        %v3660 = vrcp.pop %v3572
        %v3661 = vmul.f32 %v3572, %v3660
        %v3662 = vsub.f32 1.0, %v3661
        %v3663 = vmul.f32 %v3660, %v3662
        %v3664 = vadd.f32 %v3660, %v3663
        %vm3665 = vweird.f32 %v3572
        %vm3666 = vweird.f32 %v3660
        %vm3667 = vmor %vm3665, %vm3666
        %v3668 = vsel %vm3667, %v3660, %v3664
        %v3669 = vand.u32 2147483647, %v3572
        %vm3670 = vcmp.eq.f32.partialorder %v3669, 8.507059e+37
        %v3671 = vand.u32 %v3572, 2147483648
        %v3672 = vor.u32 1.1754944e-38, %v3671
        %v3673 = vsel %vm3670, %v3672, %v3668
        %v3674 = vrcp.pop %v3573
        %v3675 = vmul.f32 %v3573, %v3674
        %v3676 = vsub.f32 1.0, %v3675
        %v3677 = vmul.f32 %v3674, %v3676
        %v3678 = vadd.f32 %v3674, %v3677
        %vm3679 = vweird.f32 %v3573
        %vm3680 = vweird.f32 %v3674
        %vm3681 = vmor %vm3679, %vm3680
        %v3682 = vsel %vm3681, %v3674, %v3678
        %v3683 = vand.u32 2147483647, %v3573
        %vm3684 = vcmp.eq.f32.partialorder %v3683, 8.507059e+37
        %v3685 = vand.u32 %v3573, 2147483648
        %v3686 = vor.u32 1.1754944e-38, %v3685
        %v3687 = vsel %vm3684, %v3686, %v3682
        %v3688 = vmul.f32 %v3658, %v3673
        %v3689 = vmul.f32 %v3659, %v3687
        %v3690 = vpack.c.bf16 %v1490, %v1490
        %v3691 = vpack.c.bf16 %v1491, %v1491
        %v3692 = vld [vmem:[#allocation2 + $0x30] sm:$0xff]
        %v3693 = vld [vmem:[#allocation2 + $0x38] sm:$0xff]
        %v3694 = vpack.c.bf16 %v3692, %v3692
        %v3695 = vpack.c.bf16 %v3693, %v3693
        %v3696 = vld [vmem:[#allocation2 + $0x70] sm:$0xff]
        %v3697 = vld [vmem:[#allocation2 + $0x78] sm:$0xff]
        %v3698 = vpack.c.bf16 %v3696, %v3696
        %v3699 = vpack.c.bf16 %v3697, %v3697
        %3700 = vxpose.binary.xlu0.c.b16.start [1/16] %v3695, %v3694, 128
        %3701 = vxpose.binary.xlu0.c.b16.cont [2/16] 0, 0, 128
        %3702 = vxpose.binary.xlu0.c.b16.cont [3/16] 0, 0, 128
        %3703 = vxpose.binary.xlu0.c.b16.cont [4/16] 0, 0, 128
        %3704 = vxpose.binary.xlu0.c.b16.cont [5/16] 0, 0, 128
        %3705 = vxpose.binary.xlu0.c.b16.cont [6/16] 0, 0, 128
        %3706 = vxpose.binary.xlu0.c.b16.cont [7/16] 0, 0, 128
        %3707 = vxpose.binary.xlu0.c.b16.end [8/16] 0, 0, 128
        %v3708 = vpop.trf.xlu0
        %v3709 = vpop.trf.xlu0
        %v3710 = vpop.trf.xlu0
        %v3711 = vpop.trf.xlu0
        %v3712 = vpop.trf.xlu0
        %v3713 = vpop.trf.xlu0
        %v3714 = vpop.trf.xlu0
        %v3715 = vpop.trf.xlu0
        %v3716 = vpop.trf.xlu0
        %v3717 = vpop.trf.xlu0
        %v3718 = vpop.trf.xlu0
        %v3719 = vpop.trf.xlu0
        %v3720 = vpop.trf.xlu0
        %v3721 = vpop.trf.xlu0
        %v3722 = vpop.trf.xlu0
        %v3723 = vpop.trf.xlu0
        %v3725 = vsel %vm1526, %v3708, 0
        %v3728 = vsel %vm1526, %v3710, 0
        %v3731 = vsel %vm1526, %v3712, 0
        %v3734 = vsel %vm1526, %v3714, 0
        %v3737 = vsel %vm1526, %v3716, 0
        %v3740 = vsel %vm1526, %v3718, 0
        %v3743 = vsel %vm1526, %v3720, 0
        %v3746 = vsel %vm1526, %v3722, 0
        %v3749 = vsel %vm1526, %v3709, 0
        %v3752 = vsel %vm1526, %v3711, 0
        %v3755 = vsel %vm1526, %v3713, 0
        %v3758 = vsel %vm1526, %v3715, 0
        %v3761 = vsel %vm1526, %v3717, 0
        %v3764 = vsel %vm1526, %v3719, 0
        %v3767 = vsel %vm1526, %v3721, 0
        %v3770 = vsel %vm1526, %v3723, 0
        %v3773 = vsel %vm1575, %v3690, 0
        %v3776 = vsel %vm1575, %v3691, 0
        %3778 = vmatpush.bf16.msra.mxu0 0
        %3779 = vmatpush.bf16.msra.mxu0 0
        %3780 = vmatpush.bf16.msra.mxu0 0
        %3781 = vmatpush.bf16.msra.mxu0 0
        %3782 = vmatpush.bf16.msra.mxu0 0
        %3783 = vmatpush.bf16.msra.mxu0 0
        %3784 = vmatpush.bf16.msra.mxu0 0
        %3785 = vmatpush.bf16.msra.mxu0 %v3773
        %3786 = vmatmul.bf16.gmra.mxu0 %v3725
        %v3787 = vpop.f32.mrf.mxu0
        %v3788 = vadd.f32 0.0, %v3787
        %v3789 = vpop.f32.mrf.mxu0
        %v3790 = vadd.f32 0.0, %v3789
        %3791 = vmatmul.bf16.gmra.mxu0 %v3728
        %v3792 = vpop.f32.mrf.mxu0
        %v3793 = vadd.f32 0.0, %v3792
        %v3794 = vpop.f32.mrf.mxu0
        %v3795 = vadd.f32 0.0, %v3794
        %3796 = vmatmul.bf16.gmra.mxu0 %v3731
        %v3797 = vpop.f32.mrf.mxu0
        %v3798 = vadd.f32 0.0, %v3797
        %v3799 = vpop.f32.mrf.mxu0
        %v3800 = vadd.f32 0.0, %v3799
        %3801 = vmatmul.bf16.gmra.mxu0 %v3734
        %v3802 = vpop.f32.mrf.mxu0
        %v3803 = vadd.f32 0.0, %v3802
        %v3804 = vpop.f32.mrf.mxu0
        %v3805 = vadd.f32 0.0, %v3804
        %3806 = vmatmul.bf16.gmra.mxu0 %v3737
        %v3807 = vpop.f32.mrf.mxu0
        %v3808 = vadd.f32 0.0, %v3807
        %v3809 = vpop.f32.mrf.mxu0
        %v3810 = vadd.f32 0.0, %v3809
        %3811 = vmatmul.bf16.gmra.mxu0 %v3740
        %v3812 = vpop.f32.mrf.mxu0
        %v3813 = vadd.f32 0.0, %v3812
        %v3814 = vpop.f32.mrf.mxu0
        %v3815 = vadd.f32 0.0, %v3814
        %3816 = vmatmul.bf16.gmra.mxu0 %v3743
        %v3817 = vpop.f32.mrf.mxu0
        %v3818 = vadd.f32 0.0, %v3817
        %v3819 = vpop.f32.mrf.mxu0
        %v3820 = vadd.f32 0.0, %v3819
        %3821 = vmatmul.bf16.gmra.mxu0 %v3746
        %v3822 = vpop.f32.mrf.mxu0
        %v3823 = vadd.f32 0.0, %v3822
        %v3824 = vpop.f32.mrf.mxu0
        %v3825 = vadd.f32 0.0, %v3824
        %3826 = vmatmul.bf16.gmra.mxu0 %v3749
        %v3827 = vpop.f32.mrf.mxu0
        %v3828 = vadd.f32 0.0, %v3827
        %v3829 = vpop.f32.mrf.mxu0
        %v3830 = vadd.f32 0.0, %v3829
        %3831 = vmatmul.bf16.gmra.mxu0 %v3752
        %v3832 = vpop.f32.mrf.mxu0
        %v3833 = vadd.f32 0.0, %v3832
        %v3834 = vpop.f32.mrf.mxu0
        %v3835 = vadd.f32 0.0, %v3834
        %3836 = vmatmul.bf16.gmra.mxu0 %v3755
        %v3837 = vpop.f32.mrf.mxu0
        %v3838 = vadd.f32 0.0, %v3837
        %v3839 = vpop.f32.mrf.mxu0
        %v3840 = vadd.f32 0.0, %v3839
        %3841 = vmatmul.bf16.gmra.mxu0 %v3758
        %v3842 = vpop.f32.mrf.mxu0
        %v3843 = vadd.f32 0.0, %v3842
        %v3844 = vpop.f32.mrf.mxu0
        %v3845 = vadd.f32 0.0, %v3844
        %3846 = vmatmul.bf16.gmra.mxu0 %v3761
        %v3847 = vpop.f32.mrf.mxu0
        %v3848 = vadd.f32 0.0, %v3847
        %v3849 = vpop.f32.mrf.mxu0
        %v3850 = vadd.f32 0.0, %v3849
        %3851 = vmatmul.bf16.gmra.mxu0 %v3764
        %v3852 = vpop.f32.mrf.mxu0
        %v3853 = vadd.f32 0.0, %v3852
        %v3854 = vpop.f32.mrf.mxu0
        %v3855 = vadd.f32 0.0, %v3854
        %3856 = vmatmul.bf16.gmra.mxu0 %v3767
        %v3857 = vpop.f32.mrf.mxu0
        %v3858 = vadd.f32 0.0, %v3857
        %v3859 = vpop.f32.mrf.mxu0
        %v3860 = vadd.f32 0.0, %v3859
        %3861 = vmatmul.bf16.gmra.mxu0 %v3770
        %v3862 = vpop.f32.mrf.mxu0
        %v3863 = vadd.f32 0.0, %v3862
        %v3864 = vpop.f32.mrf.mxu0
        %v3865 = vadd.f32 0.0, %v3864
        %3866 = vdwg.mxu0
        %3867 = vmatpush.bf16.msra.mxu0 0
        %3868 = vmatpush.bf16.msra.mxu0 0
        %3869 = vmatpush.bf16.msra.mxu0 0
        %3870 = vmatpush.bf16.msra.mxu0 0
        %3871 = vmatpush.bf16.msra.mxu0 0
        %3872 = vmatpush.bf16.msra.mxu0 0
        %3873 = vmatpush.bf16.msra.mxu0 0
        %3874 = vmatpush.bf16.msra.mxu0 %v3776
        %3875 = vmatmul.bf16.gmra.mxu0 %v3725
        %v3876 = vpop.f32.mrf.mxu0
        %v3877 = vadd.f32 0.0, %v3876
        %v3878 = vpop.f32.mrf.mxu0
        %v3879 = vadd.f32 0.0, %v3878
        %3880 = vmatmul.bf16.gmra.mxu0 %v3728
        %v3881 = vpop.f32.mrf.mxu0
        %v3882 = vadd.f32 0.0, %v3881
        %v3883 = vpop.f32.mrf.mxu0
        %v3884 = vadd.f32 0.0, %v3883
        %3885 = vmatmul.bf16.gmra.mxu0 %v3731
        %v3886 = vpop.f32.mrf.mxu0
        %v3887 = vadd.f32 0.0, %v3886
        %v3888 = vpop.f32.mrf.mxu0
        %v3889 = vadd.f32 0.0, %v3888
        %3890 = vmatmul.bf16.gmra.mxu0 %v3734
        %v3891 = vpop.f32.mrf.mxu0
        %v3892 = vadd.f32 0.0, %v3891
        %v3893 = vpop.f32.mrf.mxu0
        %v3894 = vadd.f32 0.0, %v3893
        %3895 = vmatmul.bf16.gmra.mxu0 %v3737
        %v3896 = vpop.f32.mrf.mxu0
        %v3897 = vadd.f32 0.0, %v3896
        %v3898 = vpop.f32.mrf.mxu0
        %v3899 = vadd.f32 0.0, %v3898
        %3900 = vmatmul.bf16.gmra.mxu0 %v3740
        %v3901 = vpop.f32.mrf.mxu0
        %v3902 = vadd.f32 0.0, %v3901
        %v3903 = vpop.f32.mrf.mxu0
        %v3904 = vadd.f32 0.0, %v3903
        %3905 = vmatmul.bf16.gmra.mxu0 %v3743
        %v3906 = vpop.f32.mrf.mxu0
        %v3907 = vadd.f32 0.0, %v3906
        %v3908 = vpop.f32.mrf.mxu0
        %v3909 = vadd.f32 0.0, %v3908
        %3910 = vmatmul.bf16.gmra.mxu0 %v3746
        %v3911 = vpop.f32.mrf.mxu0
        %v3912 = vadd.f32 0.0, %v3911
        %v3913 = vpop.f32.mrf.mxu0
        %v3914 = vadd.f32 0.0, %v3913
        %3915 = vmatmul.bf16.gmra.mxu0 %v3749
        %v3916 = vpop.f32.mrf.mxu0
        %v3917 = vadd.f32 0.0, %v3916
        %v3918 = vpop.f32.mrf.mxu0
        %v3919 = vadd.f32 0.0, %v3918
        %3920 = vmatmul.bf16.gmra.mxu0 %v3752
        %v3921 = vpop.f32.mrf.mxu0
        %v3922 = vadd.f32 0.0, %v3921
        %v3923 = vpop.f32.mrf.mxu0
        %v3924 = vadd.f32 0.0, %v3923
        %3925 = vmatmul.bf16.gmra.mxu0 %v3755
        %v3926 = vpop.f32.mrf.mxu0
        %v3927 = vadd.f32 0.0, %v3926
        %v3928 = vpop.f32.mrf.mxu0
        %v3929 = vadd.f32 0.0, %v3928
        %3930 = vmatmul.bf16.gmra.mxu0 %v3758
        %v3931 = vpop.f32.mrf.mxu0
        %v3932 = vadd.f32 0.0, %v3931
        %v3933 = vpop.f32.mrf.mxu0
        %v3934 = vadd.f32 0.0, %v3933
        %3935 = vmatmul.bf16.gmra.mxu0 %v3761
        %v3936 = vpop.f32.mrf.mxu0
        %v3937 = vadd.f32 0.0, %v3936
        %v3938 = vpop.f32.mrf.mxu0
        %v3939 = vadd.f32 0.0, %v3938
        %3940 = vmatmul.bf16.gmra.mxu0 %v3764
        %v3941 = vpop.f32.mrf.mxu0
        %v3942 = vadd.f32 0.0, %v3941
        %v3943 = vpop.f32.mrf.mxu0
        %v3944 = vadd.f32 0.0, %v3943
        %3945 = vmatmul.bf16.gmra.mxu0 %v3767
        %v3946 = vpop.f32.mrf.mxu0
        %v3947 = vadd.f32 0.0, %v3946
        %v3948 = vpop.f32.mrf.mxu0
        %v3949 = vadd.f32 0.0, %v3948
        %3950 = vmatmul.bf16.gmra.mxu0 %v3770
        %v3951 = vpop.f32.mrf.mxu0
        %v3952 = vadd.f32 0.0, %v3951
        %v3953 = vpop.f32.mrf.mxu0
        %v3954 = vadd.f32 0.0, %v3953
        %3955 = vdwg.mxu0
        %v3956 = vmax.f32 %v3788, %v3793
        %v3957 = vmax.f32 %v3790, %v3795
        %v3958 = vmax.f32 %v3956, %v3798
        %v3959 = vmax.f32 %v3957, %v3800
        %v3960 = vmax.f32 %v3958, %v3803
        %v3961 = vmax.f32 %v3959, %v3805
        %v3962 = vmax.f32 %v3960, %v3808
        %v3963 = vmax.f32 %v3961, %v3810
        %v3964 = vmax.f32 %v3962, %v3813
        %v3965 = vmax.f32 %v3963, %v3815
        %v3966 = vmax.f32 %v3964, %v3818
        %v3967 = vmax.f32 %v3965, %v3820
        %v3968 = vmax.f32 %v3966, %v3823
        %v3969 = vmax.f32 %v3967, %v3825
        %v3970 = vmax.f32 %v3968, %v3828
        %v3971 = vmax.f32 %v3969, %v3830
        %v3972 = vmax.f32 %v3970, %v3833
        %v3973 = vmax.f32 %v3971, %v3835
        %v3974 = vmax.f32 %v3972, %v3838
        %v3975 = vmax.f32 %v3973, %v3840
        %v3976 = vmax.f32 %v3974, %v3843
        %v3977 = vmax.f32 %v3975, %v3845
        %v3978 = vmax.f32 %v3976, %v3848
        %v3979 = vmax.f32 %v3977, %v3850
        %v3980 = vmax.f32 %v3978, %v3853
        %v3981 = vmax.f32 %v3979, %v3855
        %v3982 = vmax.f32 %v3980, %v3858
        %v3983 = vmax.f32 %v3981, %v3860
        %v3984 = vmax.f32 %v3982, %v3863
        %v3985 = vmax.f32 %v3983, %v3865
        %v3986 = vmax.f32 %v3984, %v3985
        %v3987 = vrot.slane %v3986, 4
        %v3988 = vmax.f32 %v3986, %v3987
        %v3989 = vrot.slane %v3988, 2
        %v3990 = vmax.f32 %v3988, %v3989
        %v3991 = vrot.slane %v3990, 1
        %v3992 = vmax.f32 %v3990, %v3991
        %v3993 = vmax.f32 %v3877, %v3882
        %v3994 = vmax.f32 %v3879, %v3884
        %v3995 = vmax.f32 %v3993, %v3887
        %v3996 = vmax.f32 %v3994, %v3889
        %v3997 = vmax.f32 %v3995, %v3892
        %v3998 = vmax.f32 %v3996, %v3894
        %v3999 = vmax.f32 %v3997, %v3897
        %v4000 = vmax.f32 %v3998, %v3899
        %v4001 = vmax.f32 %v3999, %v3902
        %v4002 = vmax.f32 %v4000, %v3904
        %v4003 = vmax.f32 %v4001, %v3907
        %v4004 = vmax.f32 %v4002, %v3909
        %v4005 = vmax.f32 %v4003, %v3912
        %v4006 = vmax.f32 %v4004, %v3914
        %v4007 = vmax.f32 %v4005, %v3917
        %v4008 = vmax.f32 %v4006, %v3919
        %v4009 = vmax.f32 %v4007, %v3922
        %v4010 = vmax.f32 %v4008, %v3924
        %v4011 = vmax.f32 %v4009, %v3927
        %v4012 = vmax.f32 %v4010, %v3929
        %v4013 = vmax.f32 %v4011, %v3932
        %v4014 = vmax.f32 %v4012, %v3934
        %v4015 = vmax.f32 %v4013, %v3937
        %v4016 = vmax.f32 %v4014, %v3939
        %v4017 = vmax.f32 %v4015, %v3942
        %v4018 = vmax.f32 %v4016, %v3944
        %v4019 = vmax.f32 %v4017, %v3947
        %v4020 = vmax.f32 %v4018, %v3949
        %v4021 = vmax.f32 %v4019, %v3952
        %v4022 = vmax.f32 %v4020, %v3954
        %v4023 = vmax.f32 %v4021, %v4022
        %v4024 = vrot.slane %v4023, 4
        %v4025 = vmax.f32 %v4023, %v4024
        %v4026 = vrot.slane %v4025, 2
        %v4027 = vmax.f32 %v4025, %v4026
        %v4028 = vrot.slane %v4027, 1
        %v4029 = vmax.f32 %v4027, %v4028
        %v4030 = vsub.f32 -inf, %v3992
        %v4031 = vsub.f32 -inf, %v4029
        %v4032 = vmul.f32 %v4030, 1.442695
        %v4033 = vpow.pop %v4032
        %v4034 = vmul.f32 %v4031, 1.442695
        %v4035 = vpow.pop %v4034
        %v4036 = vsub.f32 %v3788, %v3992
        %v4037 = vsub.f32 %v3877, %v4029
        %v4038 = vsub.f32 %v3790, %v3992
        %v4039 = vsub.f32 %v3879, %v4029
        %v4040 = vsub.f32 %v3793, %v3992
        %v4041 = vsub.f32 %v3882, %v4029
        %v4042 = vsub.f32 %v3795, %v3992
        %v4043 = vsub.f32 %v3884, %v4029
        %v4044 = vsub.f32 %v3798, %v3992
        %v4045 = vsub.f32 %v3887, %v4029
        %v4046 = vsub.f32 %v3800, %v3992
        %v4047 = vsub.f32 %v3889, %v4029
        %v4048 = vsub.f32 %v3803, %v3992
        %v4049 = vsub.f32 %v3892, %v4029
        %v4050 = vsub.f32 %v3805, %v3992
        %v4051 = vsub.f32 %v3894, %v4029
        %v4052 = vsub.f32 %v3808, %v3992
        %v4053 = vsub.f32 %v3897, %v4029
        %v4054 = vsub.f32 %v3810, %v3992
        %v4055 = vsub.f32 %v3899, %v4029
        %v4056 = vsub.f32 %v3813, %v3992
        %v4057 = vsub.f32 %v3902, %v4029
        %v4058 = vsub.f32 %v3815, %v3992
        %v4059 = vsub.f32 %v3904, %v4029
        %v4060 = vsub.f32 %v3818, %v3992
        %v4061 = vsub.f32 %v3907, %v4029
        %v4062 = vsub.f32 %v3820, %v3992
        %v4063 = vsub.f32 %v3909, %v4029
        %v4064 = vsub.f32 %v3823, %v3992
        %v4065 = vsub.f32 %v3912, %v4029
        %v4066 = vsub.f32 %v3825, %v3992
        %v4067 = vsub.f32 %v3914, %v4029
        %v4068 = vsub.f32 %v3828, %v3992
        %v4069 = vsub.f32 %v3917, %v4029
        %v4070 = vsub.f32 %v3830, %v3992
        %v4071 = vsub.f32 %v3919, %v4029
        %v4072 = vsub.f32 %v3833, %v3992
        %v4073 = vsub.f32 %v3922, %v4029
        %v4074 = vsub.f32 %v3835, %v3992
        %v4075 = vsub.f32 %v3924, %v4029
        %v4076 = vsub.f32 %v3838, %v3992
        %v4077 = vsub.f32 %v3927, %v4029
        %v4078 = vsub.f32 %v3840, %v3992
        %v4079 = vsub.f32 %v3929, %v4029
        %v4080 = vsub.f32 %v3843, %v3992
        %v4081 = vsub.f32 %v3932, %v4029
        %v4082 = vsub.f32 %v3845, %v3992
        %v4083 = vsub.f32 %v3934, %v4029
        %v4084 = vsub.f32 %v3848, %v3992
        %v4085 = vsub.f32 %v3937, %v4029
        %v4086 = vsub.f32 %v3850, %v3992
        %v4087 = vsub.f32 %v3939, %v4029
        %v4088 = vsub.f32 %v3853, %v3992
        %v4089 = vsub.f32 %v3942, %v4029
        %v4090 = vsub.f32 %v3855, %v3992
        %v4091 = vsub.f32 %v3944, %v4029
        %v4092 = vsub.f32 %v3858, %v3992
        %v4093 = vsub.f32 %v3947, %v4029
        %v4094 = vsub.f32 %v3860, %v3992
        %v4095 = vsub.f32 %v3949, %v4029
        %v4096 = vsub.f32 %v3863, %v3992
        %v4097 = vsub.f32 %v3952, %v4029
        %v4098 = vsub.f32 %v3865, %v3992
        %v4099 = vsub.f32 %v3954, %v4029
        %v4100 = vmul.f32 %v4036, 1.442695
        %v4101 = vpow.pop %v4100
        %v4102 = vmul.f32 %v4037, 1.442695
        %v4103 = vpow.pop %v4102
        %v4104 = vmul.f32 %v4038, 1.442695
        %v4105 = vpow.pop %v4104
        %v4106 = vmul.f32 %v4039, 1.442695
        %v4107 = vpow.pop %v4106
        %v4108 = vmul.f32 %v4040, 1.442695
        %v4109 = vpow.pop %v4108
        %v4110 = vmul.f32 %v4041, 1.442695
        %v4111 = vpow.pop %v4110
        %v4112 = vmul.f32 %v4042, 1.442695
        %v4113 = vpow.pop %v4112
        %v4114 = vmul.f32 %v4043, 1.442695
        %v4115 = vpow.pop %v4114
        %v4116 = vmul.f32 %v4044, 1.442695
        %v4117 = vpow.pop %v4116
        %v4118 = vmul.f32 %v4045, 1.442695
        %v4119 = vpow.pop %v4118
        %v4120 = vmul.f32 %v4046, 1.442695
        %v4121 = vpow.pop %v4120
        %v4122 = vmul.f32 %v4047, 1.442695
        %v4123 = vpow.pop %v4122
        %v4124 = vmul.f32 %v4048, 1.442695
        %v4125 = vpow.pop %v4124
        %v4126 = vmul.f32 %v4049, 1.442695
        %v4127 = vpow.pop %v4126
        %v4128 = vmul.f32 %v4050, 1.442695
        %v4129 = vpow.pop %v4128
        %v4130 = vmul.f32 %v4051, 1.442695
        %v4131 = vpow.pop %v4130
        %v4132 = vmul.f32 %v4052, 1.442695
        %v4133 = vpow.pop %v4132
        %v4134 = vmul.f32 %v4053, 1.442695
        %v4135 = vpow.pop %v4134
        %v4136 = vmul.f32 %v4054, 1.442695
        %v4137 = vpow.pop %v4136
        %v4138 = vmul.f32 %v4055, 1.442695
        %v4139 = vpow.pop %v4138
        %v4140 = vmul.f32 %v4056, 1.442695
        %v4141 = vpow.pop %v4140
        %v4142 = vmul.f32 %v4057, 1.442695
        %v4143 = vpow.pop %v4142
        %v4144 = vmul.f32 %v4058, 1.442695
        %v4145 = vpow.pop %v4144
        %v4146 = vmul.f32 %v4059, 1.442695
        %v4147 = vpow.pop %v4146
        %v4148 = vmul.f32 %v4060, 1.442695
        %v4149 = vpow.pop %v4148
        %v4150 = vmul.f32 %v4061, 1.442695
        %v4151 = vpow.pop %v4150
        %v4152 = vmul.f32 %v4062, 1.442695
        %v4153 = vpow.pop %v4152
        %v4154 = vmul.f32 %v4063, 1.442695
        %v4155 = vpow.pop %v4154
        %v4156 = vmul.f32 %v4064, 1.442695
        %v4157 = vpow.pop %v4156
        %v4158 = vmul.f32 %v4065, 1.442695
        %v4159 = vpow.pop %v4158
        %v4160 = vmul.f32 %v4066, 1.442695
        %v4161 = vpow.pop %v4160
        %v4162 = vmul.f32 %v4067, 1.442695
        %v4163 = vpow.pop %v4162
        %v4164 = vmul.f32 %v4068, 1.442695
        %v4165 = vpow.pop %v4164
        %v4166 = vmul.f32 %v4069, 1.442695
        %v4167 = vpow.pop %v4166
        %v4168 = vmul.f32 %v4070, 1.442695
        %v4169 = vpow.pop %v4168
        %v4170 = vmul.f32 %v4071, 1.442695
        %v4171 = vpow.pop %v4170
        %v4172 = vmul.f32 %v4072, 1.442695
        %v4173 = vpow.pop %v4172
        %v4174 = vmul.f32 %v4073, 1.442695
        %v4175 = vpow.pop %v4174
        %v4176 = vmul.f32 %v4074, 1.442695
        %v4177 = vpow.pop %v4176
        %v4178 = vmul.f32 %v4075, 1.442695
        %v4179 = vpow.pop %v4178
        %v4180 = vmul.f32 %v4076, 1.442695
        %v4181 = vpow.pop %v4180
        %v4182 = vmul.f32 %v4077, 1.442695
        %v4183 = vpow.pop %v4182
        %v4184 = vmul.f32 %v4078, 1.442695
        %v4185 = vpow.pop %v4184
        %v4186 = vmul.f32 %v4079, 1.442695
        %v4187 = vpow.pop %v4186
        %v4188 = vmul.f32 %v4080, 1.442695
        %v4189 = vpow.pop %v4188
        %v4190 = vmul.f32 %v4081, 1.442695
        %v4191 = vpow.pop %v4190
        %v4192 = vmul.f32 %v4082, 1.442695
        %v4193 = vpow.pop %v4192
        %v4194 = vmul.f32 %v4083, 1.442695
        %v4195 = vpow.pop %v4194
        %v4196 = vmul.f32 %v4084, 1.442695
        %v4197 = vpow.pop %v4196
        %v4198 = vmul.f32 %v4085, 1.442695
        %v4199 = vpow.pop %v4198
        %v4200 = vmul.f32 %v4086, 1.442695
        %v4201 = vpow.pop %v4200
        %v4202 = vmul.f32 %v4087, 1.442695
        %v4203 = vpow.pop %v4202
        %v4204 = vmul.f32 %v4088, 1.442695
        %v4205 = vpow.pop %v4204
        %v4206 = vmul.f32 %v4089, 1.442695
        %v4207 = vpow.pop %v4206
        %v4208 = vmul.f32 %v4090, 1.442695
        %v4209 = vpow.pop %v4208
        %v4210 = vmul.f32 %v4091, 1.442695
        %v4211 = vpow.pop %v4210
        %v4212 = vmul.f32 %v4092, 1.442695
        %v4213 = vpow.pop %v4212
        %v4214 = vmul.f32 %v4093, 1.442695
        %v4215 = vpow.pop %v4214
        %v4216 = vmul.f32 %v4094, 1.442695
        %v4217 = vpow.pop %v4216
        %v4218 = vmul.f32 %v4095, 1.442695
        %v4219 = vpow.pop %v4218
        %v4220 = vmul.f32 %v4096, 1.442695
        %v4221 = vpow.pop %v4220
        %v4222 = vmul.f32 %v4097, 1.442695
        %v4223 = vpow.pop %v4222
        %v4224 = vmul.f32 %v4098, 1.442695
        %v4225 = vpow.pop %v4224
        %v4226 = vmul.f32 %v4099, 1.442695
        %v4227 = vpow.pop %v4226
        %v4228 = vmul.f32 %v4033, 0.0
        %v4229 = vmul.f32 %v4035, 0.0
        %v4230 = vadd.f32 %v4101, %v4105
        %v4231 = vadd.f32 %v4230, %v4109
        %v4232 = vadd.f32 %v4231, %v4113
        %v4233 = vadd.f32 %v4232, %v4117
        %v4234 = vadd.f32 %v4233, %v4121
        %v4235 = vadd.f32 %v4234, %v4125
        %v4236 = vadd.f32 %v4235, %v4129
        %v4237 = vadd.f32 %v4236, %v4133
        %v4238 = vadd.f32 %v4237, %v4137
        %v4239 = vadd.f32 %v4238, %v4141
        %v4240 = vadd.f32 %v4239, %v4145
        %v4241 = vadd.f32 %v4240, %v4149
        %v4242 = vadd.f32 %v4241, %v4153
        %v4243 = vadd.f32 %v4242, %v4157
        %v4244 = vadd.f32 %v4243, %v4161
        %v4245 = vadd.f32 %v4244, %v4165
        %v4246 = vadd.f32 %v4245, %v4169
        %v4247 = vadd.f32 %v4246, %v4173
        %v4248 = vadd.f32 %v4247, %v4177
        %v4249 = vadd.f32 %v4248, %v4181
        %v4250 = vadd.f32 %v4249, %v4185
        %v4251 = vadd.f32 %v4250, %v4189
        %v4252 = vadd.f32 %v4251, %v4193
        %v4253 = vadd.f32 %v4252, %v4197
        %v4254 = vadd.f32 %v4253, %v4201
        %v4255 = vadd.f32 %v4254, %v4205
        %v4256 = vadd.f32 %v4255, %v4209
        %v4257 = vadd.f32 %v4256, %v4213
        %v4258 = vadd.f32 %v4257, %v4217
        %v4259 = vadd.f32 %v4258, %v4221
        %v4260 = vadd.f32 %v4259, %v4225
        %v4261 = vrot.slane %v4260, 4
        %v4262 = vadd.f32 %v4260, %v4261
        %v4263 = vrot.slane %v4262, 2
        %v4264 = vadd.f32 %v4262, %v4263
        %v4265 = vrot.slane %v4264, 1
        %v4266 = vadd.f32 %v4264, %v4265
        %v4267 = vadd.f32 %v4103, %v4107
        %v4268 = vadd.f32 %v4267, %v4111
        %v4269 = vadd.f32 %v4268, %v4115
        %v4270 = vadd.f32 %v4269, %v4119
        %v4271 = vadd.f32 %v4270, %v4123
        %v4272 = vadd.f32 %v4271, %v4127
        %v4273 = vadd.f32 %v4272, %v4131
        %v4274 = vadd.f32 %v4273, %v4135
        %v4275 = vadd.f32 %v4274, %v4139
        %v4276 = vadd.f32 %v4275, %v4143
        %v4277 = vadd.f32 %v4276, %v4147
        %v4278 = vadd.f32 %v4277, %v4151
        %v4279 = vadd.f32 %v4278, %v4155
        %v4280 = vadd.f32 %v4279, %v4159
        %v4281 = vadd.f32 %v4280, %v4163
        %v4282 = vadd.f32 %v4281, %v4167
        %v4283 = vadd.f32 %v4282, %v4171
        %v4284 = vadd.f32 %v4283, %v4175
        %v4285 = vadd.f32 %v4284, %v4179
        %v4286 = vadd.f32 %v4285, %v4183
        %v4287 = vadd.f32 %v4286, %v4187
        %v4288 = vadd.f32 %v4287, %v4191
        %v4289 = vadd.f32 %v4288, %v4195
        %v4290 = vadd.f32 %v4289, %v4199
        %v4291 = vadd.f32 %v4290, %v4203
        %v4292 = vadd.f32 %v4291, %v4207
        %v4293 = vadd.f32 %v4292, %v4211
        %v4294 = vadd.f32 %v4293, %v4215
        %v4295 = vadd.f32 %v4294, %v4219
        %v4296 = vadd.f32 %v4295, %v4223
        %v4297 = vadd.f32 %v4296, %v4227
        %v4298 = vrot.slane %v4297, 4
        %v4299 = vadd.f32 %v4297, %v4298
        %v4300 = vrot.slane %v4299, 2
        %v4301 = vadd.f32 %v4299, %v4300
        %v4302 = vrot.slane %v4301, 1
        %v4303 = vadd.f32 %v4301, %v4302
        %v4304 = vadd.f32 %v4228, %v4266
        %v4305 = vadd.f32 %v4229, %v4303
        %v4306 = vpack.c.bf16 %v4105, %v4101
        %v4307 = vpack.c.bf16 %v4107, %v4103
        %v4308 = vpack.c.bf16 %v4113, %v4109
        %v4309 = vpack.c.bf16 %v4115, %v4111
        %v4310 = vpack.c.bf16 %v4121, %v4117
        %v4311 = vpack.c.bf16 %v4123, %v4119
        %v4312 = vpack.c.bf16 %v4129, %v4125
        %v4313 = vpack.c.bf16 %v4131, %v4127
        %v4314 = vpack.c.bf16 %v4137, %v4133
        %v4315 = vpack.c.bf16 %v4139, %v4135
        %v4316 = vpack.c.bf16 %v4145, %v4141
        %v4317 = vpack.c.bf16 %v4147, %v4143
        %v4318 = vpack.c.bf16 %v4153, %v4149
        %v4319 = vpack.c.bf16 %v4155, %v4151
        %v4320 = vpack.c.bf16 %v4161, %v4157
        %v4321 = vpack.c.bf16 %v4163, %v4159
        %v4322 = vpack.c.bf16 %v4169, %v4165
        %v4323 = vpack.c.bf16 %v4171, %v4167
        %v4324 = vpack.c.bf16 %v4177, %v4173
        %v4325 = vpack.c.bf16 %v4179, %v4175
        %v4326 = vpack.c.bf16 %v4185, %v4181
        %v4327 = vpack.c.bf16 %v4187, %v4183
        %v4328 = vpack.c.bf16 %v4193, %v4189
        %v4329 = vpack.c.bf16 %v4195, %v4191
        %v4330 = vpack.c.bf16 %v4201, %v4197
        %v4331 = vpack.c.bf16 %v4203, %v4199
        %v4332 = vpack.c.bf16 %v4209, %v4205
        %v4333 = vpack.c.bf16 %v4211, %v4207
        %v4334 = vpack.c.bf16 %v4217, %v4213
        %v4335 = vpack.c.bf16 %v4219, %v4215
        %v4336 = vpack.c.bf16 %v4225, %v4221
        %v4337 = vpack.c.bf16 %v4227, %v4223
        %4338 = vmatpush.bf16.msra.mxu0 %v4320
        %4339 = vmatpush.bf16.msra.mxu0 %v4318
        %4340 = vmatpush.bf16.msra.mxu0 %v4316
        %4341 = vmatpush.bf16.msra.mxu0 %v4314
        %4342 = vmatpush.bf16.msra.mxu0 %v4312
        %4343 = vmatpush.bf16.msra.mxu0 %v4310
        %4344 = vmatpush.bf16.msra.mxu0 %v4308
        %4345 = vmatpush.bf16.msra.mxu0 %v4306
        %4346 = vmatmul.bf16.gmra.mxu0 %v3698
        %v4347 = vpop.f32.mrf.mxu0
        %v4348 = vadd.f32 0.0, %v4347
        %v4349 = vpop.f32.mrf.mxu0
        %4350 = vdwg.mxu0
        %4351 = vmatpush.bf16.msra.mxu0 %v4336
        %4352 = vmatpush.bf16.msra.mxu0 %v4334
        %4353 = vmatpush.bf16.msra.mxu0 %v4332
        %4354 = vmatpush.bf16.msra.mxu0 %v4330
        %4355 = vmatpush.bf16.msra.mxu0 %v4328
        %4356 = vmatpush.bf16.msra.mxu0 %v4326
        %4357 = vmatpush.bf16.msra.mxu0 %v4324
        %4358 = vmatpush.bf16.msra.mxu0 %v4322
        %4359 = vmatmul.bf16.gmra.mxu0 %v3699
        %v4360 = vpop.f32.mrf.mxu0
        %v4361 = vadd.f32 %v4348, %v4360
        %v4362 = vpop.f32.mrf.mxu0
        %4363 = vdwg.mxu0
        %4364 = vmatpush.bf16.msra.mxu0 %v4321
        %4365 = vmatpush.bf16.msra.mxu0 %v4319
        %4366 = vmatpush.bf16.msra.mxu0 %v4317
        %4367 = vmatpush.bf16.msra.mxu0 %v4315
        %4368 = vmatpush.bf16.msra.mxu0 %v4313
        %4369 = vmatpush.bf16.msra.mxu0 %v4311
        %4370 = vmatpush.bf16.msra.mxu0 %v4309
        %4371 = vmatpush.bf16.msra.mxu0 %v4307
        %4372 = vmatmul.bf16.gmra.mxu0 %v3698
        %v4373 = vpop.f32.mrf.mxu0
        %v4374 = vadd.f32 0.0, %v4373
        %v4375 = vpop.f32.mrf.mxu0
        %4376 = vdwg.mxu0
        %4377 = vmatpush.bf16.msra.mxu0 %v4337
        %4378 = vmatpush.bf16.msra.mxu0 %v4335
        %4379 = vmatpush.bf16.msra.mxu0 %v4333
        %4380 = vmatpush.bf16.msra.mxu0 %v4331
        %4381 = vmatpush.bf16.msra.mxu0 %v4329
        %4382 = vmatpush.bf16.msra.mxu0 %v4327
        %4383 = vmatpush.bf16.msra.mxu0 %v4325
        %4384 = vmatpush.bf16.msra.mxu0 %v4323
        %4385 = vmatmul.bf16.gmra.mxu0 %v3699
        %v4386 = vpop.f32.mrf.mxu0
        %v4387 = vadd.f32 %v4374, %v4386
        %v4388 = vpop.f32.mrf.mxu0
        %4389 = vdwg.mxu0
        %v4390 = vadd.f32 %v4228, %v4361
        %v4391 = vadd.f32 %v4229, %v4387
        %v4392 = vrcp.pop %v4304
        %v4393 = vmul.f32 %v4304, %v4392
        %v4394 = vsub.f32 1.0, %v4393
        %v4395 = vmul.f32 %v4392, %v4394
        %v4396 = vadd.f32 %v4392, %v4395
        %vm4397 = vweird.f32 %v4304
        %vm4398 = vweird.f32 %v4392
        %vm4399 = vmor %vm4397, %vm4398
        %v4400 = vsel %vm4399, %v4392, %v4396
        %v4401 = vand.u32 2147483647, %v4304
        %vm4402 = vcmp.eq.f32.partialorder %v4401, 8.507059e+37
        %v4403 = vand.u32 %v4304, 2147483648
        %v4404 = vor.u32 1.1754944e-38, %v4403
        %v4405 = vsel %vm4402, %v4404, %v4400
        %v4406 = vrcp.pop %v4305
        %v4407 = vmul.f32 %v4305, %v4406
        %v4408 = vsub.f32 1.0, %v4407
        %v4409 = vmul.f32 %v4406, %v4408
        %v4410 = vadd.f32 %v4406, %v4409
        %vm4411 = vweird.f32 %v4305
        %vm4412 = vweird.f32 %v4406
        %vm4413 = vmor %vm4411, %vm4412
        %v4414 = vsel %vm4413, %v4406, %v4410
        %v4415 = vand.u32 2147483647, %v4305
        %vm4416 = vcmp.eq.f32.partialorder %v4415, 8.507059e+37
        %v4417 = vand.u32 %v4305, 2147483648
        %v4418 = vor.u32 1.1754944e-38, %v4417
        %v4419 = vsel %vm4416, %v4418, %v4414
        %v4420 = vmul.f32 %v4390, %v4405
        %v4421 = vmul.f32 %v4391, %v4419
        %v4422 = vld [vmem:[%s12] sm:$0xf]
        %v4423 = vld [vmem:[%s12 + $0x4] sm:$0xf]
        %v4424 = vld [vmem:[%s12 + $0x8] sm:$0xf]
        %v4425 = vld [vmem:[%s12 + $0xc] sm:$0xf]
        %v4426 = vpack.c.bf16 %v2956, %v2224
        %v4427 = vpack.c.bf16 %v2957, %v2225
        %v4428 = vpack.c.bf16 %v4420, %v3688
        %v4429 = vpack.c.bf16 %v4421, %v3689
        %v4430 = vld [vmem:[%s13] sm:$0xff]
        %v4431 = vld [vmem:[%s13 + $0x8] sm:$0xff]
        %v4432 = vld [vmem:[%s13 + $0x10] sm:$0xff]
        %v4433 = vld [vmem:[%s13 + $0x18] sm:$0xff]
        %4435 = vset.pattern.permute.xlu0 0
        %4436 = vperm.xlu0 %4435, %v4430
        %v4437 = vpop.permute.xlu0 %4436
        %4440 = vset.pattern.permute.xlu0 0
        %4441 = vperm.xlu0 %4440, %v4431
        %v4442 = vpop.permute.xlu0 %4441
        %4445 = vset.pattern.permute.xlu0 0
        %4446 = vperm.xlu0 %4445, %v4432
        %v4447 = vpop.permute.xlu0 %4446
        %4450 = vset.pattern.permute.xlu0 0
        %4451 = vperm.xlu0 %4450, %v4433
        %v4452 = vpop.permute.xlu0 %4451
        %v4458 = vunpack.c.l.b16 %v4422
        %v4459 = vunpack.c.l.b16 %v4423
        %v4460 = vunpack.c.l.b16 %v4424
        %v4461 = vunpack.c.l.b16 %v4425
        %v4462 = vpack.c.b16 %v4459, %v4458
        %v4463 = vpack.c.b16 %v4461, %v4460
        %v4465 = vsel %vm1439, %v4462, 0
        %v4468 = vsel %vm1439, %v4463, 0
        %4470 = vmatpush.bf16.msra.mxu0 0
        %4471 = vmatpush.bf16.msra.mxu0 0
        %4472 = vmatpush.bf16.msra.mxu0 0
        %4473 = vmatpush.bf16.msra.mxu0 0
        %4474 = vmatpush.bf16.msra.mxu0 0
        %4475 = vmatpush.bf16.msra.mxu0 0
        %4476 = vmatpush.bf16.msra.mxu0 %v4428
        %4477 = vmatpush.bf16.msra.mxu0 %v4426
        %4478 = vmatmul.bf16.gmra.mxu0 %v4465
        %v4479 = vpop.f32.mrf.mxu0
        %v4480 = vadd.f32 %v4437, %v4479
        %v4481 = vpop.f32.mrf.mxu0
        %v4482 = vadd.f32 %v4442, %v4481
        %4483 = vmatmul.bf16.gmra.mxu0 %v4468
        %v4484 = vpop.f32.mrf.mxu0
        %v4485 = vadd.f32 %v4447, %v4484
        %v4486 = vpop.f32.mrf.mxu0
        %v4487 = vadd.f32 %v4452, %v4486
        %4488 = vdwg.mxu0
        %4489 = vmatpush.bf16.msra.mxu0 0
        %4490 = vmatpush.bf16.msra.mxu0 0
        %4491 = vmatpush.bf16.msra.mxu0 0
        %4492 = vmatpush.bf16.msra.mxu0 0
        %4493 = vmatpush.bf16.msra.mxu0 0
        %4494 = vmatpush.bf16.msra.mxu0 0
        %4495 = vmatpush.bf16.msra.mxu0 %v4429
        %4496 = vmatpush.bf16.msra.mxu0 %v4427
        %4497 = vmatmul.bf16.gmra.mxu0 %v4465
        %v4498 = vpop.f32.mrf.mxu0
        %v4499 = vadd.f32 %v4437, %v4498
        %v4500 = vpop.f32.mrf.mxu0
        %v4501 = vadd.f32 %v4442, %v4500
        %4502 = vmatmul.bf16.gmra.mxu0 %v4468
        %v4503 = vpop.f32.mrf.mxu0
        %v4504 = vadd.f32 %v4447, %v4503
        %v4505 = vpop.f32.mrf.mxu0
        %v4506 = vadd.f32 %v4452, %v4505
        %4507 = vdwg.mxu0
        %v4508 = vadd.f32 %v1389, %v4480
        %v4509 = vadd.f32 %v1390, %v4499
        %v4510 = vadd.f32 %v1391, %v4482
        %v4511 = vadd.f32 %v1392, %v4501
        %v4512 = vadd.f32 %v1393, %v4485
        %v4513 = vadd.f32 %v1394, %v4504
        %v4514 = vadd.f32 %v1395, %v4487
        %v4515 = vadd.f32 %v1396, %v4506
        %v4516 = vld [vmem:[%s14] sm:$0xff]
        %v4517 = vld [vmem:[%s14 + $0x8] sm:$0xff]
        %v4518 = vld [vmem:[%s14 + $0x10] sm:$0xff]
        %v4519 = vld [vmem:[%s14 + $0x18] sm:$0xff]
        %v4520 = vld [vmem:[%s15] sm:$0xff]
        %v4521 = vld [vmem:[%s15 + $0x8] sm:$0xff]
        %v4522 = vld [vmem:[%s15 + $0x10] sm:$0xff]
        %v4523 = vld [vmem:[%s15 + $0x18] sm:$0xff]
        %v4524 = vadd.f32 %v4508, %v4510
        %v4525 = vadd.f32 %v4524, %v4512
        %v4526 = vadd.f32 %v4525, %v4514
        %v4527 = vrot.slane %v4526, 4
        %v4528 = vadd.f32 %v4526, %v4527
        %v4529 = vrot.slane %v4528, 2
        %v4530 = vadd.f32 %v4528, %v4529
        %v4531 = vrot.slane %v4530, 1
        %v4532 = vadd.f32 %v4530, %v4531
        %v4533 = vadd.f32 %v4509, %v4511
        %v4534 = vadd.f32 %v4533, %v4513
        %v4535 = vadd.f32 %v4534, %v4515
        %v4536 = vrot.slane %v4535, 4
        %v4537 = vadd.f32 %v4535, %v4536
        %v4538 = vrot.slane %v4537, 2
        %v4539 = vadd.f32 %v4537, %v4538
        %v4540 = vrot.slane %v4539, 1
        %v4541 = vadd.f32 %v4539, %v4540
        %v4542 = vrcp.pop 32.0
        %v4543 = vmul.f32 32.0, %v4542
        %v4544 = vsub.f32 1.0, %v4543
        %v4545 = vmul.f32 %v4542, %v4544
        %v4546 = vadd.f32 %v4542, %v4545
        %vm4547 = vweird.f32 %v4542
        %v4548 = vsel %vm4547, %v4542, %v4546
        %v4549 = vmul.f32 %v4532, %v4548
        %v4550 = vmul.f32 %v4541, %v4548
        %v4551 = vsub.f32 %v4508, %v4549
        %v4552 = vsub.f32 %v4509, %v4550
        %v4553 = vsub.f32 %v4510, %v4549
        %v4554 = vsub.f32 %v4511, %v4550
        %v4555 = vsub.f32 %v4512, %v4549
        %v4556 = vsub.f32 %v4513, %v4550
        %v4557 = vsub.f32 %v4514, %v4549
        %v4558 = vsub.f32 %v4515, %v4550
        %v4559 = vmul.f32 %v4551, %v4551
        %v4560 = vmul.f32 %v4552, %v4552
        %v4561 = vmul.f32 %v4553, %v4553
        %v4562 = vmul.f32 %v4554, %v4554
        %v4563 = vmul.f32 %v4555, %v4555
        %v4564 = vmul.f32 %v4556, %v4556
        %v4565 = vmul.f32 %v4557, %v4557
        %v4566 = vmul.f32 %v4558, %v4558
        %v4567 = vadd.f32 %v4559, %v4561
        %v4568 = vadd.f32 %v4567, %v4563
        %v4569 = vadd.f32 %v4568, %v4565
        %v4570 = vrot.slane %v4569, 4
        %v4571 = vadd.f32 %v4569, %v4570
        %v4572 = vrot.slane %v4571, 2
        %v4573 = vadd.f32 %v4571, %v4572
        %v4574 = vrot.slane %v4573, 1
        %v4575 = vadd.f32 %v4573, %v4574
        %v4576 = vadd.f32 %v4560, %v4562
        %v4577 = vadd.f32 %v4576, %v4564
        %v4578 = vadd.f32 %v4577, %v4566
        %v4579 = vrot.slane %v4578, 4
        %v4580 = vadd.f32 %v4578, %v4579
        %v4581 = vrot.slane %v4580, 2
        %v4582 = vadd.f32 %v4580, %v4581
        %v4583 = vrot.slane %v4582, 1
        %v4584 = vadd.f32 %v4582, %v4583
        %v4585 = vmul.f32 %v4575, %v4548
        %v4586 = vmul.f32 %v4584, %v4548
        %v4587 = vadd.f32 %v4585, 1e-05
        %v4588 = vadd.f32 %v4586, 1e-05
        %v4589 = vrsqrt.pop %v4587
        %v4590 = vmul.f32 %v4589, %v4587
        %v4591 = vmul.f32 %v4590, %v4589
        %v4592 = vmul.f32 0.5, %v4591
        %v4593 = vsub.f32 1.5, %v4592
        %v4594 = vmul.f32 %v4589, %v4593
        %vm4595 = vweird.f32 %v4587
        %vm4596 = vweird.f32 %v4589
        %vm4597 = vmor %vm4595, %vm4596
        %v4598 = vsel %vm4597, %v4589, %v4594
        %v4599 = vrsqrt.pop %v4588
        %v4600 = vmul.f32 %v4599, %v4588
        %v4601 = vmul.f32 %v4600, %v4599
        %v4602 = vmul.f32 0.5, %v4601
        %v4603 = vsub.f32 1.5, %v4602
        %v4604 = vmul.f32 %v4599, %v4603
        %vm4605 = vweird.f32 %v4588
        %vm4606 = vweird.f32 %v4599
        %vm4607 = vmor %vm4605, %vm4606
        %v4608 = vsel %vm4607, %v4599, %v4604
        %v4609 = vmul.f32 %v4551, %v4598
        %v4610 = vmul.f32 %v4552, %v4608
        %v4611 = vmul.f32 %v4553, %v4598
        %v4612 = vmul.f32 %v4554, %v4608
        %v4613 = vmul.f32 %v4555, %v4598
        %v4614 = vmul.f32 %v4556, %v4608
        %v4615 = vmul.f32 %v4557, %v4598
        %v4616 = vmul.f32 %v4558, %v4608
        %4618 = vset.pattern.permute.xlu0 0
        %4619 = vperm.xlu0 %4618, %v4516
        %v4620 = vpop.permute.xlu0 %4619
        %4623 = vset.pattern.permute.xlu0 0
        %4624 = vperm.xlu0 %4623, %v4517
        %v4625 = vpop.permute.xlu0 %4624
        %4628 = vset.pattern.permute.xlu0 0
        %4629 = vperm.xlu0 %4628, %v4518
        %v4630 = vpop.permute.xlu0 %4629
        %4633 = vset.pattern.permute.xlu0 0
        %4634 = vperm.xlu0 %4633, %v4519
        %v4635 = vpop.permute.xlu0 %4634
        %v4637 = vmul.f32 %v4609, %v4620
        %v4638 = vmul.f32 %v4610, %v4620
        %v4639 = vmul.f32 %v4611, %v4625
        %v4640 = vmul.f32 %v4612, %v4625
        %v4641 = vmul.f32 %v4613, %v4630
        %v4642 = vmul.f32 %v4614, %v4630
        %v4643 = vmul.f32 %v4615, %v4635
        %v4644 = vmul.f32 %v4616, %v4635
        %4646 = vset.pattern.permute.xlu0 0
        %4647 = vperm.xlu0 %4646, %v4520
        %v4648 = vpop.permute.xlu0 %4647
        %4651 = vset.pattern.permute.xlu0 0
        %4652 = vperm.xlu0 %4651, %v4521
        %v4653 = vpop.permute.xlu0 %4652
        %4656 = vset.pattern.permute.xlu0 0
        %4657 = vperm.xlu0 %4656, %v4522
        %v4658 = vpop.permute.xlu0 %4657
        %4661 = vset.pattern.permute.xlu0 0
        %4662 = vperm.xlu0 %4661, %v4523
        %v4663 = vpop.permute.xlu0 %4662
        %v4665 = vadd.f32 %v4637, %v4648
        %v4666 = vadd.f32 %v4638, %v4648
        %v4667 = vadd.f32 %v4639, %v4653
        %v4668 = vadd.f32 %v4640, %v4653
        %v4669 = vadd.f32 %v4641, %v4658
        %v4670 = vadd.f32 %v4642, %v4658
        %v4671 = vadd.f32 %v4643, %v4663
        %v4672 = vadd.f32 %v4644, %v4663
        %v4673 = vld [vmem:[%s16] sm:$0xf]
        %v4674 = vld [vmem:[%s16 + $0x4] sm:$0xf]
        %v4675 = vld [vmem:[%s16 + $0x8] sm:$0xf]
        %v4676 = vld [vmem:[%s16 + $0xc] sm:$0xf]
        %v4677 = vld [vmem:[%s16 + $0x10] sm:$0xf]
        %v4678 = vld [vmem:[%s16 + $0x14] sm:$0xf]
        %v4679 = vld [vmem:[%s16 + $0x18] sm:$0xf]
        %v4680 = vld [vmem:[%s16 + $0x1c] sm:$0xf]
        %v4681 = vpack.c.bf16 %v4667, %v4665
        %v4682 = vpack.c.bf16 %v4668, %v4666
        %v4683 = vpack.c.bf16 %v4671, %v4669
        %v4684 = vpack.c.bf16 %v4672, %v4670
        %v4685 = vld [vmem:[%s17] sm:$0xff]
        %v4686 = vld [vmem:[%s17 + $0x8] sm:$0xff]
        %v4687 = vld [vmem:[%s17 + $0x10] sm:$0xff]
        %v4688 = vld [vmem:[%s17 + $0x18] sm:$0xff]
        %v4689 = vld [vmem:[%s17 + $0x20] sm:$0xff]
        %v4690 = vld [vmem:[%s17 + $0x28] sm:$0xff]
        %v4691 = vld [vmem:[%s17 + $0x30] sm:$0xff]
        %v4692 = vld [vmem:[%s17 + $0x38] sm:$0xff]
        %4694 = vset.pattern.permute.xlu0 0
        %4695 = vperm.xlu0 %4694, %v4685
        %v4696 = vpop.permute.xlu0 %4695
        %4699 = vset.pattern.permute.xlu0 0
        %4700 = vperm.xlu0 %4699, %v4686
        %v4701 = vpop.permute.xlu0 %4700
        %4704 = vset.pattern.permute.xlu0 0
        %4705 = vperm.xlu0 %4704, %v4687
        %v4706 = vpop.permute.xlu0 %4705
        %4709 = vset.pattern.permute.xlu0 0
        %4710 = vperm.xlu0 %4709, %v4688
        %v4711 = vpop.permute.xlu0 %4710
        %4714 = vset.pattern.permute.xlu0 0
        %4715 = vperm.xlu0 %4714, %v4689
        %v4716 = vpop.permute.xlu0 %4715
        %4719 = vset.pattern.permute.xlu0 0
        %4720 = vperm.xlu0 %4719, %v4690
        %v4721 = vpop.permute.xlu0 %4720
        %4724 = vset.pattern.permute.xlu0 0
        %4725 = vperm.xlu0 %4724, %v4691
        %v4726 = vpop.permute.xlu0 %4725
        %4729 = vset.pattern.permute.xlu0 0
        %4730 = vperm.xlu0 %4729, %v4692
        %v4731 = vpop.permute.xlu0 %4730
        %v4741 = vunpack.c.l.b16 %v4673
        %v4742 = vunpack.c.l.b16 %v4674
        %v4743 = vunpack.c.l.b16 %v4675
        %v4744 = vunpack.c.l.b16 %v4676
        %v4745 = vunpack.c.l.b16 %v4677
        %v4746 = vunpack.c.l.b16 %v4678
        %v4747 = vunpack.c.l.b16 %v4679
        %v4748 = vunpack.c.l.b16 %v4680
        %v4749 = vpack.c.b16 %v4742, %v4741
        %v4750 = vpack.c.b16 %v4744, %v4743
        %v4751 = vpack.c.b16 %v4746, %v4745
        %v4752 = vpack.c.b16 %v4748, %v4747
        %v4754 = vsel %vm1439, %v4749, 0
        %v4757 = vsel %vm1439, %v4750, 0
        %v4760 = vsel %vm1439, %v4751, 0
        %v4763 = vsel %vm1439, %v4752, 0
        %4765 = vmatpush.bf16.msra.mxu0 0
        %4766 = vmatpush.bf16.msra.mxu0 0
        %4767 = vmatpush.bf16.msra.mxu0 0
        %4768 = vmatpush.bf16.msra.mxu0 0
        %4769 = vmatpush.bf16.msra.mxu0 0
        %4770 = vmatpush.bf16.msra.mxu0 0
        %4771 = vmatpush.bf16.msra.mxu0 %v4683
        %4772 = vmatpush.bf16.msra.mxu0 %v4681
        %4773 = vmatmul.bf16.gmra.mxu0 %v4754
        %v4774 = vpop.f32.mrf.mxu0
        %v4775 = vadd.f32 %v4696, %v4774
        %v4776 = vpop.f32.mrf.mxu0
        %v4777 = vadd.f32 %v4701, %v4776
        %4778 = vmatmul.bf16.gmra.mxu0 %v4757
        %v4779 = vpop.f32.mrf.mxu0
        %v4780 = vadd.f32 %v4706, %v4779
        %v4781 = vpop.f32.mrf.mxu0
        %v4782 = vadd.f32 %v4711, %v4781
        %4783 = vmatmul.bf16.gmra.mxu0 %v4760
        %v4784 = vpop.f32.mrf.mxu0
        %v4785 = vadd.f32 %v4716, %v4784
        %v4786 = vpop.f32.mrf.mxu0
        %v4787 = vadd.f32 %v4721, %v4786
        %4788 = vmatmul.bf16.gmra.mxu0 %v4763
        %v4789 = vpop.f32.mrf.mxu0
        %v4790 = vadd.f32 %v4726, %v4789
        %v4791 = vpop.f32.mrf.mxu0
        %v4792 = vadd.f32 %v4731, %v4791
        %4793 = vdwg.mxu0
        %4794 = vmatpush.bf16.msra.mxu0 0
        %4795 = vmatpush.bf16.msra.mxu0 0
        %4796 = vmatpush.bf16.msra.mxu0 0
        %4797 = vmatpush.bf16.msra.mxu0 0
        %4798 = vmatpush.bf16.msra.mxu0 0
        %4799 = vmatpush.bf16.msra.mxu0 0
        %4800 = vmatpush.bf16.msra.mxu0 %v4684
        %4801 = vmatpush.bf16.msra.mxu0 %v4682
        %4802 = vmatmul.bf16.gmra.mxu0 %v4754
        %v4803 = vpop.f32.mrf.mxu0
        %v4804 = vadd.f32 %v4696, %v4803
        %v4805 = vpop.f32.mrf.mxu0
        %v4806 = vadd.f32 %v4701, %v4805
        %4807 = vmatmul.bf16.gmra.mxu0 %v4757
        %v4808 = vpop.f32.mrf.mxu0
        %v4809 = vadd.f32 %v4706, %v4808
        %v4810 = vpop.f32.mrf.mxu0
        %v4811 = vadd.f32 %v4711, %v4810
        %4812 = vmatmul.bf16.gmra.mxu0 %v4760
        %v4813 = vpop.f32.mrf.mxu0
        %v4814 = vadd.f32 %v4716, %v4813
        %v4815 = vpop.f32.mrf.mxu0
        %v4816 = vadd.f32 %v4721, %v4815
        %4817 = vmatmul.bf16.gmra.mxu0 %v4763
        %v4818 = vpop.f32.mrf.mxu0
        %v4819 = vadd.f32 %v4726, %v4818
        %v4820 = vpop.f32.mrf.mxu0
        %v4821 = vadd.f32 %v4731, %v4820
        %4822 = vdwg.mxu0
        %v4823 = vmax.f32 %v4775, 0.0
        %v4824 = vmax.f32 %v4804, 0.0
        %v4825 = vmax.f32 %v4777, 0.0
        %v4826 = vmax.f32 %v4806, 0.0
        %v4827 = vmax.f32 %v4780, 0.0
        %v4828 = vmax.f32 %v4809, 0.0
        %v4829 = vmax.f32 %v4782, 0.0
        %v4830 = vmax.f32 %v4811, 0.0
        %v4831 = vmax.f32 %v4785, 0.0
        %v4832 = vmax.f32 %v4814, 0.0
        %v4833 = vmax.f32 %v4787, 0.0
        %v4834 = vmax.f32 %v4816, 0.0
        %v4835 = vmax.f32 %v4790, 0.0
        %v4836 = vmax.f32 %v4819, 0.0
        %v4837 = vmax.f32 %v4792, 0.0
        %v4838 = vmax.f32 %v4821, 0.0
        %v4839 = vld [vmem:[%s18] sm:$0xf]
        %v4840 = vld [vmem:[%s18 + $0x4] sm:$0xf]
        %v4841 = vld [vmem:[%s18 + $0x8] sm:$0xf]
        %v4842 = vld [vmem:[%s18 + $0xc] sm:$0xf]
        %v4843 = vpack.c.bf16 %v4825, %v4823
        %v4844 = vpack.c.bf16 %v4826, %v4824
        %v4845 = vpack.c.bf16 %v4829, %v4827
        %v4846 = vpack.c.bf16 %v4830, %v4828
        %v4847 = vpack.c.bf16 %v4833, %v4831
        %v4848 = vpack.c.bf16 %v4834, %v4832
        %v4849 = vpack.c.bf16 %v4837, %v4835
        %v4850 = vpack.c.bf16 %v4838, %v4836
        %v4851 = vld [vmem:[%s19] sm:$0xff]
        %v4852 = vld [vmem:[%s19 + $0x8] sm:$0xff]
        %v4853 = vld [vmem:[%s19 + $0x10] sm:$0xff]
        %v4854 = vld [vmem:[%s19 + $0x18] sm:$0xff]
        %4856 = vset.pattern.permute.xlu0 0
        %4857 = vperm.xlu0 %4856, %v4851
        %v4858 = vpop.permute.xlu0 %4857
        %4861 = vset.pattern.permute.xlu0 0
        %4862 = vperm.xlu0 %4861, %v4852
        %v4863 = vpop.permute.xlu0 %4862
        %4866 = vset.pattern.permute.xlu0 0
        %4867 = vperm.xlu0 %4866, %v4853
        %v4868 = vpop.permute.xlu0 %4867
        %4871 = vset.pattern.permute.xlu0 0
        %4872 = vperm.xlu0 %4871, %v4854
        %v4873 = vpop.permute.xlu0 %4872
        %v4879 = vunpack.c.l.b16 %v4839
        %v4880 = vunpack.c.l.b16 %v4840
        %v4881 = vunpack.c.l.b16 %v4841
        %v4882 = vunpack.c.l.b16 %v4842
        %v4883 = vpack.c.b16 %v4880, %v4879
        %v4884 = vpack.c.b16 %v4882, %v4881
        %vm4885 = vcmask 523264
        %v4887 = vsel %vm4885, %v4883, 0
        %v4890 = vsel %vm4885, %v4884, 0
        %4892 = vmatpush.bf16.msra.mxu0 0
        %4893 = vmatpush.bf16.msra.mxu0 0
        %4894 = vmatpush.bf16.msra.mxu0 0
        %4895 = vmatpush.bf16.msra.mxu0 0
        %4896 = vmatpush.bf16.msra.mxu0 %v4849
        %4897 = vmatpush.bf16.msra.mxu0 %v4847
        %4898 = vmatpush.bf16.msra.mxu0 %v4845
        %4899 = vmatpush.bf16.msra.mxu0 %v4843
        %4900 = vmatmul.bf16.gmra.mxu0 %v4887
        %v4901 = vpop.f32.mrf.mxu0
        %v4902 = vadd.f32 %v4858, %v4901
        %v4903 = vpop.f32.mrf.mxu0
        %v4904 = vadd.f32 %v4863, %v4903
        %4905 = vmatmul.bf16.gmra.mxu0 %v4890
        %v4906 = vpop.f32.mrf.mxu0
        %v4907 = vadd.f32 %v4868, %v4906
        %v4908 = vpop.f32.mrf.mxu0
        %v4909 = vadd.f32 %v4873, %v4908
        %4910 = vdwg.mxu0
        %4911 = vmatpush.bf16.msra.mxu0 0
        %4912 = vmatpush.bf16.msra.mxu0 0
        %4913 = vmatpush.bf16.msra.mxu0 0
        %4914 = vmatpush.bf16.msra.mxu0 0
        %4915 = vmatpush.bf16.msra.mxu0 %v4850
        %4916 = vmatpush.bf16.msra.mxu0 %v4848
        %4917 = vmatpush.bf16.msra.mxu0 %v4846
        %4918 = vmatpush.bf16.msra.mxu0 %v4844
        %4919 = vmatmul.bf16.gmra.mxu0 %v4887
        %v4920 = vpop.f32.mrf.mxu0
        %v4921 = vadd.f32 %v4858, %v4920
        %v4922 = vpop.f32.mrf.mxu0
        %v4923 = vadd.f32 %v4863, %v4922
        %4924 = vmatmul.bf16.gmra.mxu0 %v4890
        %v4925 = vpop.f32.mrf.mxu0
        %v4926 = vadd.f32 %v4868, %v4925
        %v4927 = vpop.f32.mrf.mxu0
        %v4928 = vadd.f32 %v4873, %v4927
        %4929 = vdwg.mxu0
        %v4930 = vadd.f32 %v4665, %v4902
        %v4931 = vadd.f32 %v4666, %v4921
        %v4932 = vadd.f32 %v4667, %v4904
        %v4933 = vadd.f32 %v4668, %v4923
        %v4934 = vadd.f32 %v4669, %v4907
        %v4935 = vadd.f32 %v4670, %v4926
        %v4936 = vadd.f32 %v4671, %v4909
        %v4937 = vadd.f32 %v4672, %v4928
        %v4938 = vld [vmem:[%s20] sm:$0xff]
        %v4939 = vld [vmem:[%s20 + $0x8] sm:$0xff]
        %v4940 = vld [vmem:[%s20 + $0x10] sm:$0xff]
        %v4941 = vld [vmem:[%s20 + $0x18] sm:$0xff]
        %v4942 = vld [vmem:[%s21] sm:$0xff]
        %v4943 = vld [vmem:[%s21 + $0x8] sm:$0xff]
        %v4944 = vld [vmem:[%s21 + $0x10] sm:$0xff]
        %v4945 = vld [vmem:[%s21 + $0x18] sm:$0xff]
        %v4946 = vadd.f32 %v4930, %v4932
        %v4947 = vadd.f32 %v4946, %v4934
        %v4948 = vadd.f32 %v4947, %v4936
        %v4949 = vrot.slane %v4948, 4
        %v4950 = vadd.f32 %v4948, %v4949
        %v4951 = vrot.slane %v4950, 2
        %v4952 = vadd.f32 %v4950, %v4951
        %v4953 = vrot.slane %v4952, 1
        %v4954 = vadd.f32 %v4952, %v4953
        %v4955 = vadd.f32 %v4931, %v4933
        %v4956 = vadd.f32 %v4955, %v4935
        %v4957 = vadd.f32 %v4956, %v4937
        %v4958 = vrot.slane %v4957, 4
        %v4959 = vadd.f32 %v4957, %v4958
        %v4960 = vrot.slane %v4959, 2
        %v4961 = vadd.f32 %v4959, %v4960
        %v4962 = vrot.slane %v4961, 1
        %v4963 = vadd.f32 %v4961, %v4962
        %v4964 = vmul.f32 %v4954, %v4548
        %v4965 = vmul.f32 %v4963, %v4548
        %v4966 = vsub.f32 %v4930, %v4964
        %v4967 = vsub.f32 %v4931, %v4965
        %v4968 = vsub.f32 %v4932, %v4964
        %v4969 = vsub.f32 %v4933, %v4965
        %v4970 = vsub.f32 %v4934, %v4964
        %v4971 = vsub.f32 %v4935, %v4965
        %v4972 = vsub.f32 %v4936, %v4964
        %v4973 = vsub.f32 %v4937, %v4965
        %v4974 = vmul.f32 %v4966, %v4966
        %v4975 = vmul.f32 %v4967, %v4967
        %v4976 = vmul.f32 %v4968, %v4968
        %v4977 = vmul.f32 %v4969, %v4969
        %v4978 = vmul.f32 %v4970, %v4970
        %v4979 = vmul.f32 %v4971, %v4971
        %v4980 = vmul.f32 %v4972, %v4972
        %v4981 = vmul.f32 %v4973, %v4973
        %v4982 = vadd.f32 %v4974, %v4976
        %v4983 = vadd.f32 %v4982, %v4978
        %v4984 = vadd.f32 %v4983, %v4980
        %v4985 = vrot.slane %v4984, 4
        %v4986 = vadd.f32 %v4984, %v4985
        %v4987 = vrot.slane %v4986, 2
        %v4988 = vadd.f32 %v4986, %v4987
        %v4989 = vrot.slane %v4988, 1
        %v4990 = vadd.f32 %v4988, %v4989
        %v4991 = vadd.f32 %v4975, %v4977
        %v4992 = vadd.f32 %v4991, %v4979
        %v4993 = vadd.f32 %v4992, %v4981
        %v4994 = vrot.slane %v4993, 4
        %v4995 = vadd.f32 %v4993, %v4994
        %v4996 = vrot.slane %v4995, 2
        %v4997 = vadd.f32 %v4995, %v4996
        %v4998 = vrot.slane %v4997, 1
        %v4999 = vadd.f32 %v4997, %v4998
        %v5000 = vmul.f32 %v4990, %v4548
        %v5001 = vmul.f32 %v4999, %v4548
        %v5002 = vadd.f32 %v5000, 1e-05
        %v5003 = vadd.f32 %v5001, 1e-05
        %v5004 = vrsqrt.pop %v5002
        %v5005 = vmul.f32 %v5004, %v5002
        %v5006 = vmul.f32 %v5005, %v5004
        %v5007 = vmul.f32 0.5, %v5006
        %v5008 = vsub.f32 1.5, %v5007
        %v5009 = vmul.f32 %v5004, %v5008
        %vm5010 = vweird.f32 %v5002
        %vm5011 = vweird.f32 %v5004
        %vm5012 = vmor %vm5010, %vm5011
        %v5013 = vsel %vm5012, %v5004, %v5009
        %v5014 = vrsqrt.pop %v5003
        %v5015 = vmul.f32 %v5014, %v5003
        %v5016 = vmul.f32 %v5015, %v5014
        %v5017 = vmul.f32 0.5, %v5016
        %v5018 = vsub.f32 1.5, %v5017
        %v5019 = vmul.f32 %v5014, %v5018
        %vm5020 = vweird.f32 %v5003
        %vm5021 = vweird.f32 %v5014
        %vm5022 = vmor %vm5020, %vm5021
        %v5023 = vsel %vm5022, %v5014, %v5019
        %v5024 = vmul.f32 %v4966, %v5013
        %v5025 = vmul.f32 %v4967, %v5023
        %v5026 = vmul.f32 %v4968, %v5013
        %v5027 = vmul.f32 %v4969, %v5023
        %v5028 = vmul.f32 %v4970, %v5013
        %v5029 = vmul.f32 %v4971, %v5023
        %v5030 = vmul.f32 %v4972, %v5013
        %v5031 = vmul.f32 %v4973, %v5023
        %5033 = vset.pattern.permute.xlu0 0
        %5034 = vperm.xlu0 %5033, %v4938
        %v5035 = vpop.permute.xlu0 %5034
        %5038 = vset.pattern.permute.xlu0 0
        %5039 = vperm.xlu0 %5038, %v4939
        %v5040 = vpop.permute.xlu0 %5039
        %5043 = vset.pattern.permute.xlu0 0
        %5044 = vperm.xlu0 %5043, %v4940
        %v5045 = vpop.permute.xlu0 %5044
        %5048 = vset.pattern.permute.xlu0 0
        %5049 = vperm.xlu0 %5048, %v4941
        %v5050 = vpop.permute.xlu0 %5049
        %v5052 = vmul.f32 %v5024, %v5035
        %v5053 = vmul.f32 %v5025, %v5035
        %v5054 = vmul.f32 %v5026, %v5040
        %v5055 = vmul.f32 %v5027, %v5040
        %v5056 = vmul.f32 %v5028, %v5045
        %v5057 = vmul.f32 %v5029, %v5045
        %v5058 = vmul.f32 %v5030, %v5050
        %v5059 = vmul.f32 %v5031, %v5050
        %5061 = vset.pattern.permute.xlu0 0
        %5062 = vperm.xlu0 %5061, %v4942
        %v5063 = vpop.permute.xlu0 %5062
        %5066 = vset.pattern.permute.xlu0 0
        %5067 = vperm.xlu0 %5066, %v4943
        %v5068 = vpop.permute.xlu0 %5067
        %5071 = vset.pattern.permute.xlu0 0
        %5072 = vperm.xlu0 %5071, %v4944
        %v5073 = vpop.permute.xlu0 %5072
        %5076 = vset.pattern.permute.xlu0 0
        %5077 = vperm.xlu0 %5076, %v4945
        %v5078 = vpop.permute.xlu0 %5077
        %v5080 = vadd.f32 %v5052, %v5063
        %v5081 = vadd.f32 %v5053, %v5063
        %v5082 = vadd.f32 %v5054, %v5068
        %v5083 = vadd.f32 %v5055, %v5068
        %v5084 = vadd.f32 %v5056, %v5073
        %v5085 = vadd.f32 %v5057, %v5073
        %v5086 = vadd.f32 %v5058, %v5078
        %v5087 = vadd.f32 %v5059, %v5078
        %v5088 = vld [vmem:[%s22] sm:$0xf]
        %v5089 = vld [vmem:[%s22 + $0x4] sm:$0xf]
        %v5090 = vld [vmem:[%s22 + $0x8] sm:$0xf]
        %v5091 = vld [vmem:[%s22 + $0xc] sm:$0xf]
        %v5092 = vpack.c.bf16 %v5082, %v5080
        %v5093 = vpack.c.bf16 %v5083, %v5081
        %v5094 = vpack.c.bf16 %v5086, %v5084
        %v5095 = vpack.c.bf16 %v5087, %v5085
        %v5096 = vld [vmem:[%s23] sm:$0xff]
        %v5097 = vld [vmem:[%s23 + $0x8] sm:$0xff]
        %v5098 = vld [vmem:[%s23 + $0x10] sm:$0xff]
        %v5099 = vld [vmem:[%s23 + $0x18] sm:$0xff]
        %5101 = vset.pattern.permute.xlu0 0
        %5102 = vperm.xlu0 %5101, %v5096
        %v5103 = vpop.permute.xlu0 %5102
        %5106 = vset.pattern.permute.xlu0 0
        %5107 = vperm.xlu0 %5106, %v5097
        %v5108 = vpop.permute.xlu0 %5107
        %5111 = vset.pattern.permute.xlu0 0
        %5112 = vperm.xlu0 %5111, %v5098
        %v5113 = vpop.permute.xlu0 %5112
        %5116 = vset.pattern.permute.xlu0 0
        %5117 = vperm.xlu0 %5116, %v5099
        %v5118 = vpop.permute.xlu0 %5117
        %v5124 = vunpack.c.l.b16 %v5088
        %v5125 = vunpack.c.l.b16 %v5089
        %v5126 = vunpack.c.l.b16 %v5090
        %v5127 = vunpack.c.l.b16 %v5091
        %v5128 = vpack.c.b16 %v5125, %v5124
        %v5129 = vpack.c.b16 %v5127, %v5126
        %v5131 = vsel %vm1439, %v5128, 0
        %v5134 = vsel %vm1439, %v5129, 0
        %5136 = vmatpush.bf16.msra.mxu0 0
        %5137 = vmatpush.bf16.msra.mxu0 0
        %5138 = vmatpush.bf16.msra.mxu0 0
        %5139 = vmatpush.bf16.msra.mxu0 0
        %5140 = vmatpush.bf16.msra.mxu0 0
        %5141 = vmatpush.bf16.msra.mxu0 0
        %5142 = vmatpush.bf16.msra.mxu0 %v5094
        %5143 = vmatpush.bf16.msra.mxu0 %v5092
        %5144 = vmatmul.bf16.gmra.mxu0 %v5131
        %v5145 = vpop.f32.mrf.mxu0
        %v5146 = vadd.f32 %v5103, %v5145
        %v5147 = vpop.f32.mrf.mxu0
        %v5148 = vadd.f32 %v5108, %v5147
        %5149 = vmatmul.bf16.gmra.mxu0 %v5134
        %v5150 = vpop.f32.mrf.mxu0
        %v5151 = vadd.f32 %v5113, %v5150
        %v5152 = vpop.f32.mrf.mxu0
        %v5153 = vadd.f32 %v5118, %v5152
        %5154 = vdwg.mxu0
        %5155 = vmatpush.bf16.msra.mxu0 0
        %5156 = vmatpush.bf16.msra.mxu0 0
        %5157 = vmatpush.bf16.msra.mxu0 0
        %5158 = vmatpush.bf16.msra.mxu0 0
        %5159 = vmatpush.bf16.msra.mxu0 0
        %5160 = vmatpush.bf16.msra.mxu0 0
        %5161 = vmatpush.bf16.msra.mxu0 %v5095
        %5162 = vmatpush.bf16.msra.mxu0 %v5093
        %5163 = vmatmul.bf16.gmra.mxu0 %v5131
        %v5164 = vpop.f32.mrf.mxu0
        %v5165 = vadd.f32 %v5103, %v5164
        %v5166 = vpop.f32.mrf.mxu0
        %v5167 = vadd.f32 %v5108, %v5166
        %5168 = vmatmul.bf16.gmra.mxu0 %v5134
        %v5169 = vpop.f32.mrf.mxu0
        %v5170 = vadd.f32 %v5113, %v5169
        %v5171 = vpop.f32.mrf.mxu0
        %v5172 = vadd.f32 %v5118, %v5171
        %5173 = vdwg.mxu0
        %5174 = vst [vmem:[%s811] sm:$0xff] %v5146
        %5175 = vst [vmem:[%s811 + $0x8] sm:$0xff] %v5165
        %5176 = vst [vmem:[%s811 + $0x10] sm:$0xff] %v5148
        %5177 = vst [vmem:[%s811 + $0x18] sm:$0xff] %v5167
        %5178 = vst [vmem:[%s811 + $0x20] sm:$0xff] %v5151
        %5179 = vst [vmem:[%s811 + $0x28] sm:$0xff] %v5170
        %5180 = vst [vmem:[%s811 + $0x30] sm:$0xff] %v5153
        %5181 = vst [vmem:[%s811 + $0x38] sm:$0xff] %v5172
        %s5182 = sand.u32 %s588, 1
        %s5183 = scalar_lea.sflag [#allocation4], %s5182
        %s5184 = sand.u32 %s588, 1
        %s5185 = smul.addr %s5184, 64
        %s5186 = scalar_lea.vmem [#allocation3], %s5185
        // Predicated region
        $region121: #{point_transformer_layer_g.1} parent=115 // pred_check
          %p5187 = pneg %p598
        $region122: #{point_transformer_layer_g.1} parent=115 // pred_check_branch
          %5189 = sbr.rel (%p5187) target = $region124
        $region123: #{point_transformer_layer_g.1} parent=115 // pred_region
          %s5190 = smul.u32 2, %s43
          %5192 = vsyncadd %s5183, 0
          %s5193 = smul.addr %s42, 8
          %s5194 = sadd.s32 %s5190, %s5193
          %s5195 = smul.addr %s5194, 8
          %s5196 = scalar_lea.hbm %s24, %s5195
          %s5197 = sshll.u32 %s5186, 4
          %s5198 = int_to_ptr.vmem [resolvable:$true] %s5197
          %s5199 = sshll.u32 %s5196, 4
          %s5200 = int_to_ptr.hbm [resolvable:$true] %s5199
          %5205 = dma.vmem_to_hbm [thread:$0]  %s5198, 1024, %s5200, %s5183, 256, 256, 16
        $region124: #{point_transformer_layer_g.1} parent=115 // pred_fallthru
          _
      $region116: #{point_transformer_layer_g.1} parent=5 // pred_fallthru
        _
      %p5206 = scmp.le.s32.totalorder 2, %s33
      // Predicated region
      $region125: #{point_transformer_layer_g.1} parent=5 // pred_check
        %p5207 = pneg %p5206
      $region126: #{point_transformer_layer_g.1} parent=5 // pred_check_branch
        %5209 = sbr.rel (%p5207) target = $region128
      $region127: #{point_transformer_layer_g.1} parent=5 // pred_region
        %s5210 = ssub.s32 %s33, 2
        // Predicated region
        $region129: #{point_transformer_layer_g.1} parent=127 // pred_check
          %p5211 = pneg %p604
        $region130: #{point_transformer_layer_g.1} parent=127 // pred_check_branch
          %5213 = sbr.rel (%p5211) target = $region132
        $region131: #{point_transformer_layer_g.1} parent=127 // pred_region
          %s5214 = sand.u32 %s589, 1
          %s5215 = scalar_lea.sflag [#allocation4], %s5214
          %s5216 = sand.u32 %s589, 1
          %s5217 = smul.addr %s5216, 64
          %s5218 = scalar_lea.vmem [#allocation3], %s5217
          %5220 = dma.done %s5215, 1024
        $region132: #{point_transformer_layer_g.1} parent=127 // pred_fallthru
          _
      $region128: #{point_transformer_layer_g.1} parent=5 // pred_fallthru
        _
    $region6: #{point_transformer_layer_g.1} parent=1 // loop_footer
      %s37 = sadd.s32 1, %s33
    $region7: #{point_transformer_layer_g.1} parent=1 // loop_footer_branch
      %32 = sbr.rel target = $region3
    $region8: #{point_transformer_layer_g.1} parent=1 // loop_exit
      _
    %5221 = vsyncpa [#allocation4], 1
    %s5222 = scalar_lea.sflag [#allocation4], 1
    %5223 = vsyncpa %s5222, 1

</llo_original>
